<compile_context>
chip_gen: v7x
topology: tpu7x:2x2x1
jax: 0.10.0
libtpu: 0.0.40
codegen_flags: <defaults>
</compile_context>

<pallas_src>
import functools
import math

import jax
import jax.numpy as jnp
from jax.experimental import pallas as pl
from jax.experimental.pallas import tpu as pltpu


# Set to jnp.bfloat16 on v6e/v7x to feed bf16 operands to the MXU (accumulation stays
# f32 via preferred_element_type). None keeps exact f32 math.
MXU_DTYPE = None


def _mxu(x):
    return x if MXU_DTYPE is None else x.astype(MXU_DTYPE)


def _cparams(*sem):
    return pltpu.CompilerParams(
        dimension_semantics=sem,
        vmem_limit_bytes=32 * 1024 * 1024,  # v5e default scoped VMEM is only 16 MiB
    )


def _choose_tile(dim, target, align):
    """Largest tile <= target that divides dim and is a multiple of align,
    else the full dim (full-extent blocks are always legal)."""
    if dim <= target:
        return dim
    t = (target // align) * align
    while t >= align:
        if dim % t == 0:
            return t
        t -= align
    return dim


# ----------------------------- Pallas kernels -----------------------------

def _linear_kernel(x_ref, w_ref, b_ref, o_ref, acc_ref, *, relu):
    # Tiled matmul with K-reduction accumulator; bias (+ReLU) applied on finalize.
    @pl.when(pl.program_id(2) == 0)
    def _():
        acc_ref[...] = jnp.zeros_like(acc_ref)

    acc_ref[...] += jnp.dot(_mxu(x_ref[...]), _mxu(w_ref[...]),
                            preferred_element_type=jnp.float32)

    @pl.when(pl.program_id(2) == pl.num_programs(2) - 1)
    def _():
        y = acc_ref[...] + b_ref[...]
        if relu:
            y = jnp.maximum(y, 0.0)
        o_ref[...] = y.astype(o_ref.dtype)


def _layernorm_kernel(x_ref, g_ref, b_ref, o_ref, *, eps):
    h = x_ref[...]                                     # f32 VPU math
    mean = jnp.mean(h, axis=-1, keepdims=True)
    var = jnp.mean((h - mean) ** 2, axis=-1, keepdims=True)
    o_ref[...] = (h - mean) * jax.lax.rsqrt(var + eps) * g_ref[...] + b_ref[...]


def _add_layernorm_kernel(x_ref, r_ref, g_ref, b_ref, o_ref, *, eps):
    h = x_ref[...] + r_ref[...]                        # fused residual add
    mean = jnp.mean(h, axis=-1, keepdims=True)
    var = jnp.mean((h - mean) ** 2, axis=-1, keepdims=True)
    o_ref[...] = (h - mean) * jax.lax.rsqrt(var + eps) * g_ref[...] + b_ref[...]


def _mha_flash_kernel(q_ref, k_ref, v_ref, mask_ref, o_ref,
                      m_sc, l_sc, acc_sc, *, scale):
    # Grid: (batch, kv_blocks). Blocks: q [nh, sq, hd], k/v [nh, tkv, hd],
    # mask [1 or sq, tkv], o [nh, sq, hd]. Online softmax over the KV axis.
    kv_idx = pl.program_id(1)

    @pl.when(kv_idx == 0)
    def _():
        m_sc[...] = jnp.full(m_sc.shape, -jnp.inf, m_sc.dtype)
        l_sc[...] = jnp.zeros(l_sc.shape, l_sc.dtype)
        acc_sc[...] = jnp.zeros(acc_sc.shape, acc_sc.dtype)

    q = _mxu(q_ref[...])                               # [nh, sq, hd]
    k = _mxu(k_ref[...])                               # [nh, tkv, hd]
    v = _mxu(v_ref[...])                               # [nh, tkv, hd]
    mask = mask_ref[...]                               # [1 or sq, tkv], f32

    # Batched q @ k^T across heads, contracting last dims (no explicit transpose).
    s = jax.lax.dot_general(
        q, k, (((2,), (2,)), ((0,), (0,))),
        preferred_element_type=jnp.float32) * scale    # [nh, sq, tkv]
    s = s + mask[None, :, :]

    m_prev = m_sc[...]                                 # [nh, sq, 1]
    m_new = jnp.maximum(m_prev, jnp.max(s, axis=-1, keepdims=True))
    alpha = jnp.exp(m_prev - m_new)
    p = jnp.exp(s - m_new)                             # f32 softmax statistics
    l_sc[...] = alpha * l_sc[...] + jnp.sum(p, axis=-1, keepdims=True)
    acc_sc[...] = alpha * acc_sc[...] + jax.lax.dot_general(
        _mxu(p), v, (((2,), (1,)), ((0,), (0,))),
        preferred_element_type=jnp.float32)            # [nh, sq, hd]
    m_sc[...] = m_new

    @pl.when(kv_idx == pl.num_programs(1) - 1)
    def _():
        inv = pl.reciprocal(l_sc[...], approx=True)    # EUP divide
        o_ref[...] = (acc_sc[...] * inv).astype(o_ref.dtype)


# ----------------------------- Pallas wrappers -----------------------------

def linear(x, w, b, relu=False):
    """x: [M, K], w: [K, N], b: [N] -> [M, N]; tiled + pipelined matmul."""
    M, K = x.shape
    N = w.shape[1]
    tm = _choose_tile(M, 256, 8)
    tn = _choose_tile(N, 256, 128)
    tk = _choose_tile(K, 512, 128)
    grid = (M // tm, N // tn, K // tk)
    kern = functools.partial(_linear_kernel, relu=relu)
    return pl.pallas_call(
        kern,
        out_shape=jax.ShapeDtypeStruct((M, N), jnp.float32),
        grid_spec=pltpu.PrefetchScalarGridSpec(
            num_scalar_prefetch=0,
            grid=grid,
            in_specs=[
                pl.BlockSpec((tm, tk), lambda i, j, k: (i, k)),
                pl.BlockSpec((tk, tn), lambda i, j, k: (k, j)),
                pl.BlockSpec((1, tn), lambda i, j, k: (0, j)),
            ],
            out_specs=pl.BlockSpec((tm, tn), lambda i, j, k: (i, j)),
            scratch_shapes=[pltpu.VMEM((tm, tn), jnp.float32)],
        ),
        compiler_params=_cparams("parallel", "parallel", "arbitrary"),
    )(x, w, b.reshape(1, N))


def layernorm(x, gamma, beta, eps=1e-5):
    """x: [M, H]; gamma, beta: [H] -> [M, H] (no residual)."""
    M, H = x.shape
    tm = _choose_tile(M, 256, 8)
    kern = functools.partial(_layernorm_kernel, eps=eps)
    return pl.pallas_call(
        kern,
        out_shape=jax.ShapeDtypeStruct((M, H), jnp.float32),
        grid_spec=pltpu.PrefetchScalarGridSpec(
            num_scalar_prefetch=0,
            grid=(M // tm,),
            in_specs=[
                pl.BlockSpec((tm, H), lambda i: (i, 0)),
                pl.BlockSpec((1, H), lambda i: (0, 0)),
                pl.BlockSpec((1, H), lambda i: (0, 0)),
            ],
            out_specs=pl.BlockSpec((tm, H), lambda i: (i, 0)),
        ),
        compiler_params=_cparams("parallel"),
    )(x, gamma.reshape(1, H), beta.reshape(1, H))


def add_layernorm(x, residual, gamma, beta, eps=1e-5):
    """(x + residual) -> LayerNorm; x, residual: [M, H]."""
    M, H = x.shape
    tm = _choose_tile(M, 256, 8)
    kern = functools.partial(_add_layernorm_kernel, eps=eps)
    return pl.pallas_call(
        kern,
        out_shape=jax.ShapeDtypeStruct((M, H), jnp.float32),
        grid_spec=pltpu.PrefetchScalarGridSpec(
            num_scalar_prefetch=0,
            grid=(M // tm,),
            in_specs=[
                pl.BlockSpec((tm, H), lambda i: (i, 0)),
                pl.BlockSpec((tm, H), lambda i: (i, 0)),
                pl.BlockSpec((1, H), lambda i: (0, 0)),
                pl.BlockSpec((1, H), lambda i: (0, 0)),
            ],
            out_specs=pl.BlockSpec((tm, H), lambda i: (i, 0)),
        ),
        compiler_params=_cparams("parallel"),
    )(x, residual, gamma.reshape(1, H), beta.reshape(1, H))


def mha_attention(q, k, v, mask):
    """q: [bs, nh, sq, hd]; k, v: [bs, nh, sk, hd]; mask: [bs, 1, 1 or sq, sk]."""
    bs, nh, sq, hd = q.shape
    sk = k.shape[2]
    mq = mask.shape[2]
    scale = 1.0 / math.sqrt(hd)
    tkv = _choose_tile(sk, 512, 128)         # lane dim of the mask tile -> 128-align
    grid = (bs, sk // tkv)
    kern = functools.partial(_mha_flash_kernel, scale=scale)
    return pl.pallas_call(
        kern,
        out_shape=jax.ShapeDtypeStruct((bs, nh, sq, hd), jnp.float32),
        grid_spec=pltpu.PrefetchScalarGridSpec(
            num_scalar_prefetch=0,
            grid=grid,
            in_specs=[
                pl.BlockSpec((None, nh, sq, hd), lambda b, kv: (b, 0, 0, 0)),
                pl.BlockSpec((None, nh, tkv, hd), lambda b, kv: (b, 0, kv, 0)),
                pl.BlockSpec((None, nh, tkv, hd), lambda b, kv: (b, 0, kv, 0)),
                pl.BlockSpec((None, None, mq, tkv), lambda b, kv: (b, 0, 0, kv)),
            ],
            out_specs=pl.BlockSpec((None, nh, sq, hd), lambda b, kv: (b, 0, 0, 0)),
            scratch_shapes=[
                pltpu.VMEM((nh, sq, 1), jnp.float32),   # m (running max)
                pltpu.VMEM((nh, sq, 1), jnp.float32),   # l (running denom)
                pltpu.VMEM((nh, sq, hd), jnp.float32),  # acc
            ],
        ),
        compiler_params=_cparams("parallel", "arbitrary"),
    )(q, k, v, mask)


# ----------------------------- Model (glue) -----------------------------

def _split_heads(x, n_head):
    bs, s, H = x.shape
    hd = H // n_head
    return x.reshape(bs, s, n_head, hd).transpose(0, 2, 1, 3)


def _merge_heads(x):
    bs, nh, s, hd = x.shape
    return x.transpose(0, 2, 1, 3).reshape(bs, s, nh * hd)


def self_attention_block(p, h, mask, n_head):
    bs, sq, H = h.shape
    qkv = linear(h.reshape(-1, H), p["wqkv"], p["bqkv"]).reshape(bs, sq, 3 * H)
    q, k, v = qkv[..., :H], qkv[..., H:2 * H], qkv[..., 2 * H:]
    ctx = mha_attention(_split_heads(q, n_head), _split_heads(k, n_head),
                        _split_heads(v, n_head), mask)
    ctx = _merge_heads(ctx)
    return linear(ctx.reshape(-1, H), p["wo"], p["bo"]).reshape(bs, sq, H)


def cross_attention_block(p, h, enc, mask, n_head):
    bs, sq, H = h.shape
    sk = enc.shape[1]
    q = linear(h.reshape(-1, H), p["wq"], p["bq"]).reshape(bs, sq, H)
    kv = linear(enc.reshape(-1, H), p["wkv"], p["bkv"]).reshape(bs, sk, 2 * H)
    k, v = kv[..., :H], kv[..., H:]
    ctx = mha_attention(_split_heads(q, n_head), _split_heads(k, n_head),
                        _split_heads(v, n_head), mask)
    ctx = _merge_heads(ctx)
    return linear(ctx.reshape(-1, H), p["wo"], p["bo"]).reshape(bs, sq, H)


def decoder_forward(params, input_ids, attention_mask,
                    encoder_hidden_states, encoder_attention_mask, n_head):
    bs, seq = input_ids.shape
    H = params["emb"]["word"].shape[1]
    enc = encoder_hidden_states.astype(jnp.float32)

    # Embedding: token + positional, then LayerNorm-only kernel (dropout = identity)
    tok = jnp.take(params["emb"]["word"], input_ids, axis=0)     # [bs, seq, H]
    pos = params["emb"]["pos"][:seq][None, :, :]                 # [1, seq, H]
    emb2d = (tok + pos).astype(jnp.float32).reshape(-1, H)
    h = layernorm(emb2d, params["emb"]["ln_g"],
                  params["emb"]["ln_b"]).reshape(bs, seq, H)

    for lp in params["layers"]:
        # masked self-attention (fused QKV) + residual + LN
        a = self_attention_block(lp["attn"], h, attention_mask, n_head)
        h = add_layernorm(a.reshape(-1, H), h.reshape(-1, H),
                          lp["ln1_g"], lp["ln1_b"]).reshape(bs, seq, H)
        # cross-attention (fused KV) + residual + LN
        c = cross_attention_block(lp["cross"], h, enc,
                                  encoder_attention_mask, n_head)
        h = add_layernorm(c.reshape(-1, H), h.reshape(-1, H),
                          lp["ln2_g"], lp["ln2_b"]).reshape(bs, seq, H)
        # feed-forward + residual + LN
        ff1 = linear(h.reshape(-1, H), lp["ff_w1"], lp["ff_b1"], relu=True)
        ff2 = linear(ff1, lp["ff_w2"], lp["ff_b2"])
        h = add_layernorm(ff2, h.reshape(-1, H),
                          lp["ff_ln_g"], lp["ff_ln_b"]).reshape(bs, seq, H)

    vocab = params["out_w"].shape[1]
    logits = linear(h.reshape(-1, H), params["out_w"], params["out_b"])
    return logits.reshape(bs, seq, vocab)


# ----------------------------- Parameter init -----------------------------

def _lin(key, fan_in, fan_out, scale=0.05):
    k1, k2 = jax.random.split(key)
    w = jax.random.normal(k1, (fan_in, fan_out), jnp.float32) * scale
    b = jax.random.normal(k2, (fan_out,), jnp.float32) * scale
    return w, b


def init_decoder_params(key, vocab_size, max_len, hidden_size,
                        intermediate_size, n_layers):
    keys = jax.random.split(key, 2 + n_layers)
    H, I = hidden_size, intermediate_size

    ke = jax.random.split(keys[0], 2)
    emb = {
        "word": jax.random.normal(ke[0], (vocab_size, H), jnp.float32) * 0.05,
        "pos": jax.random.normal(ke[1], (max_len, H), jnp.float32) * 0.05,
        "ln_g": jnp.ones((H,), jnp.float32),
        "ln_b": jnp.zeros((H,), jnp.float32),
    }

    def self_attn_params(ks):
        wq, bq = _lin(ks[0], H, H)
        wk, bk = _lin(ks[1], H, H)
        wv, bv = _lin(ks[2], H, H)
        wo, bo = _lin(ks[3], H, H)
        return {"wqkv": jnp.concatenate([wq, wk, wv], axis=1),
                "bqkv": jnp.concatenate([bq, bk, bv], axis=0),
                "wo": wo, "bo": bo}

    def cross_attn_params(ks):
        wq, bq = _lin(ks[0], H, H)
        wk, bk = _lin(ks[1], H, H)
        wv, bv = _lin(ks[2], H, H)
        wo, bo = _lin(ks[3], H, H)
        return {"wq": wq, "bq": bq,
                "wkv": jnp.concatenate([wk, wv], axis=1),
                "bkv": jnp.concatenate([bk, bv], axis=0),
                "wo": wo, "bo": bo}

    layers = []
    for li in range(n_layers):
        kl = jax.random.split(keys[1 + li], 10)
        ff_w1, ff_b1 = _lin(kl[8], H, I)
        ff_w2, ff_b2 = _lin(kl[9], I, H)
        layers.append({
            "attn": self_attn_params(kl[0:4]),
            "cross": cross_attn_params(kl[4:8]),
            "ln1_g": jnp.ones((H,), jnp.float32), "ln1_b": jnp.zeros((H,), jnp.float32),
            "ln2_g": jnp.ones((H,), jnp.float32), "ln2_b": jnp.zeros((H,), jnp.float32),
            "ff_w1": ff_w1, "ff_b1": ff_b1,
            "ff_w2": ff_w2, "ff_b2": ff_b2,
            "ff_ln_g": jnp.ones((H,), jnp.float32), "ff_ln_b": jnp.zeros((H,), jnp.float32),
        })

    out_w, out_b = _lin(keys[-1], H, vocab_size)
    return {"emb": emb, "layers": layers, "out_w": out_w, "out_b": out_b}


# ----------------------------- Main -----------------------------

if __name__ == "__main__":
    vocab_size = 64
    max_len = 32
    hidden_size = 32
    intermediate_size = 64
    n_head = 4
    n_layers = 2

    bs = 2
    trg_seq = 8
    src_seq = 8

    root = jax.random.PRNGKey(0)
    kp, kid, kenc = jax.random.split(root, 3)

    params = init_decoder_params(kp, vocab_size, max_len, hidden_size,
                                 intermediate_size, n_layers)

    input_ids = jax.random.randint(kid, (bs, trg_seq), 0, vocab_size, dtype=jnp.int32)
    encoder_hidden_states = jax.random.normal(kenc, (bs, src_seq, hidden_size),
                                              jnp.float32)

    # Causal decoder self-attention mask: [bs, 1, trg_seq, trg_seq], 0 / -1e9
    causal = jnp.tril(jnp.ones((trg_seq, trg_seq), jnp.float32))
    attention_mask = jnp.where(causal[None, None] > 0, 0.0, -1e9)
    attention_mask = jnp.broadcast_to(attention_mask, (bs, 1, trg_seq, trg_seq))

    # Encoder attention mask: [bs, 1, 1, src_seq], all visible
    encoder_attention_mask = jnp.zeros((bs, 1, 1, src_seq), jnp.float32)

    fwd = jax.jit(functools.partial(decoder_forward, n_head=n_head))
    logits = fwd(params, input_ids, attention_mask,
                 encoder_hidden_states, encoder_attention_mask)
    logits = jax.block_until_ready(logits)

    assert logits.shape == (bs, trg_seq, vocab_size)
    assert bool(jnp.all(jnp.isfinite(logits)))
    print("KERNEL_OK")
</pallas_src>

<mosaic_0001>
module attributes {stable_mosaic.version = 11 : i64} {
  func.func @_layernorm_kernel(%arg0: i32, %arg1: memref<16x32xf32, #tpu.memory_space<vmem>>, %arg2: memref<1x32xf32, #tpu.memory_space<vmem>>, %arg3: memref<1x32xf32, #tpu.memory_space<vmem>>, %arg4: memref<16x32xf32, #tpu.memory_space<vmem>>) attributes {dimension_semantics = [#tpu.dimension_semantics<parallel>], iteration_bounds = array<i64: 1>, scalar_prefetch = 0 : i64, scratch_operands = 0 : i64, tpu.core_type = #tpu.core_type<tc>, window_params = [{transform_indices = @transform_0, window_bounds = array<i64: 16, 32>}, {pipeline_mode = #tpu.pipeline_mode<synchronous>, transform_indices = @transform_1, window_bounds = array<i64: 1, 32>}, {pipeline_mode = #tpu.pipeline_mode<synchronous>, transform_indices = @transform_2, window_bounds = array<i64: 1, 32>}, {transform_indices = @transform_3, window_bounds = array<i64: 16, 32>}]} {
    %c0 = arith.constant 0 : index
    %c0_0 = arith.constant 0 : index
    %0 = vector.load %arg1[%c0, %c0_0] : memref<16x32xf32, #tpu.memory_space<vmem>>, vector<16x32xf32>
    %cst = arith.constant dense<0.000000e+00> : vector<16xf32>
    %1 = vector.multi_reduction <add>, %0, %cst [1] : vector<16x32xf32> to vector<16xf32>
    %2 = vector.shape_cast %1 : vector<16xf32> to vector<16x1xf32>
    %cst_1 = arith.constant 3.200000e+01 : f32
    %3 = vector.broadcast %cst_1 : f32 to vector<16x1xf32>
    %4 = arith.divf %2, %3 : vector<16x1xf32>
    %5 = vector.broadcast %4 : vector<16x1xf32> to vector<16x32xf32>
    %6 = arith.subf %0, %5 : vector<16x32xf32>
    %7 = arith.mulf %6, %6 : vector<16x32xf32>
    %cst_2 = arith.constant dense<0.000000e+00> : vector<16xf32>
    %8 = vector.multi_reduction <add>, %7, %cst_2 [1] : vector<16x32xf32> to vector<16xf32>
    %9 = vector.shape_cast %8 : vector<16xf32> to vector<16x1xf32>
    %cst_3 = arith.constant 3.200000e+01 : f32
    %10 = vector.broadcast %cst_3 : f32 to vector<16x1xf32>
    %11 = arith.divf %9, %10 : vector<16x1xf32>
    %12 = vector.broadcast %4 : vector<16x1xf32> to vector<16x32xf32>
    %13 = arith.subf %0, %12 : vector<16x32xf32>
    %cst_4 = arith.constant 9.99999974E-6 : f32
    %14 = vector.broadcast %cst_4 : f32 to vector<16x1xf32>
    %15 = arith.addf %11, %14 : vector<16x1xf32>
    %16 = math.rsqrt %15 : vector<16x1xf32>
    %17 = vector.broadcast %16 : vector<16x1xf32> to vector<16x32xf32>
    %18 = arith.mulf %13, %17 : vector<16x32xf32>
    %c0_5 = arith.constant 0 : index
    %c0_6 = arith.constant 0 : index
    %19 = vector.load %arg2[%c0_5, %c0_6] : memref<1x32xf32, #tpu.memory_space<vmem>>, vector<1x32xf32>
    %20 = vector.broadcast %19 : vector<1x32xf32> to vector<16x32xf32>
    %21 = arith.mulf %18, %20 : vector<16x32xf32>
    %c0_7 = arith.constant 0 : index
    %c0_8 = arith.constant 0 : index
    %22 = vector.load %arg3[%c0_7, %c0_8] : memref<1x32xf32, #tpu.memory_space<vmem>>, vector<1x32xf32>
    %23 = vector.broadcast %22 : vector<1x32xf32> to vector<16x32xf32>
    %24 = arith.addf %21, %23 : vector<16x32xf32>
    %c0_9 = arith.constant 0 : index
    %c0_10 = arith.constant 0 : index
    %25 = vector.load %arg4[%c0_9, %c0_10] : memref<16x32xf32, #tpu.memory_space<vmem>>, vector<16x32xf32>
    tpu.vector_store %arg4[%c0_9, %c0_10], %24 {strides = array<i32>} : memref<16x32xf32, #tpu.memory_space<vmem>>, vector<16x32xf32>,
    return
  }
  func.func @transform_0(%arg0: i32) -> (i32, i32) {
    %c0_i32 = arith.constant 0 : i32
    %c0_i32_0 = arith.constant 0 : i32
    return %arg0, %c0_i32 : i32, i32
  }
  func.func @transform_1(%arg0: i32) -> (i32, i32) {
    %c0_i32 = arith.constant 0 : i32
    %c0_i32_0 = arith.constant 0 : i32
    %c0_i32_1 = arith.constant 0 : i32
    return %c0_i32, %c0_i32_0 : i32, i32
  }
  func.func @transform_2(%arg0: i32) -> (i32, i32) {
    %c0_i32 = arith.constant 0 : i32
    %c0_i32_0 = arith.constant 0 : i32
    %c0_i32_1 = arith.constant 0 : i32
    return %c0_i32, %c0_i32_0 : i32, i32
  }
  func.func @transform_3(%arg0: i32) -> (i32, i32) {
    %c0_i32 = arith.constant 0 : i32
    %c0_i32_0 = arith.constant 0 : i32
    return %arg0, %c0_i32 : i32, i32
  }
}

module attributes {stable_mosaic.version = 11 : i64} {
  func.func @_linear_kernel(%arg0: i32, %arg1: i32, %arg2: i32, %arg3: memref<16x32xf32, #tpu.memory_space<vmem>>, %arg4: memref<32x96xf32, #tpu.memory_space<vmem>>, %arg5: memref<1x96xf32, #tpu.memory_space<vmem>>, %arg6: memref<16x96xf32, #tpu.memory_space<vmem>>, %arg7: memref<16x96xf32, #tpu.memory_space<vmem>>) attributes {dimension_semantics = [#tpu.dimension_semantics<parallel>, #tpu.dimension_semantics<parallel>, #tpu.dimension_semantics<arbitrary>], iteration_bounds = array<i64: 1, 1, 1>, scalar_prefetch = 0 : i64, scratch_operands = 1 : i64, tpu.core_type = #tpu.core_type<tc>, window_params = [{transform_indices = @transform_0, window_bounds = array<i64: 16, 32>}, {transform_indices = @transform_1, window_bounds = array<i64: 32, 96>}, {transform_indices = @transform_2, window_bounds = array<i64: 1, 96>}, {transform_indices = @transform_3, window_bounds = array<i64: 16, 96>}]} {
    %c0_i32 = arith.constant 0 : i32
    %0 = arith.cmpi eq, %arg2, %c0_i32 : i32
    %1 = arith.extui %0 : i1 to i32
    %c0_i32_0 = arith.constant 0 : i32
    %2 = arith.cmpi ne, %1, %c0_i32_0 : i32
    scf.if %2 {
      %cst_10 = arith.constant 0.000000e+00 : f32
      %12 = vector.broadcast %cst_10 : f32 to vector<16x96xf32>
      %c0_11 = arith.constant 0 : index
      %c0_12 = arith.constant 0 : index
      %13 = vector.load %arg7[%c0_11, %c0_12] : memref<16x96xf32, #tpu.memory_space<vmem>>, vector<16x96xf32>
      tpu.vector_store %arg7[%c0_11, %c0_12], %12 {strides = array<i32>} : memref<16x96xf32, #tpu.memory_space<vmem>>, vector<16x96xf32>,
    } else {
    }
    %c0 = arith.constant 0 : index
    %c0_1 = arith.constant 0 : index
    %3 = vector.load %arg7[%c0, %c0_1] : memref<16x96xf32, #tpu.memory_space<vmem>>, vector<16x96xf32>
    %c0_2 = arith.constant 0 : index
    %c0_3 = arith.constant 0 : index
    %4 = vector.load %arg3[%c0_2, %c0_3] : memref<16x32xf32, #tpu.memory_space<vmem>>, vector<16x32xf32>
    %c0_4 = arith.constant 0 : index
    %c0_5 = arith.constant 0 : index
    %5 = vector.load %arg4[%c0_4, %c0_5] : memref<32x96xf32, #tpu.memory_space<vmem>>, vector<32x96xf32>
    %cst = arith.constant dense<0.000000e+00> : vector<16x96xf32>
    %6 = tpu.matmul %4, %5, %cst {dimension_numbers = #tpu.dot_dimension_numbers<[1], [0], [0], [1], [0, 0, 1, 1], [], []>} : vector<16x32xf32>, vector<32x96xf32>, vector<16x96xf32> -> vector<16x96xf32>
    %7 = arith.addf %3, %6 : vector<16x96xf32>
    %c0_6 = arith.constant 0 : index
    %c0_7 = arith.constant 0 : index
    %8 = vector.load %arg7[%c0_6, %c0_7] : memref<16x96xf32, #tpu.memory_space<vmem>>, vector<16x96xf32>
    tpu.vector_store %arg7[%c0_6, %c0_7], %7 {strides = array<i32>} : memref<16x96xf32, #tpu.memory_space<vmem>>, vector<16x96xf32>,
    %c0_i32_8 = arith.constant 0 : i32
    %9 = arith.cmpi eq, %arg2, %c0_i32_8 : i32
    %10 = arith.extui %9 : i1 to i32
    %c0_i32_9 = arith.constant 0 : i32
    %11 = arith.cmpi ne, %10, %c0_i32_9 : i32
    scf.if %11 {
      %c0_10 = arith.constant 0 : index
      %c0_11 = arith.constant 0 : index
      %12 = vector.load %arg7[%c0_10, %c0_11] : memref<16x96xf32, #tpu.memory_space<vmem>>, vector<16x96xf32>
      %c0_12 = arith.constant 0 : index
      %c0_13 = arith.constant 0 : index
      %13 = vector.load %arg5[%c0_12, %c0_13] : memref<1x96xf32, #tpu.memory_space<vmem>>, vector<1x96xf32>
      %14 = vector.broadcast %13 : vector<1x96xf32> to vector<16x96xf32>
      %15 = arith.addf %12, %14 : vector<16x96xf32>
      %c0_14 = arith.constant 0 : index
      %c0_15 = arith.constant 0 : index
      %16 = vector.load %arg6[%c0_14, %c0_15] : memref<16x96xf32, #tpu.memory_space<vmem>>, vector<16x96xf32>
      tpu.vector_store %arg6[%c0_14, %c0_15], %15 {strides = array<i32>} : memref<16x96xf32, #tpu.memory_space<vmem>>, vector<16x96xf32>,
    } else {
    }
    return
  }
  func.func @transform_0(%arg0: i32, %arg1: i32, %arg2: i32) -> (i32, i32) {
    %c0_i32 = arith.constant 0 : i32
    return %arg0, %arg2 : i32, i32
  }
  func.func @transform_1(%arg0: i32, %arg1: i32, %arg2: i32) -> (i32, i32) {
    %c0_i32 = arith.constant 0 : i32
    return %arg2, %arg1 : i32, i32
  }
  func.func @transform_2(%arg0: i32, %arg1: i32, %arg2: i32) -> (i32, i32) {
    %c0_i32 = arith.constant 0 : i32
    %c0_i32_0 = arith.constant 0 : i32
    return %c0_i32, %arg1 : i32, i32
  }
  func.func @transform_3(%arg0: i32, %arg1: i32, %arg2: i32) -> (i32, i32) {
    %c0_i32 = arith.constant 0 : i32
    return %arg0, %arg1 : i32, i32
  }
}

module attributes {stable_mosaic.version = 11 : i64} {
  func.func @_mha_flash_kernel(%arg0: i32, %arg1: i32, %arg2: memref<1x4x8x8xf32, #tpu.memory_space<vmem>>, %arg3: memref<1x4x8x8xf32, #tpu.memory_space<vmem>>, %arg4: memref<1x4x8x8xf32, #tpu.memory_space<vmem>>, %arg5: memref<1x1x8x8xf32, #tpu.memory_space<vmem>>, %arg6: memref<1x4x8x8xf32, #tpu.memory_space<vmem>>, %arg7: memref<4x8x1xf32, #tpu.memory_space<vmem>>, %arg8: memref<4x8x1xf32, #tpu.memory_space<vmem>>, %arg9: memref<4x8x8xf32, #tpu.memory_space<vmem>>) attributes {dimension_semantics = [#tpu.dimension_semantics<parallel>, #tpu.dimension_semantics<arbitrary>], iteration_bounds = array<i64: 2, 1>, scalar_prefetch = 0 : i64, scratch_operands = 3 : i64, tpu.core_type = #tpu.core_type<tc>, window_params = [{transform_indices = @transform_0, window_bounds = array<i64: 1, 4, 8, 8>}, {transform_indices = @transform_1, window_bounds = array<i64: 1, 4, 8, 8>}, {transform_indices = @transform_2, window_bounds = array<i64: 1, 4, 8, 8>}, {transform_indices = @transform_3, window_bounds = array<i64: 1, 1, 8, 8>}, {transform_indices = @transform_4, window_bounds = array<i64: 1, 4, 8, 8>}]} {
    %c0_i32 = arith.constant 0 : i32
    %0 = arith.cmpi eq, %arg1, %c0_i32 : i32
    %1 = arith.extui %0 : i1 to i32
    %c0_i32_0 = arith.constant 0 : i32
    %2 = arith.cmpi ne, %1, %c0_i32_0 : i32
    scf.if %2 {
      %cst_40 = arith.constant 0xFF800000 : f32
      %42 = vector.broadcast %cst_40 : f32 to vector<4x8x1xf32>
      %c0_41 = arith.constant 0 : index
      %c0_42 = arith.constant 0 : index
      %c0_43 = arith.constant 0 : index
      %43 = vector.load %arg7[%c0_41, %c0_42, %c0_43] : memref<4x8x1xf32, #tpu.memory_space<vmem>>, vector<4x8x1xf32>
      tpu.vector_store %arg7[%c0_41, %c0_42, %c0_43], %42 {strides = array<i32>} : memref<4x8x1xf32, #tpu.memory_space<vmem>>, vector<4x8x1xf32>,
      %cst_44 = arith.constant 0.000000e+00 : f32
      %44 = vector.broadcast %cst_44 : f32 to vector<4x8x1xf32>
      %c0_45 = arith.constant 0 : index
      %c0_46 = arith.constant 0 : index
      %c0_47 = arith.constant 0 : index
      %45 = vector.load %arg8[%c0_45, %c0_46, %c0_47] : memref<4x8x1xf32, #tpu.memory_space<vmem>>, vector<4x8x1xf32>
      tpu.vector_store %arg8[%c0_45, %c0_46, %c0_47], %44 {strides = array<i32>} : memref<4x8x1xf32, #tpu.memory_space<vmem>>, vector<4x8x1xf32>,
      %cst_48 = arith.constant 0.000000e+00 : f32
      %46 = vector.broadcast %cst_48 : f32 to vector<4x8x8xf32>
      %c0_49 = arith.constant 0 : index
      %c0_50 = arith.constant 0 : index
      %c0_51 = arith.constant 0 : index
      %47 = vector.load %arg9[%c0_49, %c0_50, %c0_51] : memref<4x8x8xf32, #tpu.memory_space<vmem>>, vector<4x8x8xf32>
      tpu.vector_store %arg9[%c0_49, %c0_50, %c0_51], %46 {strides = array<i32>} : memref<4x8x8xf32, #tpu.memory_space<vmem>>, vector<4x8x8xf32>,
    } else {
    }
    %c0 = arith.constant 0 : index
    %c0_1 = arith.constant 0 : index
    %c0_2 = arith.constant 0 : index
    %c0_3 = arith.constant 0 : index
    %3 = vector.load %arg2[%c0, %c0_1, %c0_2, %c0_3] : memref<1x4x8x8xf32, #tpu.memory_space<vmem>>, vector<1x4x8x8xf32>
    %4 = vector.shape_cast %3 : vector<1x4x8x8xf32> to vector<4x8x8xf32>
    %c0_4 = arith.constant 0 : index
    %c0_5 = arith.constant 0 : index
    %c0_6 = arith.constant 0 : index
    %c0_7 = arith.constant 0 : index
    %5 = vector.load %arg3[%c0_4, %c0_5, %c0_6, %c0_7] : memref<1x4x8x8xf32, #tpu.memory_space<vmem>>, vector<1x4x8x8xf32>
    %6 = vector.shape_cast %5 : vector<1x4x8x8xf32> to vector<4x8x8xf32>
    %c0_8 = arith.constant 0 : index
    %c0_9 = arith.constant 0 : index
    %c0_10 = arith.constant 0 : index
    %c0_11 = arith.constant 0 : index
    %7 = vector.load %arg4[%c0_8, %c0_9, %c0_10, %c0_11] : memref<1x4x8x8xf32, #tpu.memory_space<vmem>>, vector<1x4x8x8xf32>
    %8 = vector.shape_cast %7 : vector<1x4x8x8xf32> to vector<4x8x8xf32>
    %c0_12 = arith.constant 0 : index
    %c0_13 = arith.constant 0 : index
    %c0_14 = arith.constant 0 : index
    %c0_15 = arith.constant 0 : index
    %9 = vector.load %arg5[%c0_12, %c0_13, %c0_14, %c0_15] : memref<1x1x8x8xf32, #tpu.memory_space<vmem>>, vector<1x1x8x8xf32>
    %10 = vector.shape_cast %9 : vector<1x1x8x8xf32> to vector<8x8xf32>
    %cst = arith.constant dense<0.000000e+00> : vector<4x8x8xf32>
    %11 = tpu.matmul %4, %6, %cst {dimension_numbers = #tpu.dot_dimension_numbers<[2], [2], [1], [1], [0, 0, 0, 1, 1, 1], [0], [0]>} : vector<4x8x8xf32>, vector<4x8x8xf32>, vector<4x8x8xf32> -> vector<4x8x8xf32>
    %cst_16 = arith.constant 0.353553385 : f32
    %12 = vector.broadcast %cst_16 : f32 to vector<4x8x8xf32>
    %13 = arith.mulf %11, %12 : vector<4x8x8xf32>
    %14 = vector.shape_cast %10 : vector<8x8xf32> to vector<1x8x8xf32>
    %15 = vector.broadcast %14 : vector<1x8x8xf32> to vector<4x8x8xf32>
    %16 = arith.addf %13, %15 : vector<4x8x8xf32>
    %c0_17 = arith.constant 0 : index
    %c0_18 = arith.constant 0 : index
    %c0_19 = arith.constant 0 : index
    %17 = vector.load %arg7[%c0_17, %c0_18, %c0_19] : memref<4x8x1xf32, #tpu.memory_space<vmem>>, vector<4x8x1xf32>
    %cst_20 = arith.constant dense<0xFF800000> : vector<4x8xf32>
    %18 = vector.multi_reduction <maximumf>, %16, %cst_20 [2] : vector<4x8x8xf32> to vector<4x8xf32>
    %19 = vector.shape_cast %18 : vector<4x8xf32> to vector<4x8x1xf32>
    %20 = arith.maximumf %17, %19 : vector<4x8x1xf32>
    %21 = arith.subf %17, %20 : vector<4x8x1xf32>
    %22 = math.exp %21 : vector<4x8x1xf32>
    %23 = vector.broadcast %20 : vector<4x8x1xf32> to vector<4x8x8xf32>
    %24 = arith.subf %16, %23 : vector<4x8x8xf32>
    %25 = math.exp %24 : vector<4x8x8xf32>
    %c0_21 = arith.constant 0 : index
    %c0_22 = arith.constant 0 : index
    %c0_23 = arith.constant 0 : index
    %26 = vector.load %arg8[%c0_21, %c0_22, %c0_23] : memref<4x8x1xf32, #tpu.memory_space<vmem>>, vector<4x8x1xf32>
    %27 = arith.mulf %22, %26 : vector<4x8x1xf32>
    %cst_24 = arith.constant dense<0.000000e+00> : vector<4x8xf32>
    %28 = vector.multi_reduction <add>, %25, %cst_24 [2] : vector<4x8x8xf32> to vector<4x8xf32>
    %29 = vector.shape_cast %28 : vector<4x8xf32> to vector<4x8x1xf32>
    %30 = arith.addf %27, %29 : vector<4x8x1xf32>
    %c0_25 = arith.constant 0 : index
    %c0_26 = arith.constant 0 : index
    %c0_27 = arith.constant 0 : index
    %31 = vector.load %arg8[%c0_25, %c0_26, %c0_27] : memref<4x8x1xf32, #tpu.memory_space<vmem>>, vector<4x8x1xf32>
    tpu.vector_store %arg8[%c0_25, %c0_26, %c0_27], %30 {strides = array<i32>} : memref<4x8x1xf32, #tpu.memory_space<vmem>>, vector<4x8x1xf32>,
    %c0_28 = arith.constant 0 : index
    %c0_29 = arith.constant 0 : index
    %c0_30 = arith.constant 0 : index
    %32 = vector.load %arg9[%c0_28, %c0_29, %c0_30] : memref<4x8x8xf32, #tpu.memory_space<vmem>>, vector<4x8x8xf32>
    %33 = vector.broadcast %22 : vector<4x8x1xf32> to vector<4x8x8xf32>
    %34 = arith.mulf %33, %32 : vector<4x8x8xf32>
    %cst_31 = arith.constant dense<0.000000e+00> : vector<4x8x8xf32>
    %35 = tpu.matmul %25, %8, %cst_31 {dimension_numbers = #tpu.dot_dimension_numbers<[2], [1], [1], [2], [0, 0, 0, 1, 1, 2], [0], [0]>} : vector<4x8x8xf32>, vector<4x8x8xf32>, vector<4x8x8xf32> -> vector<4x8x8xf32>
    %36 = arith.addf %34, %35 : vector<4x8x8xf32>
    %c0_32 = arith.constant 0 : index
    %c0_33 = arith.constant 0 : index
    %c0_34 = arith.constant 0 : index
    %37 = vector.load %arg9[%c0_32, %c0_33, %c0_34] : memref<4x8x8xf32, #tpu.memory_space<vmem>>, vector<4x8x8xf32>
    tpu.vector_store %arg9[%c0_32, %c0_33, %c0_34], %36 {strides = array<i32>} : memref<4x8x8xf32, #tpu.memory_space<vmem>>, vector<4x8x8xf32>,
    %c0_35 = arith.constant 0 : index
    %c0_36 = arith.constant 0 : index
    %c0_37 = arith.constant 0 : index
    %38 = vector.load %arg7[%c0_35, %c0_36, %c0_37] : memref<4x8x1xf32, #tpu.memory_space<vmem>>, vector<4x8x1xf32>
    tpu.vector_store %arg7[%c0_35, %c0_36, %c0_37], %20 {strides = array<i32>} : memref<4x8x1xf32, #tpu.memory_space<vmem>>, vector<4x8x1xf32>,
    %c0_i32_38 = arith.constant 0 : i32
    %39 = arith.cmpi eq, %arg1, %c0_i32_38 : i32
    %40 = arith.extui %39 : i1 to i32
    %c0_i32_39 = arith.constant 0 : i32
    %41 = arith.cmpi ne, %40, %c0_i32_39 : i32
    scf.if %41 {
      %c0_40 = arith.constant 0 : index
      %c0_41 = arith.constant 0 : index
      %c0_42 = arith.constant 0 : index
      %42 = vector.load %arg8[%c0_40, %c0_41, %c0_42] : memref<4x8x1xf32, #tpu.memory_space<vmem>>, vector<4x8x1xf32>
      %43 = tpu.reciprocal %42 {approx = true} : vector<4x8x1xf32> -> vector<4x8x1xf32>
      %c0_43 = arith.constant 0 : index
      %c0_44 = arith.constant 0 : index
      %c0_45 = arith.constant 0 : index
      %44 = vector.load %arg9[%c0_43, %c0_44, %c0_45] : memref<4x8x8xf32, #tpu.memory_space<vmem>>, vector<4x8x8xf32>
      %45 = vector.broadcast %43 : vector<4x8x1xf32> to vector<4x8x8xf32>
      %46 = arith.mulf %44, %45 : vector<4x8x8xf32>
      %c0_46 = arith.constant 0 : index
      %c0_47 = arith.constant 0 : index
      %c0_48 = arith.constant 0 : index
      %c0_49 = arith.constant 0 : index
      %47 = vector.load %arg6[%c0_46, %c0_47, %c0_48, %c0_49] : memref<1x4x8x8xf32, #tpu.memory_space<vmem>>, vector<1x4x8x8xf32>
      %48 = vector.shape_cast %47 : vector<1x4x8x8xf32> to vector<4x8x8xf32>
      %49 = vector.shape_cast %46 : vector<4x8x8xf32> to vector<1x4x8x8xf32>
      tpu.vector_store %arg6[%c0_46, %c0_47, %c0_48, %c0_49], %49 {strides = array<i32>} : memref<1x4x8x8xf32, #tpu.memory_space<vmem>>, vector<1x4x8x8xf32>,
    } else {
    }
    return
  }
  func.func @transform_0(%arg0: i32, %arg1: i32) -> (i32, i32, i32, i32) {
    %c0_i32 = arith.constant 0 : i32
    %c0_i32_0 = arith.constant 0 : i32
    %c0_i32_1 = arith.constant 0 : i32
    %c0_i32_2 = arith.constant 0 : i32
    return %arg0, %c0_i32, %c0_i32_0, %c0_i32_1 : i32, i32, i32, i32
  }
  func.func @transform_1(%arg0: i32, %arg1: i32) -> (i32, i32, i32, i32) {
    %c0_i32 = arith.constant 0 : i32
    %c0_i32_0 = arith.constant 0 : i32
    %c0_i32_1 = arith.constant 0 : i32
    return %arg0, %c0_i32, %arg1, %c0_i32_0 : i32, i32, i32, i32
  }
  func.func @transform_2(%arg0: i32, %arg1: i32) -> (i32, i32, i32, i32) {
    %c0_i32 = arith.constant 0 : i32
    %c0_i32_0 = arith.constant 0 : i32
    %c0_i32_1 = arith.constant 0 : i32
    return %arg0, %c0_i32, %arg1, %c0_i32_0 : i32, i32, i32, i32
  }
  func.func @transform_3(%arg0: i32, %arg1: i32) -> (i32, i32, i32, i32) {
    %c0_i32 = arith.constant 0 : i32
    %c0_i32_0 = arith.constant 0 : i32
    %c0_i32_1 = arith.constant 0 : i32
    return %arg0, %c0_i32, %c0_i32_0, %arg1 : i32, i32, i32, i32
  }
  func.func @transform_4(%arg0: i32, %arg1: i32) -> (i32, i32, i32, i32) {
    %c0_i32 = arith.constant 0 : i32
    %c0_i32_0 = arith.constant 0 : i32
    %c0_i32_1 = arith.constant 0 : i32
    %c0_i32_2 = arith.constant 0 : i32
    return %arg0, %c0_i32, %c0_i32_0, %c0_i32_1 : i32, i32, i32, i32
  }
}

module attributes {stable_mosaic.version = 11 : i64} {
  func.func @_linear_kernel(%arg0: i32, %arg1: i32, %arg2: i32, %arg3: memref<16x32xf32, #tpu.memory_space<vmem>>, %arg4: memref<32x32xf32, #tpu.memory_space<vmem>>, %arg5: memref<1x32xf32, #tpu.memory_space<vmem>>, %arg6: memref<16x32xf32, #tpu.memory_space<vmem>>, %arg7: memref<16x32xf32, #tpu.memory_space<vmem>>) attributes {dimension_semantics = [#tpu.dimension_semantics<parallel>, #tpu.dimension_semantics<parallel>, #tpu.dimension_semantics<arbitrary>], iteration_bounds = array<i64: 1, 1, 1>, scalar_prefetch = 0 : i64, scratch_operands = 1 : i64, tpu.core_type = #tpu.core_type<tc>, window_params = [{transform_indices = @transform_0, window_bounds = array<i64: 16, 32>}, {transform_indices = @transform_1, window_bounds = array<i64: 32, 32>}, {transform_indices = @transform_2, window_bounds = array<i64: 1, 32>}, {transform_indices = @transform_3, window_bounds = array<i64: 16, 32>}]} {
    %c0_i32 = arith.constant 0 : i32
    %0 = arith.cmpi eq, %arg2, %c0_i32 : i32
    %1 = arith.extui %0 : i1 to i32
    %c0_i32_0 = arith.constant 0 : i32
    %2 = arith.cmpi ne, %1, %c0_i32_0 : i32
    scf.if %2 {
      %cst_10 = arith.constant 0.000000e+00 : f32
      %12 = vector.broadcast %cst_10 : f32 to vector<16x32xf32>
      %c0_11 = arith.constant 0 : index
      %c0_12 = arith.constant 0 : index
      %13 = vector.load %arg7[%c0_11, %c0_12] : memref<16x32xf32, #tpu.memory_space<vmem>>, vector<16x32xf32>
      tpu.vector_store %arg7[%c0_11, %c0_12], %12 {strides = array<i32>} : memref<16x32xf32, #tpu.memory_space<vmem>>, vector<16x32xf32>,
    } else {
    }
    %c0 = arith.constant 0 : index
    %c0_1 = arith.constant 0 : index
    %3 = vector.load %arg7[%c0, %c0_1] : memref<16x32xf32, #tpu.memory_space<vmem>>, vector<16x32xf32>
    %c0_2 = arith.constant 0 : index
    %c0_3 = arith.constant 0 : index
    %4 = vector.load %arg3[%c0_2, %c0_3] : memref<16x32xf32, #tpu.memory_space<vmem>>, vector<16x32xf32>
    %c0_4 = arith.constant 0 : index
    %c0_5 = arith.constant 0 : index
    %5 = vector.load %arg4[%c0_4, %c0_5] : memref<32x32xf32, #tpu.memory_space<vmem>>, vector<32x32xf32>
    %cst = arith.constant dense<0.000000e+00> : vector<16x32xf32>
    %6 = tpu.matmul %4, %5, %cst {dimension_numbers = #tpu.dot_dimension_numbers<[1], [0], [0], [1], [0, 0, 1, 1], [], []>} : vector<16x32xf32>, vector<32x32xf32>, vector<16x32xf32> -> vector<16x32xf32>
    %7 = arith.addf %3, %6 : vector<16x32xf32>
    %c0_6 = arith.constant 0 : index
    %c0_7 = arith.constant 0 : index
    %8 = vector.load %arg7[%c0_6, %c0_7] : memref<16x32xf32, #tpu.memory_space<vmem>>, vector<16x32xf32>
    tpu.vector_store %arg7[%c0_6, %c0_7], %7 {strides = array<i32>} : memref<16x32xf32, #tpu.memory_space<vmem>>, vector<16x32xf32>,
    %c0_i32_8 = arith.constant 0 : i32
    %9 = arith.cmpi eq, %arg2, %c0_i32_8 : i32
    %10 = arith.extui %9 : i1 to i32
    %c0_i32_9 = arith.constant 0 : i32
    %11 = arith.cmpi ne, %10, %c0_i32_9 : i32
    scf.if %11 {
      %c0_10 = arith.constant 0 : index
      %c0_11 = arith.constant 0 : index
      %12 = vector.load %arg7[%c0_10, %c0_11] : memref<16x32xf32, #tpu.memory_space<vmem>>, vector<16x32xf32>
      %c0_12 = arith.constant 0 : index
      %c0_13 = arith.constant 0 : index
      %13 = vector.load %arg5[%c0_12, %c0_13] : memref<1x32xf32, #tpu.memory_space<vmem>>, vector<1x32xf32>
      %14 = vector.broadcast %13 : vector<1x32xf32> to vector<16x32xf32>
      %15 = arith.addf %12, %14 : vector<16x32xf32>
      %c0_14 = arith.constant 0 : index
      %c0_15 = arith.constant 0 : index
      %16 = vector.load %arg6[%c0_14, %c0_15] : memref<16x32xf32, #tpu.memory_space<vmem>>, vector<16x32xf32>
      tpu.vector_store %arg6[%c0_14, %c0_15], %15 {strides = array<i32>} : memref<16x32xf32, #tpu.memory_space<vmem>>, vector<16x32xf32>,
    } else {
    }
    return
  }
  func.func @transform_0(%arg0: i32, %arg1: i32, %arg2: i32) -> (i32, i32) {
    %c0_i32 = arith.constant 0 : i32
    return %arg0, %arg2 : i32, i32
  }
  func.func @transform_1(%arg0: i32, %arg1: i32, %arg2: i32) -> (i32, i32) {
    %c0_i32 = arith.constant 0 : i32
    return %arg2, %arg1 : i32, i32
  }
  func.func @transform_2(%arg0: i32, %arg1: i32, %arg2: i32) -> (i32, i32) {
    %c0_i32 = arith.constant 0 : i32
    %c0_i32_0 = arith.constant 0 : i32
    return %c0_i32, %arg1 : i32, i32
  }
  func.func @transform_3(%arg0: i32, %arg1: i32, %arg2: i32) -> (i32, i32) {
    %c0_i32 = arith.constant 0 : i32
    return %arg0, %arg1 : i32, i32
  }
}

module attributes {stable_mosaic.version = 11 : i64} {
  func.func @_add_layernorm_kernel(%arg0: i32, %arg1: memref<16x32xf32, #tpu.memory_space<vmem>>, %arg2: memref<16x32xf32, #tpu.memory_space<vmem>>, %arg3: memref<1x32xf32, #tpu.memory_space<vmem>>, %arg4: memref<1x32xf32, #tpu.memory_space<vmem>>, %arg5: memref<16x32xf32, #tpu.memory_space<vmem>>) attributes {dimension_semantics = [#tpu.dimension_semantics<parallel>], iteration_bounds = array<i64: 1>, scalar_prefetch = 0 : i64, scratch_operands = 0 : i64, tpu.core_type = #tpu.core_type<tc>, window_params = [{transform_indices = @transform_0, window_bounds = array<i64: 16, 32>}, {transform_indices = @transform_1, window_bounds = array<i64: 16, 32>}, {pipeline_mode = #tpu.pipeline_mode<synchronous>, transform_indices = @transform_2, window_bounds = array<i64: 1, 32>}, {pipeline_mode = #tpu.pipeline_mode<synchronous>, transform_indices = @transform_3, window_bounds = array<i64: 1, 32>}, {transform_indices = @transform_4, window_bounds = array<i64: 16, 32>}]} {
    %c0 = arith.constant 0 : index
    %c0_0 = arith.constant 0 : index
    %0 = vector.load %arg1[%c0, %c0_0] : memref<16x32xf32, #tpu.memory_space<vmem>>, vector<16x32xf32>
    %c0_1 = arith.constant 0 : index
    %c0_2 = arith.constant 0 : index
    %1 = vector.load %arg2[%c0_1, %c0_2] : memref<16x32xf32, #tpu.memory_space<vmem>>, vector<16x32xf32>
    %2 = arith.addf %0, %1 : vector<16x32xf32>
    %cst = arith.constant dense<0.000000e+00> : vector<16xf32>
    %3 = vector.multi_reduction <add>, %2, %cst [1] : vector<16x32xf32> to vector<16xf32>
    %4 = vector.shape_cast %3 : vector<16xf32> to vector<16x1xf32>
    %cst_3 = arith.constant 3.200000e+01 : f32
    %5 = vector.broadcast %cst_3 : f32 to vector<16x1xf32>
    %6 = arith.divf %4, %5 : vector<16x1xf32>
    %7 = vector.broadcast %6 : vector<16x1xf32> to vector<16x32xf32>
    %8 = arith.subf %2, %7 : vector<16x32xf32>
    %9 = arith.mulf %8, %8 : vector<16x32xf32>
    %cst_4 = arith.constant dense<0.000000e+00> : vector<16xf32>
    %10 = vector.multi_reduction <add>, %9, %cst_4 [1] : vector<16x32xf32> to vector<16xf32>
    %11 = vector.shape_cast %10 : vector<16xf32> to vector<16x1xf32>
    %cst_5 = arith.constant 3.200000e+01 : f32
    %12 = vector.broadcast %cst_5 : f32 to vector<16x1xf32>
    %13 = arith.divf %11, %12 : vector<16x1xf32>
    %14 = vector.broadcast %6 : vector<16x1xf32> to vector<16x32xf32>
    %15 = arith.subf %2, %14 : vector<16x32xf32>
    %cst_6 = arith.constant 9.99999974E-6 : f32
    %16 = vector.broadcast %cst_6 : f32 to vector<16x1xf32>
    %17 = arith.addf %13, %16 : vector<16x1xf32>
    %18 = math.rsqrt %17 : vector<16x1xf32>
    %19 = vector.broadcast %18 : vector<16x1xf32> to vector<16x32xf32>
    %20 = arith.mulf %15, %19 : vector<16x32xf32>
    %c0_7 = arith.constant 0 : index
    %c0_8 = arith.constant 0 : index
    %21 = vector.load %arg3[%c0_7, %c0_8] : memref<1x32xf32, #tpu.memory_space<vmem>>, vector<1x32xf32>
    %22 = vector.broadcast %21 : vector<1x32xf32> to vector<16x32xf32>
    %23 = arith.mulf %20, %22 : vector<16x32xf32>
    %c0_9 = arith.constant 0 : index
    %c0_10 = arith.constant 0 : index
    %24 = vector.load %arg4[%c0_9, %c0_10] : memref<1x32xf32, #tpu.memory_space<vmem>>, vector<1x32xf32>
    %25 = vector.broadcast %24 : vector<1x32xf32> to vector<16x32xf32>
    %26 = arith.addf %23, %25 : vector<16x32xf32>
    %c0_11 = arith.constant 0 : index
    %c0_12 = arith.constant 0 : index
    %27 = vector.load %arg5[%c0_11, %c0_12] : memref<16x32xf32, #tpu.memory_space<vmem>>, vector<16x32xf32>
    tpu.vector_store %arg5[%c0_11, %c0_12], %26 {strides = array<i32>} : memref<16x32xf32, #tpu.memory_space<vmem>>, vector<16x32xf32>,
    return
  }
  func.func @transform_0(%arg0: i32) -> (i32, i32) {
    %c0_i32 = arith.constant 0 : i32
    %c0_i32_0 = arith.constant 0 : i32
    return %arg0, %c0_i32 : i32, i32
  }
  func.func @transform_1(%arg0: i32) -> (i32, i32) {
    %c0_i32 = arith.constant 0 : i32
    %c0_i32_0 = arith.constant 0 : i32
    return %arg0, %c0_i32 : i32, i32
  }
  func.func @transform_2(%arg0: i32) -> (i32, i32) {
    %c0_i32 = arith.constant 0 : i32
    %c0_i32_0 = arith.constant 0 : i32
    %c0_i32_1 = arith.constant 0 : i32
    return %c0_i32, %c0_i32_0 : i32, i32
  }
  func.func @transform_3(%arg0: i32) -> (i32, i32) {
    %c0_i32 = arith.constant 0 : i32
    %c0_i32_0 = arith.constant 0 : i32
    %c0_i32_1 = arith.constant 0 : i32
    return %c0_i32, %c0_i32_0 : i32, i32
  }
  func.func @transform_4(%arg0: i32) -> (i32, i32) {
    %c0_i32 = arith.constant 0 : i32
    %c0_i32_0 = arith.constant 0 : i32
    return %arg0, %c0_i32 : i32, i32
  }
}

module attributes {stable_mosaic.version = 11 : i64} {
  func.func @_linear_kernel(%arg0: i32, %arg1: i32, %arg2: i32, %arg3: memref<16x32xf32, #tpu.memory_space<vmem>>, %arg4: memref<32x64xf32, #tpu.memory_space<vmem>>, %arg5: memref<1x64xf32, #tpu.memory_space<vmem>>, %arg6: memref<16x64xf32, #tpu.memory_space<vmem>>, %arg7: memref<16x64xf32, #tpu.memory_space<vmem>>) attributes {dimension_semantics = [#tpu.dimension_semantics<parallel>, #tpu.dimension_semantics<parallel>, #tpu.dimension_semantics<arbitrary>], iteration_bounds = array<i64: 1, 1, 1>, scalar_prefetch = 0 : i64, scratch_operands = 1 : i64, tpu.core_type = #tpu.core_type<tc>, window_params = [{transform_indices = @transform_0, window_bounds = array<i64: 16, 32>}, {transform_indices = @transform_1, window_bounds = array<i64: 32, 64>}, {transform_indices = @transform_2, window_bounds = array<i64: 1, 64>}, {transform_indices = @transform_3, window_bounds = array<i64: 16, 64>}]} {
    %c0_i32 = arith.constant 0 : i32
    %0 = arith.cmpi eq, %arg2, %c0_i32 : i32
    %1 = arith.extui %0 : i1 to i32
    %c0_i32_0 = arith.constant 0 : i32
    %2 = arith.cmpi ne, %1, %c0_i32_0 : i32
    scf.if %2 {
      %cst_10 = arith.constant 0.000000e+00 : f32
      %12 = vector.broadcast %cst_10 : f32 to vector<16x64xf32>
      %c0_11 = arith.constant 0 : index
      %c0_12 = arith.constant 0 : index
      %13 = vector.load %arg7[%c0_11, %c0_12] : memref<16x64xf32, #tpu.memory_space<vmem>>, vector<16x64xf32>
      tpu.vector_store %arg7[%c0_11, %c0_12], %12 {strides = array<i32>} : memref<16x64xf32, #tpu.memory_space<vmem>>, vector<16x64xf32>,
    } else {
    }
    %c0 = arith.constant 0 : index
    %c0_1 = arith.constant 0 : index
    %3 = vector.load %arg7[%c0, %c0_1] : memref<16x64xf32, #tpu.memory_space<vmem>>, vector<16x64xf32>
    %c0_2 = arith.constant 0 : index
    %c0_3 = arith.constant 0 : index
    %4 = vector.load %arg3[%c0_2, %c0_3] : memref<16x32xf32, #tpu.memory_space<vmem>>, vector<16x32xf32>
    %c0_4 = arith.constant 0 : index
    %c0_5 = arith.constant 0 : index
    %5 = vector.load %arg4[%c0_4, %c0_5] : memref<32x64xf32, #tpu.memory_space<vmem>>, vector<32x64xf32>
    %cst = arith.constant dense<0.000000e+00> : vector<16x64xf32>
    %6 = tpu.matmul %4, %5, %cst {dimension_numbers = #tpu.dot_dimension_numbers<[1], [0], [0], [1], [0, 0, 1, 1], [], []>} : vector<16x32xf32>, vector<32x64xf32>, vector<16x64xf32> -> vector<16x64xf32>
    %7 = arith.addf %3, %6 : vector<16x64xf32>
    %c0_6 = arith.constant 0 : index
    %c0_7 = arith.constant 0 : index
    %8 = vector.load %arg7[%c0_6, %c0_7] : memref<16x64xf32, #tpu.memory_space<vmem>>, vector<16x64xf32>
    tpu.vector_store %arg7[%c0_6, %c0_7], %7 {strides = array<i32>} : memref<16x64xf32, #tpu.memory_space<vmem>>, vector<16x64xf32>,
    %c0_i32_8 = arith.constant 0 : i32
    %9 = arith.cmpi eq, %arg2, %c0_i32_8 : i32
    %10 = arith.extui %9 : i1 to i32
    %c0_i32_9 = arith.constant 0 : i32
    %11 = arith.cmpi ne, %10, %c0_i32_9 : i32
    scf.if %11 {
      %c0_10 = arith.constant 0 : index
      %c0_11 = arith.constant 0 : index
      %12 = vector.load %arg7[%c0_10, %c0_11] : memref<16x64xf32, #tpu.memory_space<vmem>>, vector<16x64xf32>
      %c0_12 = arith.constant 0 : index
      %c0_13 = arith.constant 0 : index
      %13 = vector.load %arg5[%c0_12, %c0_13] : memref<1x64xf32, #tpu.memory_space<vmem>>, vector<1x64xf32>
      %14 = vector.broadcast %13 : vector<1x64xf32> to vector<16x64xf32>
      %15 = arith.addf %12, %14 : vector<16x64xf32>
      %c0_14 = arith.constant 0 : index
      %c0_15 = arith.constant 0 : index
      %16 = vector.load %arg6[%c0_14, %c0_15] : memref<16x64xf32, #tpu.memory_space<vmem>>, vector<16x64xf32>
      tpu.vector_store %arg6[%c0_14, %c0_15], %15 {strides = array<i32>} : memref<16x64xf32, #tpu.memory_space<vmem>>, vector<16x64xf32>,
    } else {
    }
    return
  }
  func.func @transform_0(%arg0: i32, %arg1: i32, %arg2: i32) -> (i32, i32) {
    %c0_i32 = arith.constant 0 : i32
    return %arg0, %arg2 : i32, i32
  }
  func.func @transform_1(%arg0: i32, %arg1: i32, %arg2: i32) -> (i32, i32) {
    %c0_i32 = arith.constant 0 : i32
    return %arg2, %arg1 : i32, i32
  }
  func.func @transform_2(%arg0: i32, %arg1: i32, %arg2: i32) -> (i32, i32) {
    %c0_i32 = arith.constant 0 : i32
    %c0_i32_0 = arith.constant 0 : i32
    return %c0_i32, %arg1 : i32, i32
  }
  func.func @transform_3(%arg0: i32, %arg1: i32, %arg2: i32) -> (i32, i32) {
    %c0_i32 = arith.constant 0 : i32
    return %arg0, %arg1 : i32, i32
  }
}

module attributes {stable_mosaic.version = 11 : i64} {
  func.func @_mha_flash_kernel(%arg0: i32, %arg1: i32, %arg2: memref<1x4x8x8xf32, #tpu.memory_space<vmem>>, %arg3: memref<1x4x8x8xf32, #tpu.memory_space<vmem>>, %arg4: memref<1x4x8x8xf32, #tpu.memory_space<vmem>>, %arg5: memref<1x1x1x8xf32, #tpu.memory_space<vmem>>, %arg6: memref<1x4x8x8xf32, #tpu.memory_space<vmem>>, %arg7: memref<4x8x1xf32, #tpu.memory_space<vmem>>, %arg8: memref<4x8x1xf32, #tpu.memory_space<vmem>>, %arg9: memref<4x8x8xf32, #tpu.memory_space<vmem>>) attributes {dimension_semantics = [#tpu.dimension_semantics<parallel>, #tpu.dimension_semantics<arbitrary>], iteration_bounds = array<i64: 2, 1>, scalar_prefetch = 0 : i64, scratch_operands = 3 : i64, tpu.core_type = #tpu.core_type<tc>, window_params = [{transform_indices = @transform_0, window_bounds = array<i64: 1, 4, 8, 8>}, {transform_indices = @transform_1, window_bounds = array<i64: 1, 4, 8, 8>}, {transform_indices = @transform_2, window_bounds = array<i64: 1, 4, 8, 8>}, {transform_indices = @transform_3, window_bounds = array<i64: 1, 1, 1, 8>}, {transform_indices = @transform_4, window_bounds = array<i64: 1, 4, 8, 8>}]} {
    %c0_i32 = arith.constant 0 : i32
    %0 = arith.cmpi eq, %arg1, %c0_i32 : i32
    %1 = arith.extui %0 : i1 to i32
    %c0_i32_0 = arith.constant 0 : i32
    %2 = arith.cmpi ne, %1, %c0_i32_0 : i32
    scf.if %2 {
      %cst_40 = arith.constant 0xFF800000 : f32
      %42 = vector.broadcast %cst_40 : f32 to vector<4x8x1xf32>
      %c0_41 = arith.constant 0 : index
      %c0_42 = arith.constant 0 : index
      %c0_43 = arith.constant 0 : index
      %43 = vector.load %arg7[%c0_41, %c0_42, %c0_43] : memref<4x8x1xf32, #tpu.memory_space<vmem>>, vector<4x8x1xf32>
      tpu.vector_store %arg7[%c0_41, %c0_42, %c0_43], %42 {strides = array<i32>} : memref<4x8x1xf32, #tpu.memory_space<vmem>>, vector<4x8x1xf32>,
      %cst_44 = arith.constant 0.000000e+00 : f32
      %44 = vector.broadcast %cst_44 : f32 to vector<4x8x1xf32>
      %c0_45 = arith.constant 0 : index
      %c0_46 = arith.constant 0 : index
      %c0_47 = arith.constant 0 : index
      %45 = vector.load %arg8[%c0_45, %c0_46, %c0_47] : memref<4x8x1xf32, #tpu.memory_space<vmem>>, vector<4x8x1xf32>
      tpu.vector_store %arg8[%c0_45, %c0_46, %c0_47], %44 {strides = array<i32>} : memref<4x8x1xf32, #tpu.memory_space<vmem>>, vector<4x8x1xf32>,
      %cst_48 = arith.constant 0.000000e+00 : f32
      %46 = vector.broadcast %cst_48 : f32 to vector<4x8x8xf32>
      %c0_49 = arith.constant 0 : index
      %c0_50 = arith.constant 0 : index
      %c0_51 = arith.constant 0 : index
      %47 = vector.load %arg9[%c0_49, %c0_50, %c0_51] : memref<4x8x8xf32, #tpu.memory_space<vmem>>, vector<4x8x8xf32>
      tpu.vector_store %arg9[%c0_49, %c0_50, %c0_51], %46 {strides = array<i32>} : memref<4x8x8xf32, #tpu.memory_space<vmem>>, vector<4x8x8xf32>,
    } else {
    }
    %c0 = arith.constant 0 : index
    %c0_1 = arith.constant 0 : index
    %c0_2 = arith.constant 0 : index
    %c0_3 = arith.constant 0 : index
    %3 = vector.load %arg2[%c0, %c0_1, %c0_2, %c0_3] : memref<1x4x8x8xf32, #tpu.memory_space<vmem>>, vector<1x4x8x8xf32>
    %4 = vector.shape_cast %3 : vector<1x4x8x8xf32> to vector<4x8x8xf32>
    %c0_4 = arith.constant 0 : index
    %c0_5 = arith.constant 0 : index
    %c0_6 = arith.constant 0 : index
    %c0_7 = arith.constant 0 : index
    %5 = vector.load %arg3[%c0_4, %c0_5, %c0_6, %c0_7] : memref<1x4x8x8xf32, #tpu.memory_space<vmem>>, vector<1x4x8x8xf32>
    %6 = vector.shape_cast %5 : vector<1x4x8x8xf32> to vector<4x8x8xf32>
    %c0_8 = arith.constant 0 : index
    %c0_9 = arith.constant 0 : index
    %c0_10 = arith.constant 0 : index
    %c0_11 = arith.constant 0 : index
    %7 = vector.load %arg4[%c0_8, %c0_9, %c0_10, %c0_11] : memref<1x4x8x8xf32, #tpu.memory_space<vmem>>, vector<1x4x8x8xf32>
    %8 = vector.shape_cast %7 : vector<1x4x8x8xf32> to vector<4x8x8xf32>
    %c0_12 = arith.constant 0 : index
    %c0_13 = arith.constant 0 : index
    %c0_14 = arith.constant 0 : index
    %c0_15 = arith.constant 0 : index
    %9 = vector.load %arg5[%c0_12, %c0_13, %c0_14, %c0_15] : memref<1x1x1x8xf32, #tpu.memory_space<vmem>>, vector<1x1x1x8xf32>
    %10 = vector.shape_cast %9 : vector<1x1x1x8xf32> to vector<1x8xf32>
    %cst = arith.constant dense<0.000000e+00> : vector<4x8x8xf32>
    %11 = tpu.matmul %4, %6, %cst {dimension_numbers = #tpu.dot_dimension_numbers<[2], [2], [1], [1], [0, 0, 0, 1, 1, 1], [0], [0]>} : vector<4x8x8xf32>, vector<4x8x8xf32>, vector<4x8x8xf32> -> vector<4x8x8xf32>
    %cst_16 = arith.constant 0.353553385 : f32
    %12 = vector.broadcast %cst_16 : f32 to vector<4x8x8xf32>
    %13 = arith.mulf %11, %12 : vector<4x8x8xf32>
    %14 = vector.shape_cast %10 : vector<1x8xf32> to vector<1x1x8xf32>
    %15 = vector.broadcast %14 : vector<1x1x8xf32> to vector<4x8x8xf32>
    %16 = arith.addf %13, %15 : vector<4x8x8xf32>
    %c0_17 = arith.constant 0 : index
    %c0_18 = arith.constant 0 : index
    %c0_19 = arith.constant 0 : index
    %17 = vector.load %arg7[%c0_17, %c0_18, %c0_19] : memref<4x8x1xf32, #tpu.memory_space<vmem>>, vector<4x8x1xf32>
    %cst_20 = arith.constant dense<0xFF800000> : vector<4x8xf32>
    %18 = vector.multi_reduction <maximumf>, %16, %cst_20 [2] : vector<4x8x8xf32> to vector<4x8xf32>
    %19 = vector.shape_cast %18 : vector<4x8xf32> to vector<4x8x1xf32>
    %20 = arith.maximumf %17, %19 : vector<4x8x1xf32>
    %21 = arith.subf %17, %20 : vector<4x8x1xf32>
    %22 = math.exp %21 : vector<4x8x1xf32>
    %23 = vector.broadcast %20 : vector<4x8x1xf32> to vector<4x8x8xf32>
    %24 = arith.subf %16, %23 : vector<4x8x8xf32>
    %25 = math.exp %24 : vector<4x8x8xf32>
    %c0_21 = arith.constant 0 : index
    %c0_22 = arith.constant 0 : index
    %c0_23 = arith.constant 0 : index
    %26 = vector.load %arg8[%c0_21, %c0_22, %c0_23] : memref<4x8x1xf32, #tpu.memory_space<vmem>>, vector<4x8x1xf32>
    %27 = arith.mulf %22, %26 : vector<4x8x1xf32>
    %cst_24 = arith.constant dense<0.000000e+00> : vector<4x8xf32>
    %28 = vector.multi_reduction <add>, %25, %cst_24 [2] : vector<4x8x8xf32> to vector<4x8xf32>
    %29 = vector.shape_cast %28 : vector<4x8xf32> to vector<4x8x1xf32>
    %30 = arith.addf %27, %29 : vector<4x8x1xf32>
    %c0_25 = arith.constant 0 : index
    %c0_26 = arith.constant 0 : index
    %c0_27 = arith.constant 0 : index
    %31 = vector.load %arg8[%c0_25, %c0_26, %c0_27] : memref<4x8x1xf32, #tpu.memory_space<vmem>>, vector<4x8x1xf32>
    tpu.vector_store %arg8[%c0_25, %c0_26, %c0_27], %30 {strides = array<i32>} : memref<4x8x1xf32, #tpu.memory_space<vmem>>, vector<4x8x1xf32>,
    %c0_28 = arith.constant 0 : index
    %c0_29 = arith.constant 0 : index
    %c0_30 = arith.constant 0 : index
    %32 = vector.load %arg9[%c0_28, %c0_29, %c0_30] : memref<4x8x8xf32, #tpu.memory_space<vmem>>, vector<4x8x8xf32>
    %33 = vector.broadcast %22 : vector<4x8x1xf32> to vector<4x8x8xf32>
    %34 = arith.mulf %33, %32 : vector<4x8x8xf32>
    %cst_31 = arith.constant dense<0.000000e+00> : vector<4x8x8xf32>
    %35 = tpu.matmul %25, %8, %cst_31 {dimension_numbers = #tpu.dot_dimension_numbers<[2], [1], [1], [2], [0, 0, 0, 1, 1, 2], [0], [0]>} : vector<4x8x8xf32>, vector<4x8x8xf32>, vector<4x8x8xf32> -> vector<4x8x8xf32>
    %36 = arith.addf %34, %35 : vector<4x8x8xf32>
    %c0_32 = arith.constant 0 : index
    %c0_33 = arith.constant 0 : index
    %c0_34 = arith.constant 0 : index
    %37 = vector.load %arg9[%c0_32, %c0_33, %c0_34] : memref<4x8x8xf32, #tpu.memory_space<vmem>>, vector<4x8x8xf32>
    tpu.vector_store %arg9[%c0_32, %c0_33, %c0_34], %36 {strides = array<i32>} : memref<4x8x8xf32, #tpu.memory_space<vmem>>, vector<4x8x8xf32>,
    %c0_35 = arith.constant 0 : index
    %c0_36 = arith.constant 0 : index
    %c0_37 = arith.constant 0 : index
    %38 = vector.load %arg7[%c0_35, %c0_36, %c0_37] : memref<4x8x1xf32, #tpu.memory_space<vmem>>, vector<4x8x1xf32>
    tpu.vector_store %arg7[%c0_35, %c0_36, %c0_37], %20 {strides = array<i32>} : memref<4x8x1xf32, #tpu.memory_space<vmem>>, vector<4x8x1xf32>,
    %c0_i32_38 = arith.constant 0 : i32
    %39 = arith.cmpi eq, %arg1, %c0_i32_38 : i32
    %40 = arith.extui %39 : i1 to i32
    %c0_i32_39 = arith.constant 0 : i32
    %41 = arith.cmpi ne, %40, %c0_i32_39 : i32
    scf.if %41 {
      %c0_40 = arith.constant 0 : index
      %c0_41 = arith.constant 0 : index
      %c0_42 = arith.constant 0 : index
      %42 = vector.load %arg8[%c0_40, %c0_41, %c0_42] : memref<4x8x1xf32, #tpu.memory_space<vmem>>, vector<4x8x1xf32>
      %43 = tpu.reciprocal %42 {approx = true} : vector<4x8x1xf32> -> vector<4x8x1xf32>
      %c0_43 = arith.constant 0 : index
      %c0_44 = arith.constant 0 : index
      %c0_45 = arith.constant 0 : index
      %44 = vector.load %arg9[%c0_43, %c0_44, %c0_45] : memref<4x8x8xf32, #tpu.memory_space<vmem>>, vector<4x8x8xf32>
      %45 = vector.broadcast %43 : vector<4x8x1xf32> to vector<4x8x8xf32>
      %46 = arith.mulf %44, %45 : vector<4x8x8xf32>
      %c0_46 = arith.constant 0 : index
      %c0_47 = arith.constant 0 : index
      %c0_48 = arith.constant 0 : index
      %c0_49 = arith.constant 0 : index
      %47 = vector.load %arg6[%c0_46, %c0_47, %c0_48, %c0_49] : memref<1x4x8x8xf32, #tpu.memory_space<vmem>>, vector<1x4x8x8xf32>
      %48 = vector.shape_cast %47 : vector<1x4x8x8xf32> to vector<4x8x8xf32>
      %49 = vector.shape_cast %46 : vector<4x8x8xf32> to vector<1x4x8x8xf32>
      tpu.vector_store %arg6[%c0_46, %c0_47, %c0_48, %c0_49], %49 {strides = array<i32>} : memref<1x4x8x8xf32, #tpu.memory_space<vmem>>, vector<1x4x8x8xf32>,
    } else {
    }
    return
  }
  func.func @transform_0(%arg0: i32, %arg1: i32) -> (i32, i32, i32, i32) {
    %c0_i32 = arith.constant 0 : i32
    %c0_i32_0 = arith.constant 0 : i32
    %c0_i32_1 = arith.constant 0 : i32
    %c0_i32_2 = arith.constant 0 : i32
    return %arg0, %c0_i32, %c0_i32_0, %c0_i32_1 : i32, i32, i32, i32
  }
  func.func @transform_1(%arg0: i32, %arg1: i32) -> (i32, i32, i32, i32) {
    %c0_i32 = arith.constant 0 : i32
    %c0_i32_0 = arith.constant 0 : i32
    %c0_i32_1 = arith.constant 0 : i32
    return %arg0, %c0_i32, %arg1, %c0_i32_0 : i32, i32, i32, i32
  }
  func.func @transform_2(%arg0: i32, %arg1: i32) -> (i32, i32, i32, i32) {
    %c0_i32 = arith.constant 0 : i32
    %c0_i32_0 = arith.constant 0 : i32
    %c0_i32_1 = arith.constant 0 : i32
    return %arg0, %c0_i32, %arg1, %c0_i32_0 : i32, i32, i32, i32
  }
  func.func @transform_3(%arg0: i32, %arg1: i32) -> (i32, i32, i32, i32) {
    %c0_i32 = arith.constant 0 : i32
    %c0_i32_0 = arith.constant 0 : i32
    %c0_i32_1 = arith.constant 0 : i32
    return %arg0, %c0_i32, %c0_i32_0, %arg1 : i32, i32, i32, i32
  }
  func.func @transform_4(%arg0: i32, %arg1: i32) -> (i32, i32, i32, i32) {
    %c0_i32 = arith.constant 0 : i32
    %c0_i32_0 = arith.constant 0 : i32
    %c0_i32_1 = arith.constant 0 : i32
    %c0_i32_2 = arith.constant 0 : i32
    return %arg0, %c0_i32, %c0_i32_0, %c0_i32_1 : i32, i32, i32, i32
  }
}

module attributes {stable_mosaic.version = 11 : i64} {
  func.func @_linear_kernel(%arg0: i32, %arg1: i32, %arg2: i32, %arg3: memref<16x32xf32, #tpu.memory_space<vmem>>, %arg4: memref<32x64xf32, #tpu.memory_space<vmem>>, %arg5: memref<1x64xf32, #tpu.memory_space<vmem>>, %arg6: memref<16x64xf32, #tpu.memory_space<vmem>>, %arg7: memref<16x64xf32, #tpu.memory_space<vmem>>) attributes {dimension_semantics = [#tpu.dimension_semantics<parallel>, #tpu.dimension_semantics<parallel>, #tpu.dimension_semantics<arbitrary>], iteration_bounds = array<i64: 1, 1, 1>, scalar_prefetch = 0 : i64, scratch_operands = 1 : i64, tpu.core_type = #tpu.core_type<tc>, window_params = [{transform_indices = @transform_0, window_bounds = array<i64: 16, 32>}, {transform_indices = @transform_1, window_bounds = array<i64: 32, 64>}, {transform_indices = @transform_2, window_bounds = array<i64: 1, 64>}, {transform_indices = @transform_3, window_bounds = array<i64: 16, 64>}]} {
    %c0_i32 = arith.constant 0 : i32
    %0 = arith.cmpi eq, %arg2, %c0_i32 : i32
    %1 = arith.extui %0 : i1 to i32
    %c0_i32_0 = arith.constant 0 : i32
    %2 = arith.cmpi ne, %1, %c0_i32_0 : i32
    scf.if %2 {
      %cst_10 = arith.constant 0.000000e+00 : f32
      %12 = vector.broadcast %cst_10 : f32 to vector<16x64xf32>
      %c0_11 = arith.constant 0 : index
      %c0_12 = arith.constant 0 : index
      %13 = vector.load %arg7[%c0_11, %c0_12] : memref<16x64xf32, #tpu.memory_space<vmem>>, vector<16x64xf32>
      tpu.vector_store %arg7[%c0_11, %c0_12], %12 {strides = array<i32>} : memref<16x64xf32, #tpu.memory_space<vmem>>, vector<16x64xf32>,
    } else {
    }
    %c0 = arith.constant 0 : index
    %c0_1 = arith.constant 0 : index
    %3 = vector.load %arg7[%c0, %c0_1] : memref<16x64xf32, #tpu.memory_space<vmem>>, vector<16x64xf32>
    %c0_2 = arith.constant 0 : index
    %c0_3 = arith.constant 0 : index
    %4 = vector.load %arg3[%c0_2, %c0_3] : memref<16x32xf32, #tpu.memory_space<vmem>>, vector<16x32xf32>
    %c0_4 = arith.constant 0 : index
    %c0_5 = arith.constant 0 : index
    %5 = vector.load %arg4[%c0_4, %c0_5] : memref<32x64xf32, #tpu.memory_space<vmem>>, vector<32x64xf32>
    %cst = arith.constant dense<0.000000e+00> : vector<16x64xf32>
    %6 = tpu.matmul %4, %5, %cst {dimension_numbers = #tpu.dot_dimension_numbers<[1], [0], [0], [1], [0, 0, 1, 1], [], []>} : vector<16x32xf32>, vector<32x64xf32>, vector<16x64xf32> -> vector<16x64xf32>
    %7 = arith.addf %3, %6 : vector<16x64xf32>
    %c0_6 = arith.constant 0 : index
    %c0_7 = arith.constant 0 : index
    %8 = vector.load %arg7[%c0_6, %c0_7] : memref<16x64xf32, #tpu.memory_space<vmem>>, vector<16x64xf32>
    tpu.vector_store %arg7[%c0_6, %c0_7], %7 {strides = array<i32>} : memref<16x64xf32, #tpu.memory_space<vmem>>, vector<16x64xf32>,
    %c0_i32_8 = arith.constant 0 : i32
    %9 = arith.cmpi eq, %arg2, %c0_i32_8 : i32
    %10 = arith.extui %9 : i1 to i32
    %c0_i32_9 = arith.constant 0 : i32
    %11 = arith.cmpi ne, %10, %c0_i32_9 : i32
    scf.if %11 {
      %c0_10 = arith.constant 0 : index
      %c0_11 = arith.constant 0 : index
      %12 = vector.load %arg7[%c0_10, %c0_11] : memref<16x64xf32, #tpu.memory_space<vmem>>, vector<16x64xf32>
      %c0_12 = arith.constant 0 : index
      %c0_13 = arith.constant 0 : index
      %13 = vector.load %arg5[%c0_12, %c0_13] : memref<1x64xf32, #tpu.memory_space<vmem>>, vector<1x64xf32>
      %14 = vector.broadcast %13 : vector<1x64xf32> to vector<16x64xf32>
      %15 = arith.addf %12, %14 : vector<16x64xf32>
      %cst_14 = arith.constant 0.000000e+00 : f32
      %16 = vector.broadcast %cst_14 : f32 to vector<16x64xf32>
      %17 = arith.maximumf %15, %16 : vector<16x64xf32>
      %c0_15 = arith.constant 0 : index
      %c0_16 = arith.constant 0 : index
      %18 = vector.load %arg6[%c0_15, %c0_16] : memref<16x64xf32, #tpu.memory_space<vmem>>, vector<16x64xf32>
      tpu.vector_store %arg6[%c0_15, %c0_16], %17 {strides = array<i32>} : memref<16x64xf32, #tpu.memory_space<vmem>>, vector<16x64xf32>,
    } else {
    }
    return
  }
  func.func @transform_0(%arg0: i32, %arg1: i32, %arg2: i32) -> (i32, i32) {
    %c0_i32 = arith.constant 0 : i32
    return %arg0, %arg2 : i32, i32
  }
  func.func @transform_1(%arg0: i32, %arg1: i32, %arg2: i32) -> (i32, i32) {
    %c0_i32 = arith.constant 0 : i32
    return %arg2, %arg1 : i32, i32
  }
  func.func @transform_2(%arg0: i32, %arg1: i32, %arg2: i32) -> (i32, i32) {
    %c0_i32 = arith.constant 0 : i32
    %c0_i32_0 = arith.constant 0 : i32
    return %c0_i32, %arg1 : i32, i32
  }
  func.func @transform_3(%arg0: i32, %arg1: i32, %arg2: i32) -> (i32, i32) {
    %c0_i32 = arith.constant 0 : i32
    return %arg0, %arg1 : i32, i32
  }
}

module attributes {stable_mosaic.version = 11 : i64} {
  func.func @_linear_kernel(%arg0: i32, %arg1: i32, %arg2: i32, %arg3: memref<16x64xf32, #tpu.memory_space<vmem>>, %arg4: memref<64x32xf32, #tpu.memory_space<vmem>>, %arg5: memref<1x32xf32, #tpu.memory_space<vmem>>, %arg6: memref<16x32xf32, #tpu.memory_space<vmem>>, %arg7: memref<16x32xf32, #tpu.memory_space<vmem>>) attributes {dimension_semantics = [#tpu.dimension_semantics<parallel>, #tpu.dimension_semantics<parallel>, #tpu.dimension_semantics<arbitrary>], iteration_bounds = array<i64: 1, 1, 1>, scalar_prefetch = 0 : i64, scratch_operands = 1 : i64, tpu.core_type = #tpu.core_type<tc>, window_params = [{transform_indices = @transform_0, window_bounds = array<i64: 16, 64>}, {transform_indices = @transform_1, window_bounds = array<i64: 64, 32>}, {transform_indices = @transform_2, window_bounds = array<i64: 1, 32>}, {transform_indices = @transform_3, window_bounds = array<i64: 16, 32>}]} {
    %c0_i32 = arith.constant 0 : i32
    %0 = arith.cmpi eq, %arg2, %c0_i32 : i32
    %1 = arith.extui %0 : i1 to i32
    %c0_i32_0 = arith.constant 0 : i32
    %2 = arith.cmpi ne, %1, %c0_i32_0 : i32
    scf.if %2 {
      %cst_10 = arith.constant 0.000000e+00 : f32
      %12 = vector.broadcast %cst_10 : f32 to vector<16x32xf32>
      %c0_11 = arith.constant 0 : index
      %c0_12 = arith.constant 0 : index
      %13 = vector.load %arg7[%c0_11, %c0_12] : memref<16x32xf32, #tpu.memory_space<vmem>>, vector<16x32xf32>
      tpu.vector_store %arg7[%c0_11, %c0_12], %12 {strides = array<i32>} : memref<16x32xf32, #tpu.memory_space<vmem>>, vector<16x32xf32>,
    } else {
    }
    %c0 = arith.constant 0 : index
    %c0_1 = arith.constant 0 : index
    %3 = vector.load %arg7[%c0, %c0_1] : memref<16x32xf32, #tpu.memory_space<vmem>>, vector<16x32xf32>
    %c0_2 = arith.constant 0 : index
    %c0_3 = arith.constant 0 : index
    %4 = vector.load %arg3[%c0_2, %c0_3] : memref<16x64xf32, #tpu.memory_space<vmem>>, vector<16x64xf32>
    %c0_4 = arith.constant 0 : index
    %c0_5 = arith.constant 0 : index
    %5 = vector.load %arg4[%c0_4, %c0_5] : memref<64x32xf32, #tpu.memory_space<vmem>>, vector<64x32xf32>
    %cst = arith.constant dense<0.000000e+00> : vector<16x32xf32>
    %6 = tpu.matmul %4, %5, %cst {dimension_numbers = #tpu.dot_dimension_numbers<[1], [0], [0], [1], [0, 0, 1, 1], [], []>} : vector<16x64xf32>, vector<64x32xf32>, vector<16x32xf32> -> vector<16x32xf32>
    %7 = arith.addf %3, %6 : vector<16x32xf32>
    %c0_6 = arith.constant 0 : index
    %c0_7 = arith.constant 0 : index
    %8 = vector.load %arg7[%c0_6, %c0_7] : memref<16x32xf32, #tpu.memory_space<vmem>>, vector<16x32xf32>
    tpu.vector_store %arg7[%c0_6, %c0_7], %7 {strides = array<i32>} : memref<16x32xf32, #tpu.memory_space<vmem>>, vector<16x32xf32>,
    %c0_i32_8 = arith.constant 0 : i32
    %9 = arith.cmpi eq, %arg2, %c0_i32_8 : i32
    %10 = arith.extui %9 : i1 to i32
    %c0_i32_9 = arith.constant 0 : i32
    %11 = arith.cmpi ne, %10, %c0_i32_9 : i32
    scf.if %11 {
      %c0_10 = arith.constant 0 : index
      %c0_11 = arith.constant 0 : index
      %12 = vector.load %arg7[%c0_10, %c0_11] : memref<16x32xf32, #tpu.memory_space<vmem>>, vector<16x32xf32>
      %c0_12 = arith.constant 0 : index
      %c0_13 = arith.constant 0 : index
      %13 = vector.load %arg5[%c0_12, %c0_13] : memref<1x32xf32, #tpu.memory_space<vmem>>, vector<1x32xf32>
      %14 = vector.broadcast %13 : vector<1x32xf32> to vector<16x32xf32>
      %15 = arith.addf %12, %14 : vector<16x32xf32>
      %c0_14 = arith.constant 0 : index
      %c0_15 = arith.constant 0 : index
      %16 = vector.load %arg6[%c0_14, %c0_15] : memref<16x32xf32, #tpu.memory_space<vmem>>, vector<16x32xf32>
      tpu.vector_store %arg6[%c0_14, %c0_15], %15 {strides = array<i32>} : memref<16x32xf32, #tpu.memory_space<vmem>>, vector<16x32xf32>,
    } else {
    }
    return
  }
  func.func @transform_0(%arg0: i32, %arg1: i32, %arg2: i32) -> (i32, i32) {
    %c0_i32 = arith.constant 0 : i32
    return %arg0, %arg2 : i32, i32
  }
  func.func @transform_1(%arg0: i32, %arg1: i32, %arg2: i32) -> (i32, i32) {
    %c0_i32 = arith.constant 0 : i32
    return %arg2, %arg1 : i32, i32
  }
  func.func @transform_2(%arg0: i32, %arg1: i32, %arg2: i32) -> (i32, i32) {
    %c0_i32 = arith.constant 0 : i32
    %c0_i32_0 = arith.constant 0 : i32
    return %c0_i32, %arg1 : i32, i32
  }
  func.func @transform_3(%arg0: i32, %arg1: i32, %arg2: i32) -> (i32, i32) {
    %c0_i32 = arith.constant 0 : i32
    return %arg0, %arg1 : i32, i32
  }
}

module attributes {stable_mosaic.version = 11 : i64} {
  func.func @_linear_kernel(%arg0: i32, %arg1: i32, %arg2: i32, %arg3: memref<16x32xf32, #tpu.memory_space<vmem>>, %arg4: memref<32x64xf32, #tpu.memory_space<vmem>>, %arg5: memref<1x64xf32, #tpu.memory_space<vmem>>, %arg6: memref<16x64xf32, #tpu.memory_space<vmem>>, %arg7: memref<16x64xf32, #tpu.memory_space<vmem>>) attributes {dimension_semantics = [#tpu.dimension_semantics<parallel>, #tpu.dimension_semantics<parallel>, #tpu.dimension_semantics<arbitrary>], iteration_bounds = array<i64: 1, 1, 1>, scalar_prefetch = 0 : i64, scratch_operands = 1 : i64, tpu.core_type = #tpu.core_type<tc>, window_params = [{transform_indices = @transform_0, window_bounds = array<i64: 16, 32>}, {transform_indices = @transform_1, window_bounds = array<i64: 32, 64>}, {transform_indices = @transform_2, window_bounds = array<i64: 1, 64>}, {transform_indices = @transform_3, window_bounds = array<i64: 16, 64>}]} {
    %c0_i32 = arith.constant 0 : i32
    %0 = arith.cmpi eq, %arg2, %c0_i32 : i32
    %1 = arith.extui %0 : i1 to i32
    %c0_i32_0 = arith.constant 0 : i32
    %2 = arith.cmpi ne, %1, %c0_i32_0 : i32
    scf.if %2 {
      %cst_10 = arith.constant 0.000000e+00 : f32
      %12 = vector.broadcast %cst_10 : f32 to vector<16x64xf32>
      %c0_11 = arith.constant 0 : index
      %c0_12 = arith.constant 0 : index
      %13 = vector.load %arg7[%c0_11, %c0_12] : memref<16x64xf32, #tpu.memory_space<vmem>>, vector<16x64xf32>
      tpu.vector_store %arg7[%c0_11, %c0_12], %12 {strides = array<i32>} : memref<16x64xf32, #tpu.memory_space<vmem>>, vector<16x64xf32>,
    } else {
    }
    %c0 = arith.constant 0 : index
    %c0_1 = arith.constant 0 : index
    %3 = vector.load %arg7[%c0, %c0_1] : memref<16x64xf32, #tpu.memory_space<vmem>>, vector<16x64xf32>
    %c0_2 = arith.constant 0 : index
    %c0_3 = arith.constant 0 : index
    %4 = vector.load %arg3[%c0_2, %c0_3] : memref<16x32xf32, #tpu.memory_space<vmem>>, vector<16x32xf32>
    %c0_4 = arith.constant 0 : index
    %c0_5 = arith.constant 0 : index
    %5 = vector.load %arg4[%c0_4, %c0_5] : memref<32x64xf32, #tpu.memory_space<vmem>>, vector<32x64xf32>
    %cst = arith.constant dense<0.000000e+00> : vector<16x64xf32>
    %6 = tpu.matmul %4, %5, %cst {dimension_numbers = #tpu.dot_dimension_numbers<[1], [0], [0], [1], [0, 0, 1, 1], [], []>} : vector<16x32xf32>, vector<32x64xf32>, vector<16x64xf32> -> vector<16x64xf32>
    %7 = arith.addf %3, %6 : vector<16x64xf32>
    %c0_6 = arith.constant 0 : index
    %c0_7 = arith.constant 0 : index
    %8 = vector.load %arg7[%c0_6, %c0_7] : memref<16x64xf32, #tpu.memory_space<vmem>>, vector<16x64xf32>
    tpu.vector_store %arg7[%c0_6, %c0_7], %7 {strides = array<i32>} : memref<16x64xf32, #tpu.memory_space<vmem>>, vector<16x64xf32>,
    %c0_i32_8 = arith.constant 0 : i32
    %9 = arith.cmpi eq, %arg2, %c0_i32_8 : i32
    %10 = arith.extui %9 : i1 to i32
    %c0_i32_9 = arith.constant 0 : i32
    %11 = arith.cmpi ne, %10, %c0_i32_9 : i32
    scf.if %11 {
      %c0_10 = arith.constant 0 : index
      %c0_11 = arith.constant 0 : index
      %12 = vector.load %arg7[%c0_10, %c0_11] : memref<16x64xf32, #tpu.memory_space<vmem>>, vector<16x64xf32>
      %c0_12 = arith.constant 0 : index
      %c0_13 = arith.constant 0 : index
      %13 = vector.load %arg5[%c0_12, %c0_13] : memref<1x64xf32, #tpu.memory_space<vmem>>, vector<1x64xf32>
      %14 = vector.broadcast %13 : vector<1x64xf32> to vector<16x64xf32>
      %15 = arith.addf %12, %14 : vector<16x64xf32>
      %c0_14 = arith.constant 0 : index
      %c0_15 = arith.constant 0 : index
      %16 = vector.load %arg6[%c0_14, %c0_15] : memref<16x64xf32, #tpu.memory_space<vmem>>, vector<16x64xf32>
      tpu.vector_store %arg6[%c0_14, %c0_15], %15 {strides = array<i32>} : memref<16x64xf32, #tpu.memory_space<vmem>>, vector<16x64xf32>,
    } else {
    }
    return
  }
  func.func @transform_0(%arg0: i32, %arg1: i32, %arg2: i32) -> (i32, i32) {
    %c0_i32 = arith.constant 0 : i32
    return %arg0, %arg2 : i32, i32
  }
  func.func @transform_1(%arg0: i32, %arg1: i32, %arg2: i32) -> (i32, i32) {
    %c0_i32 = arith.constant 0 : i32
    return %arg2, %arg1 : i32, i32
  }
  func.func @transform_2(%arg0: i32, %arg1: i32, %arg2: i32) -> (i32, i32) {
    %c0_i32 = arith.constant 0 : i32
    %c0_i32_0 = arith.constant 0 : i32
    return %c0_i32, %arg1 : i32, i32
  }
  func.func @transform_3(%arg0: i32, %arg1: i32, %arg2: i32) -> (i32, i32) {
    %c0_i32 = arith.constant 0 : i32
    return %arg0, %arg1 : i32, i32
  }
}

</mosaic_0001>

<llo_original>
// kernel: decoder_forward.26
$region0: #{decoder_forward.26}
  #allocation0 [shape = 'u32[]', space=smem, size = 0x4, offset = 0x4, fixed_abs, tag = 'smem constant byte address 0x4 - core index']
  #allocation1 [shape = 'u32[144,128]{1,0:T(1,128)}', space=vmem, size = 0x12000, scoped, tag = 'internal scratch']
  %s0 = inlined_call_operand.vmem [shape: f32[16,32], index: 0, kind: input, shape index: {}]
  %s1 = inlined_call_operand.vmem [shape: f32[1,32], index: 1, kind: input, shape index: {}]
  %s2 = inlined_call_operand.vmem [shape: f32[1,32], index: 2, kind: input, shape index: {}]
  %s3 = inlined_call_operand.vmem [shape: f32[16,32], index: 3, kind: output, shape index: {}]
  %s4 = sld [smem:[#allocation0]]
  $region22: #{decoder_forward.26} parent=0
    _
  %s6 = ssub.s32 1, %s4
  %s7 = scalar_select 0, %s6, %s4
  // Predicated region
  $region2: #{decoder_forward.26} parent=0 // pred_check
    _
  $region3: #{decoder_forward.26} parent=0 // pred_check_branch
    %9 = sbr.rel (0) target = $region5
  $region4: #{decoder_forward.26} parent=0 // pred_region
    _
  $region5: #{decoder_forward.26} parent=0 // pred_fallthru
    _
  // Predicated region
  $region6: #{decoder_forward.26} parent=0 // pred_check
    _
  $region7: #{decoder_forward.26} parent=0 // pred_check_branch
    %11 = sbr.rel (0) target = $region9
  $region8: #{decoder_forward.26} parent=0 // pred_region
    _
  $region9: #{decoder_forward.26} parent=0 // pred_fallthru
    _
  // Predicated region
  $region10: #{decoder_forward.26} parent=0 // pred_check
    _
  $region11: #{decoder_forward.26} parent=0 // pred_check_branch
    %13 = sbr.rel (0) target = $region13
  $region12: #{decoder_forward.26} parent=0 // pred_region
    _
  $region13: #{decoder_forward.26} parent=0 // pred_fallthru
    _
  %v14 = vld [vmem:[%s0] sm:$0xff]
  %v15 = vld [vmem:[%s0 + $0x8] sm:$0xff]
  %vm16 = vcmask 261120
  %v17 = vsel %vm16, %v14, 0.0
  %18 = vadd.xlane.f32.xlu0 %v17
  %v19 = vpop.xlane.xlu0 %18
  %v20 = vsel %vm16, %v15, 0.0
  %21 = vadd.xlane.f32.xlu0 %v20
  %v22 = vpop.xlane.xlu0 %21
  %v23 = vrcp.pop 32.0
  %v24 = vmul.f32 %v19, %v23
  %v25 = vmul.f32 %v22, %v23
  %v26 = vsub.f32 %v14, %v24
  %v27 = vsub.f32 %v15, %v25
  %v28 = vmul.f32 %v26, %v26
  %v29 = vmul.f32 %v27, %v27
  %v30 = vsel %vm16, %v28, 0.0
  %31 = vadd.xlane.f32.xlu0 %v30
  %v32 = vpop.xlane.xlu0 %31
  %v33 = vsel %vm16, %v29, 0.0
  %34 = vadd.xlane.f32.xlu0 %v33
  %v35 = vpop.xlane.xlu0 %34
  %v36 = vmul.f32 %v32, %v23
  %v37 = vmul.f32 %v35, %v23
  %v38 = vadd.f32 %v36, 1e-05
  %v39 = vadd.f32 %v37, 1e-05
  %v40 = vrsqrt.pop %v38
  %v41 = vrsqrt.pop %v39
  %v42 = vmul.f32 %v26, %v40
  %v43 = vmul.f32 %v27, %v41
  %v44 = vld [vmem:[%s1] sm:$0x1]
  %v46 = vlaneseq
  %v47 = vshrl.u32 %v46, 7
  %v48 = vsub.s32 0, %v47
  %v49 = vrot.slane %v44, %v48
  %v51 = vmul.f32 %v42, %v49
  %v52 = vmul.f32 %v43, %v49
  %v53 = vld [vmem:[%s2] sm:$0x1]
  %v55 = vlaneseq
  %v56 = vshrl.u32 %v55, 7
  %v57 = vsub.s32 0, %v56
  %v58 = vrot.slane %v53, %v57
  %v60 = vadd.f32 %v51, %v58
  %v61 = vadd.f32 %v52, %v58
  %62 = vst.msk [vmem:[%s3] sm:$0xff] %vm16, %v60
  %63 = vst.msk [vmem:[%s3 + $0x8] sm:$0xff] %vm16, %v61
  // Predicated region
  $region14: #{decoder_forward.26} parent=0 // pred_check
    _
  $region15: #{decoder_forward.26} parent=0 // pred_check_branch
    %65 = sbr.rel (0) target = $region17
  $region16: #{decoder_forward.26} parent=0 // pred_region
    _
  $region17: #{decoder_forward.26} parent=0 // pred_fallthru
    _
  // Predicated region
  $region18: #{decoder_forward.26} parent=0 // pred_check
    _
  $region19: #{decoder_forward.26} parent=0 // pred_check_branch
    %67 = sbr.rel (0) target = $region21
  $region20: #{decoder_forward.26} parent=0 // pred_region
    _
  $region21: #{decoder_forward.26} parent=0 // pred_fallthru
    _

// kernel: decoder_forward.27
$region0: #{decoder_forward.27}
  #allocation0 [shape = 'u32[]', space=smem, size = 0x4, offset = 0x4, fixed_abs, tag = 'smem constant byte address 0x4 - core index']
  #allocation1 [shape = 'u32[144,128]{1,0:T(1,128)}', space=vmem, size = 0x12000, scoped, tag = 'internal scratch']
  #allocation2 [shape = 'f32[16,96]{1,0:T(8,128)}', space=vmem, size = 0x2000, scoped, tag = 'scratch operand']
  %s0 = inlined_call_operand.vmem [shape: f32[16,32], index: 0, kind: input, shape index: {}]
  %s1 = inlined_call_operand.vmem [shape: f32[32,96], index: 1, kind: input, shape index: {}]
  %s2 = inlined_call_operand.vmem [shape: f32[1,96], index: 2, kind: input, shape index: {}]
  %s3 = inlined_call_operand.vmem [shape: f32[16,96], index: 3, kind: output, shape index: {}]
  %s4 = sld [smem:[#allocation0]]
  $region30: #{decoder_forward.27} parent=0
    _
  %s6 = ssub.s32 1, %s4
  %s7 = scalar_select 0, %s6, %s4
  // Predicated region
  $region2: #{decoder_forward.27} parent=0 // pred_check
    _
  $region3: #{decoder_forward.27} parent=0 // pred_check_branch
    %9 = sbr.rel (0) target = $region5
  $region4: #{decoder_forward.27} parent=0 // pred_region
    _
  $region5: #{decoder_forward.27} parent=0 // pred_fallthru
    _
  // Predicated region
  $region6: #{decoder_forward.27} parent=0 // pred_check
    _
  $region7: #{decoder_forward.27} parent=0 // pred_check_branch
    %11 = sbr.rel (0) target = $region9
  $region8: #{decoder_forward.27} parent=0 // pred_region
    _
  $region9: #{decoder_forward.27} parent=0 // pred_fallthru
    _
  // Predicated region
  $region10: #{decoder_forward.27} parent=0 // pred_check
    _
  $region11: #{decoder_forward.27} parent=0 // pred_check_branch
    %13 = sbr.rel (0) target = $region13
  $region12: #{decoder_forward.27} parent=0 // pred_region
    _
  $region13: #{decoder_forward.27} parent=0 // pred_fallthru
    _
  %p14 = scmp.eq.s32.totalorder 0, 0
  // Predicated region
  $region14: #{decoder_forward.27} parent=0 // pred_check
    %p15 = pneg %p14
  $region15: #{decoder_forward.27} parent=0 // pred_check_branch
    %17 = sbr.rel (%p15) target = $region17
  $region16: #{decoder_forward.27} parent=0 // pred_region
    %vm18 = vcmask 785408
    %19 = vst.msk [vmem:[#allocation2] sm:$0xff] %vm18, 0.0
    %20 = vst.msk [vmem:[#allocation2 + $0x8] sm:$0xff] %vm18, 0.0
  $region17: #{decoder_forward.27} parent=0 // pred_fallthru
    _
  %v21 = vld [vmem:[#allocation2] sm:$0xff]
  %v22 = vld [vmem:[#allocation2 + $0x8] sm:$0xff]
  %v23 = vld [vmem:[%s0] sm:$0xff]
  %v24 = vld [vmem:[%s0 + $0x8] sm:$0xff]
  %v25 = vld [vmem:[%s1] sm:$0xff]
  %v26 = vld [vmem:[%s1 + $0x8] sm:$0xff]
  %v27 = vld [vmem:[%s1 + $0x10] sm:$0xff]
  %v28 = vld [vmem:[%s1 + $0x18] sm:$0xff]
  %vm29 = vcmask 261120
  %v31 = vsel %vm29, %v23, 0
  %v34 = vsel %vm29, %v24, 0
  %36 = vmatprep.subr.mxu0 0.0
  %37 = vmatpush1.msra.mxu0 %v25
  %38 = vmatprep.subr.mxu0 0.0
  %39 = vmatpush1.msra.mxu0 %v26
  %40 = vmatprep.subr.mxu0 0.0
  %41 = vmatpush1.msra.mxu0 %v27
  %42 = vmatprep.subr.mxu0 0.0
  %43 = vmatpush1.msra.mxu0 %v28
  %44 = vmatprep.subr.mxu0 0.0
  %45 = vmatpush1.msra.mxu0 0.0
  %46 = vmatprep.subr.mxu0 0.0
  %47 = vmatpush1.msra.mxu0 0.0
  %48 = vmatprep.subr.mxu0 0.0
  %49 = vmatpush1.msra.mxu0 0.0
  %50 = vmatprep.subr.mxu0 0.0
  %51 = vmatpush1.msra.mxu0 0.0
  %52 = vmatprep.subr.mxu0 0.0
  %53 = vmatpush1.msra.mxu0 0.0
  %54 = vmatprep.subr.mxu0 0.0
  %55 = vmatpush1.msra.mxu0 0.0
  %56 = vmatprep.subr.mxu0 0.0
  %57 = vmatpush1.msra.mxu0 0.0
  %58 = vmatprep.subr.mxu0 0.0
  %59 = vmatpush1.msra.mxu0 0.0
  %60 = vmatprep.subr.mxu0 0.0
  %61 = vmatpush1.msra.mxu0 0.0
  %62 = vmatprep.subr.mxu0 0.0
  %63 = vmatpush1.msra.mxu0 0.0
  %64 = vmatprep.subr.mxu0 0.0
  %65 = vmatpush1.msra.mxu0 0.0
  %66 = vmatprep.subr.mxu0 0.0
  %67 = vmatpush1.msra.mxu0 0.0
  %68 = vmatprep.subr.mxu0 0.0
  %69 = vmatpush1.msra.mxu0 0.0
  %70 = vmatprep.subr.mxu0 0.0
  %71 = vmatpush1.msra.mxu0 0.0
  %72 = vmatprep.subr.mxu0 0.0
  %73 = vmatpush1.msra.mxu0 0.0
  %74 = vmatprep.subr.mxu0 0.0
  %75 = vmatpush1.msra.mxu0 0.0
  %76 = vmatprep.subr.mxu0 0.0
  %77 = vmatpush1.msra.mxu0 0.0
  %78 = vmatprep.subr.mxu0 0.0
  %79 = vmatpush1.msra.mxu0 0.0
  %80 = vmatprep.subr.mxu0 0.0
  %81 = vmatpush1.msra.mxu0 0.0
  %82 = vmatprep.subr.mxu0 0.0
  %83 = vmatpush1.msra.mxu0 0.0
  %84 = vmatprep.subr.mxu0 0.0
  %85 = vmatpush1.msra.mxu0 0.0
  %86 = vmatprep.subr.mxu0 0.0
  %87 = vmatpush1.msra.mxu0 0.0
  %88 = vmatprep.subr.mxu0 0.0
  %89 = vmatpush1.msra.mxu0 0.0
  %90 = vmatprep.subr.mxu0 0.0
  %91 = vmatpush1.msra.mxu0 0.0
  %92 = vmatprep.subr.mxu0 0.0
  %93 = vmatpush1.msra.mxu0 0.0
  %94 = vmatprep.subr.mxu0 0.0
  %95 = vmatpush1.msra.mxu0 0.0
  %96 = vmatprep.subr.mxu0 0.0
  %97 = vmatpush1.msra.mxu0 0.0
  %98 = vmatprep.subr.mxu0 0.0
  %99 = vmatpush1.msra.mxu0 0.0
  %100 = vmatprep.mubr.f32.mxu0 0.0
  %101 = vmatmul.mubr.f32.gmra.mrb[0].mxu0 %v31
  %v102 = vpop.f32.mrb[0].mxu0
  %v103 = vadd.f32 0.0, %v102
  %v104 = vpop.f32.mrb[0].mxu0
  %105 = vmatprep.mubr.f32.mxu0 0.0
  %106 = vmatmul.mubr.f32.gmra.mrb[0].mxu0 %v34
  %v107 = vpop.f32.mrb[0].mxu0
  %v108 = vadd.f32 0.0, %v107
  %v109 = vpop.f32.mrb[0].mxu0
  %110 = vdwg.mxu0
  %v111 = vadd.f32 %v21, %v103
  %v112 = vadd.f32 %v22, %v108
  %vm113 = vcmask 785408
  %114 = vst.msk [vmem:[#allocation2] sm:$0xff] %vm113, %v111
  %115 = vst.msk [vmem:[#allocation2 + $0x8] sm:$0xff] %vm113, %v112
  // Predicated region
  $region18: #{decoder_forward.27} parent=0 // pred_check
    %p116 = pneg %p14
  $region19: #{decoder_forward.27} parent=0 // pred_check_branch
    %118 = sbr.rel (%p116) target = $region21
  $region20: #{decoder_forward.27} parent=0 // pred_region
    %v119 = vld [vmem:[#allocation2] sm:$0xff]
    %v120 = vld [vmem:[#allocation2 + $0x8] sm:$0xff]
    %v121 = vld [vmem:[%s2] sm:$0x1]
    %v123 = vlaneseq
    %v124 = vshrl.u32 %v123, 7
    %v125 = vsub.s32 0, %v124
    %v126 = vrot.slane %v121, %v125
    %v128 = vadd.f32 %v119, %v126
    %v129 = vadd.f32 %v120, %v126
    %130 = vst.msk [vmem:[%s3] sm:$0xff] %vm113, %v128
    %131 = vst.msk [vmem:[%s3 + $0x8] sm:$0xff] %vm113, %v129
  $region21: #{decoder_forward.27} parent=0 // pred_fallthru
    _
  // Predicated region
  $region22: #{decoder_forward.27} parent=0 // pred_check
    _
  $region23: #{decoder_forward.27} parent=0 // pred_check_branch
    %133 = sbr.rel (0) target = $region25
  $region24: #{decoder_forward.27} parent=0 // pred_region
    _
  $region25: #{decoder_forward.27} parent=0 // pred_fallthru
    _
  // Predicated region
  $region26: #{decoder_forward.27} parent=0 // pred_check
    _
  $region27: #{decoder_forward.27} parent=0 // pred_check_branch
    %135 = sbr.rel (0) target = $region29
  $region28: #{decoder_forward.27} parent=0 // pred_region
    _
  $region29: #{decoder_forward.27} parent=0 // pred_fallthru
    _

// kernel: decoder_forward.29
$region0: #{decoder_forward.29}
  #allocation0 [shape = 'u32[]', space=smem, size = 0x4, offset = 0x4, fixed_abs, tag = 'smem constant byte address 0x4 - core index']
  #allocation1 [shape = 'u32[144,128]{1,0:T(1,128)}', space=vmem, size = 0x12000, scoped, tag = 'internal scratch']
  #allocation2 [shape = 'f32[16,32]{1,0:T(8,128)}', space=vmem, size = 0x2000, scoped, tag = 'scratch operand']
  %s0 = inlined_call_operand.vmem [shape: f32[16,32], index: 0, kind: input, shape index: {}]
  %s1 = inlined_call_operand.vmem [shape: f32[32,32], index: 1, kind: input, shape index: {}]
  %s2 = inlined_call_operand.vmem [shape: f32[1,32], index: 2, kind: input, shape index: {}]
  %s3 = inlined_call_operand.vmem [shape: f32[16,32], index: 3, kind: output, shape index: {}]
  %s4 = sld [smem:[#allocation0]]
  $region30: #{decoder_forward.29} parent=0
    _
  %s6 = ssub.s32 1, %s4
  %s7 = scalar_select 0, %s6, %s4
  // Predicated region
  $region2: #{decoder_forward.29} parent=0 // pred_check
    _
  $region3: #{decoder_forward.29} parent=0 // pred_check_branch
    %9 = sbr.rel (0) target = $region5
  $region4: #{decoder_forward.29} parent=0 // pred_region
    _
  $region5: #{decoder_forward.29} parent=0 // pred_fallthru
    _
  // Predicated region
  $region6: #{decoder_forward.29} parent=0 // pred_check
    _
  $region7: #{decoder_forward.29} parent=0 // pred_check_branch
    %11 = sbr.rel (0) target = $region9
  $region8: #{decoder_forward.29} parent=0 // pred_region
    _
  $region9: #{decoder_forward.29} parent=0 // pred_fallthru
    _
  // Predicated region
  $region10: #{decoder_forward.29} parent=0 // pred_check
    _
  $region11: #{decoder_forward.29} parent=0 // pred_check_branch
    %13 = sbr.rel (0) target = $region13
  $region12: #{decoder_forward.29} parent=0 // pred_region
    _
  $region13: #{decoder_forward.29} parent=0 // pred_fallthru
    _
  %p14 = scmp.eq.s32.totalorder 0, 0
  // Predicated region
  $region14: #{decoder_forward.29} parent=0 // pred_check
    %p15 = pneg %p14
  $region15: #{decoder_forward.29} parent=0 // pred_check_branch
    %17 = sbr.rel (%p15) target = $region17
  $region16: #{decoder_forward.29} parent=0 // pred_region
    %vm18 = vcmask 261120
    %19 = vst.msk [vmem:[#allocation2] sm:$0xff] %vm18, 0.0
    %20 = vst.msk [vmem:[#allocation2 + $0x8] sm:$0xff] %vm18, 0.0
  $region17: #{decoder_forward.29} parent=0 // pred_fallthru
    _
  %v21 = vld [vmem:[#allocation2] sm:$0xff]
  %v22 = vld [vmem:[#allocation2 + $0x8] sm:$0xff]
  %v23 = vld [vmem:[%s0] sm:$0xff]
  %v24 = vld [vmem:[%s0 + $0x8] sm:$0xff]
  %v25 = vld [vmem:[%s1] sm:$0xff]
  %v26 = vld [vmem:[%s1 + $0x8] sm:$0xff]
  %v27 = vld [vmem:[%s1 + $0x10] sm:$0xff]
  %v28 = vld [vmem:[%s1 + $0x18] sm:$0xff]
  %vm29 = vcmask 261120
  %v31 = vsel %vm29, %v23, 0
  %v34 = vsel %vm29, %v24, 0
  %36 = vmatprep.subr.mxu0 0.0
  %37 = vmatpush1.msra.mxu0 %v25
  %38 = vmatprep.subr.mxu0 0.0
  %39 = vmatpush1.msra.mxu0 %v26
  %40 = vmatprep.subr.mxu0 0.0
  %41 = vmatpush1.msra.mxu0 %v27
  %42 = vmatprep.subr.mxu0 0.0
  %43 = vmatpush1.msra.mxu0 %v28
  %44 = vmatprep.subr.mxu0 0.0
  %45 = vmatpush1.msra.mxu0 0.0
  %46 = vmatprep.subr.mxu0 0.0
  %47 = vmatpush1.msra.mxu0 0.0
  %48 = vmatprep.subr.mxu0 0.0
  %49 = vmatpush1.msra.mxu0 0.0
  %50 = vmatprep.subr.mxu0 0.0
  %51 = vmatpush1.msra.mxu0 0.0
  %52 = vmatprep.subr.mxu0 0.0
  %53 = vmatpush1.msra.mxu0 0.0
  %54 = vmatprep.subr.mxu0 0.0
  %55 = vmatpush1.msra.mxu0 0.0
  %56 = vmatprep.subr.mxu0 0.0
  %57 = vmatpush1.msra.mxu0 0.0
  %58 = vmatprep.subr.mxu0 0.0
  %59 = vmatpush1.msra.mxu0 0.0
  %60 = vmatprep.subr.mxu0 0.0
  %61 = vmatpush1.msra.mxu0 0.0
  %62 = vmatprep.subr.mxu0 0.0
  %63 = vmatpush1.msra.mxu0 0.0
  %64 = vmatprep.subr.mxu0 0.0
  %65 = vmatpush1.msra.mxu0 0.0
  %66 = vmatprep.subr.mxu0 0.0
  %67 = vmatpush1.msra.mxu0 0.0
  %68 = vmatprep.subr.mxu0 0.0
  %69 = vmatpush1.msra.mxu0 0.0
  %70 = vmatprep.subr.mxu0 0.0
  %71 = vmatpush1.msra.mxu0 0.0
  %72 = vmatprep.subr.mxu0 0.0
  %73 = vmatpush1.msra.mxu0 0.0
  %74 = vmatprep.subr.mxu0 0.0
  %75 = vmatpush1.msra.mxu0 0.0
  %76 = vmatprep.subr.mxu0 0.0
  %77 = vmatpush1.msra.mxu0 0.0
  %78 = vmatprep.subr.mxu0 0.0
  %79 = vmatpush1.msra.mxu0 0.0
  %80 = vmatprep.subr.mxu0 0.0
  %81 = vmatpush1.msra.mxu0 0.0
  %82 = vmatprep.subr.mxu0 0.0
  %83 = vmatpush1.msra.mxu0 0.0
  %84 = vmatprep.subr.mxu0 0.0
  %85 = vmatpush1.msra.mxu0 0.0
  %86 = vmatprep.subr.mxu0 0.0
  %87 = vmatpush1.msra.mxu0 0.0
  %88 = vmatprep.subr.mxu0 0.0
  %89 = vmatpush1.msra.mxu0 0.0
  %90 = vmatprep.subr.mxu0 0.0
  %91 = vmatpush1.msra.mxu0 0.0
  %92 = vmatprep.subr.mxu0 0.0
  %93 = vmatpush1.msra.mxu0 0.0
  %94 = vmatprep.subr.mxu0 0.0
  %95 = vmatpush1.msra.mxu0 0.0
  %96 = vmatprep.subr.mxu0 0.0
  %97 = vmatpush1.msra.mxu0 0.0
  %98 = vmatprep.subr.mxu0 0.0
  %99 = vmatpush1.msra.mxu0 0.0
  %100 = vmatprep.mubr.f32.mxu0 0.0
  %101 = vmatmul.mubr.f32.gmra.mrb[0].mxu0 %v31
  %v102 = vpop.f32.mrb[0].mxu0
  %v103 = vadd.f32 0.0, %v102
  %v104 = vpop.f32.mrb[0].mxu0
  %105 = vmatprep.mubr.f32.mxu0 0.0
  %106 = vmatmul.mubr.f32.gmra.mrb[0].mxu0 %v34
  %v107 = vpop.f32.mrb[0].mxu0
  %v108 = vadd.f32 0.0, %v107
  %v109 = vpop.f32.mrb[0].mxu0
  %110 = vdwg.mxu0
  %v111 = vadd.f32 %v21, %v103
  %v112 = vadd.f32 %v22, %v108
  %113 = vst.msk [vmem:[#allocation2] sm:$0xff] %vm29, %v111
  %114 = vst.msk [vmem:[#allocation2 + $0x8] sm:$0xff] %vm29, %v112
  // Predicated region
  $region18: #{decoder_forward.29} parent=0 // pred_check
    %p115 = pneg %p14
  $region19: #{decoder_forward.29} parent=0 // pred_check_branch
    %117 = sbr.rel (%p115) target = $region21
  $region20: #{decoder_forward.29} parent=0 // pred_region
    %v118 = vld [vmem:[#allocation2] sm:$0xff]
    %v119 = vld [vmem:[#allocation2 + $0x8] sm:$0xff]
    %v120 = vld [vmem:[%s2] sm:$0x1]
    %v122 = vlaneseq
    %v123 = vshrl.u32 %v122, 7
    %v124 = vsub.s32 0, %v123
    %v125 = vrot.slane %v120, %v124
    %v127 = vadd.f32 %v118, %v125
    %v128 = vadd.f32 %v119, %v125
    %129 = vst.msk [vmem:[%s3] sm:$0xff] %vm29, %v127
    %130 = vst.msk [vmem:[%s3 + $0x8] sm:$0xff] %vm29, %v128
  $region21: #{decoder_forward.29} parent=0 // pred_fallthru
    _
  // Predicated region
  $region22: #{decoder_forward.29} parent=0 // pred_check
    _
  $region23: #{decoder_forward.29} parent=0 // pred_check_branch
    %132 = sbr.rel (0) target = $region25
  $region24: #{decoder_forward.29} parent=0 // pred_region
    _
  $region25: #{decoder_forward.29} parent=0 // pred_fallthru
    _
  // Predicated region
  $region26: #{decoder_forward.29} parent=0 // pred_check
    _
  $region27: #{decoder_forward.29} parent=0 // pred_check_branch
    %134 = sbr.rel (0) target = $region29
  $region28: #{decoder_forward.29} parent=0 // pred_region
    _
  $region29: #{decoder_forward.29} parent=0 // pred_fallthru
    _

// kernel: decoder_forward.28
$region0: #{decoder_forward.28}
  #allocation0 [shape = 'u32[]', space=smem, size = 0x4, offset = 0x4, fixed_abs, tag = 'smem constant byte address 0x4 - core index']
  #allocation1 [shape = 'u32[144,128]{1,0:T(1,128)}', space=vmem, size = 0x12000, scoped, tag = 'internal scratch']
  #allocation2 [shape = 'f32[4,8,1]{2,1,0:T(8,128)}', space=vmem, size = 0x4000, scoped, tag = 'scratch operand']
  #allocation3 [shape = 'f32[4,8,1]{2,1,0:T(8,128)}', space=vmem, size = 0x4000, scoped, tag = 'scratch operand']
  #allocation4 [shape = 'f32[4,8,8]{2,1,0:T(8,128)}', space=vmem, size = 0x4000, scoped, tag = 'scratch operand']
  %s0 = inlined_call_operand.vmem [shape: f32[2,4,8,8], index: 0, kind: input, shape index: {}]
  %s1 = inlined_call_operand.vmem [shape: f32[2,4,8,8], index: 1, kind: input, shape index: {}]
  %s2 = inlined_call_operand.vmem [shape: f32[2,4,8,8], index: 2, kind: input, shape index: {}]
  %s3 = inlined_call_operand.vmem [shape: f32[2,1,8,8], index: 3, kind: input, shape index: {}]
  %s4 = inlined_call_operand.vmem [shape: f32[2,4,8,8], index: 4, kind: output, shape index: {}]
  %s5 = sld [smem:[#allocation0]]
  $region57: #{decoder_forward.28} parent=0
    _
  %s7 = ssub.s32 1, %s5
  %s8 = scalar_select 0, %s7, %s5
  loop: start=0, step=1, limit=4
  $region2: #{decoder_forward.28} parent=0 // loop_pre_header
    _
  $region3: #{decoder_forward.28} parent=0 // loop_header
    %s10 = sphi 0, %s14
    %p11 = scmp.ge.s32.totalorder %s10, 4
    %s17 = sphi 0, %s29
    %s18 = sphi 0, %s25
    %s19 = sphi 0, %s17
    %s20 = sphi 0, %s18
    %s21 = sphi 0, %s19
    %s22 = sphi 0, %s20
    %s32 = sphi 0, %s34
    %s35 = sphi 0, %s32
    %s36 = sphi 0, %s35
    %s52 = sphi 0, %s36
    %s60 = sphi 0, %s62
    %s63 = sphi 0, %s60
    %s64 = sphi 0, %s63
    %s80 = sphi 0, %s64
    %s88 = sphi 0, %s90
    %s91 = sphi 0, %s88
    %s92 = sphi 0, %s91
    %s108 = sphi 0, %s92
    %s116 = sphi 0, %s118
    %s119 = sphi 0, %s116
    %s120 = sphi 0, %s119
    %s136 = sphi 0, %s120
    %s142 = sphi 0, %s144
    %s145 = sphi 0, %s142
    %s146 = sphi 0, %s145
    %s162 = sphi 0, %s146
  $region4: #{decoder_forward.28} parent=0 // loop_header_branch
    %13 = sbr.rel (%p11) target = $region8
  $region5: #{decoder_forward.28} parent=0 // loop_body
    %s15 = ssub.s32 %s10, 1
    %s16 = ssub.s32 %s10, 2
    %s23 = sadd.s32 1, %s18
    %p24 = scmp.ge.s32.totalorder %s23, 1
    %s25 = scalar_select %p24, 0, %s23
    %s26 = sadd.s32 1, %s17
    %s27 = scalar_select %p24, %s26, %s17
    %p28 = scmp.ge.s32.totalorder %s27, 2
    %s29 = scalar_select %p28, 0, %s27
    %s30 = ssub.s32 %s17, %s29
    %p31 = scmp.eq.s32.totalorder %s30, 0
    %s33 = sadd.s32 %s32, 1
    %s34 = scalar_select %p31, %s32, %s33
    %p37 = pneg %p31
    %p38 = scmp.eq.s32.totalorder %s10, 1
    %p39 = por %p37, %p38
    %p40 = scmp.ne.s32.totalorder %s32, %s35
    %p41 = scmp.eq.s32.totalorder %s10, 0
    %p42 = por %p40, %p41
    %p43 = scmp.ne.s32.totalorder %s32, %s35
    %p44 = scmp.eq.s32.totalorder %s15, 1
    %p45 = por %p43, %p44
    %p46 = scmp.ne.s32.totalorder %s35, %s36
    %p47 = scmp.eq.s32.totalorder %s15, 0
    %p48 = por %p46, %p47
    %p49 = scmp.ne.s32.totalorder %s35, %s36
    %p50 = scmp.eq.s32.totalorder %s16, 1
    %p51 = por %p49, %p50
    %p53 = scmp.ne.s32.totalorder %s36, %s52
    %p54 = scmp.eq.s32.totalorder %s16, 0
    %p55 = por %p53, %p54
    %s56 = ssub.s32 %s17, %s29
    %s57 = ssub.s32 %s18, %s25
    %s58 = sor.u32 %s56, %s57
    %p59 = scmp.eq.s32.totalorder %s58, 0
    %s61 = sadd.s32 %s60, 1
    %s62 = scalar_select %p59, %s60, %s61
    %p65 = pneg %p59
    %p66 = scmp.eq.s32.totalorder %s10, 1
    %p67 = por %p65, %p66
    %p68 = scmp.ne.s32.totalorder %s60, %s63
    %p69 = scmp.eq.s32.totalorder %s10, 0
    %p70 = por %p68, %p69
    %p71 = scmp.ne.s32.totalorder %s60, %s63
    %p72 = scmp.eq.s32.totalorder %s15, 1
    %p73 = por %p71, %p72
    %p74 = scmp.ne.s32.totalorder %s63, %s64
    %p75 = scmp.eq.s32.totalorder %s15, 0
    %p76 = por %p74, %p75
    %p77 = scmp.ne.s32.totalorder %s63, %s64
    %p78 = scmp.eq.s32.totalorder %s16, 1
    %p79 = por %p77, %p78
    %p81 = scmp.ne.s32.totalorder %s64, %s80
    %p82 = scmp.eq.s32.totalorder %s16, 0
    %p83 = por %p81, %p82
    %s84 = ssub.s32 %s17, %s29
    %s85 = ssub.s32 %s18, %s25
    %s86 = sor.u32 %s84, %s85
    %p87 = scmp.eq.s32.totalorder %s86, 0
    %s89 = sadd.s32 %s88, 1
    %s90 = scalar_select %p87, %s88, %s89
    %p93 = pneg %p87
    %p94 = scmp.eq.s32.totalorder %s10, 1
    %p95 = por %p93, %p94
    %p96 = scmp.ne.s32.totalorder %s88, %s91
    %p97 = scmp.eq.s32.totalorder %s10, 0
    %p98 = por %p96, %p97
    %p99 = scmp.ne.s32.totalorder %s88, %s91
    %p100 = scmp.eq.s32.totalorder %s15, 1
    %p101 = por %p99, %p100
    %p102 = scmp.ne.s32.totalorder %s91, %s92
    %p103 = scmp.eq.s32.totalorder %s15, 0
    %p104 = por %p102, %p103
    %p105 = scmp.ne.s32.totalorder %s91, %s92
    %p106 = scmp.eq.s32.totalorder %s16, 1
    %p107 = por %p105, %p106
    %p109 = scmp.ne.s32.totalorder %s92, %s108
    %p110 = scmp.eq.s32.totalorder %s16, 0
    %p111 = por %p109, %p110
    %s112 = ssub.s32 %s17, %s29
    %s113 = ssub.s32 %s18, %s25
    %s114 = sor.u32 %s112, %s113
    %p115 = scmp.eq.s32.totalorder %s114, 0
    %s117 = sadd.s32 %s116, 1
    %s118 = scalar_select %p115, %s116, %s117
    %p121 = pneg %p115
    %p122 = scmp.eq.s32.totalorder %s10, 1
    %p123 = por %p121, %p122
    %p124 = scmp.ne.s32.totalorder %s116, %s119
    %p125 = scmp.eq.s32.totalorder %s10, 0
    %p126 = por %p124, %p125
    %p127 = scmp.ne.s32.totalorder %s116, %s119
    %p128 = scmp.eq.s32.totalorder %s15, 1
    %p129 = por %p127, %p128
    %p130 = scmp.ne.s32.totalorder %s119, %s120
    %p131 = scmp.eq.s32.totalorder %s15, 0
    %p132 = por %p130, %p131
    %p133 = scmp.ne.s32.totalorder %s119, %s120
    %p134 = scmp.eq.s32.totalorder %s16, 1
    %p135 = por %p133, %p134
    %p137 = scmp.ne.s32.totalorder %s120, %s136
    %p138 = scmp.eq.s32.totalorder %s16, 0
    %p139 = por %p137, %p138
    %s140 = ssub.s32 %s17, %s29
    %p141 = scmp.eq.s32.totalorder %s140, 0
    %s143 = sadd.s32 %s142, 1
    %s144 = scalar_select %p141, %s142, %s143
    %p147 = pneg %p141
    %p148 = scmp.eq.s32.totalorder %s10, 1
    %p149 = por %p147, %p148
    %p150 = scmp.ne.s32.totalorder %s142, %s145
    %p151 = scmp.eq.s32.totalorder %s10, 0
    %p152 = por %p150, %p151
    %p153 = scmp.ne.s32.totalorder %s142, %s145
    %p154 = scmp.eq.s32.totalorder %s15, 1
    %p155 = por %p153, %p154
    %p156 = scmp.ne.s32.totalorder %s145, %s146
    %p157 = scmp.eq.s32.totalorder %s15, 0
    %p158 = por %p156, %p157
    %p159 = scmp.ne.s32.totalorder %s145, %s146
    %p160 = scmp.eq.s32.totalorder %s16, 1
    %p161 = por %p159, %p160
    %p163 = scmp.ne.s32.totalorder %s146, %s162
    %p164 = scmp.eq.s32.totalorder %s16, 0
    %p165 = por %p163, %p164
    %p166 = scmp.le.s32.totalorder 1, %s10
    %p167 = scmp.lt.s32.totalorder %s10, 3
    %p168 = pnand %p166, %p167
    %p169 = pneg %p168
    // Predicated region
    $region9: #{decoder_forward.28} parent=5 // pred_check
      _
    $region10: #{decoder_forward.28} parent=5 // pred_check_branch
      %171 = sbr.rel (%p168) target = $region12
    $region11: #{decoder_forward.28} parent=5 // pred_region
      %s172 = ssub.s32 %s10, 1
    $region12: #{decoder_forward.28} parent=5 // pred_fallthru
      _
    %p173 = scmp.lt.s32.totalorder %s10, 2
    // Predicated region
    $region13: #{decoder_forward.28} parent=5 // pred_check
      %p174 = pneg %p173
    $region14: #{decoder_forward.28} parent=5 // pred_check_branch
      %176 = sbr.rel (%p174) target = $region16
    $region15: #{decoder_forward.28} parent=5 // pred_region
      // Predicated region
      $region17: #{decoder_forward.28} parent=15 // pred_check
        %p177 = pneg %p42
      $region18: #{decoder_forward.28} parent=15 // pred_check_branch
        %179 = sbr.rel (%p177) target = $region20
      $region19: #{decoder_forward.28} parent=15 // pred_region
        %p180 = scmp.lt.s32.totalorder %s17, 1
        %s181 = scalar_select %p180, %s17, 1
        %s182 = smul.addr %s181, 4
        %s183 = smul.addr %s182, 8
        %s184 = scalar_lea.vmem %s0, %s183
      $region20: #{decoder_forward.28} parent=15 // pred_fallthru
        _
      // Predicated region
      $region21: #{decoder_forward.28} parent=15 // pred_check
        %p185 = pneg %p70
      $region22: #{decoder_forward.28} parent=15 // pred_check_branch
        %187 = sbr.rel (%p185) target = $region24
      $region23: #{decoder_forward.28} parent=15 // pred_region
        %p188 = scmp.lt.s32.totalorder %s17, 1
        %s189 = scalar_select %p188, %s17, 1
        %p190 = scmp.lt.s32.totalorder %s18, 0
        %s191 = scalar_select %p190, %s18, 0
        %s192 = smul.addr %s189, 4
        %s193 = sadd.s32 %s191, %s192
        %s194 = smul.addr %s193, 8
        %s195 = scalar_lea.vmem %s1, %s194
      $region24: #{decoder_forward.28} parent=15 // pred_fallthru
        _
      // Predicated region
      $region25: #{decoder_forward.28} parent=15 // pred_check
        %p196 = pneg %p98
      $region26: #{decoder_forward.28} parent=15 // pred_check_branch
        %198 = sbr.rel (%p196) target = $region28
      $region27: #{decoder_forward.28} parent=15 // pred_region
        %p199 = scmp.lt.s32.totalorder %s17, 1
        %s200 = scalar_select %p199, %s17, 1
        %p201 = scmp.lt.s32.totalorder %s18, 0
        %s202 = scalar_select %p201, %s18, 0
        %s203 = smul.addr %s200, 4
        %s204 = sadd.s32 %s202, %s203
        %s205 = smul.addr %s204, 8
        %s206 = scalar_lea.vmem %s2, %s205
      $region28: #{decoder_forward.28} parent=15 // pred_fallthru
        _
      // Predicated region
      $region29: #{decoder_forward.28} parent=15 // pred_check
        %p207 = pneg %p126
      $region30: #{decoder_forward.28} parent=15 // pred_check_branch
        %209 = sbr.rel (%p207) target = $region32
      $region31: #{decoder_forward.28} parent=15 // pred_region
        %p210 = scmp.lt.s32.totalorder %s17, 1
        %s211 = scalar_select %p210, %s17, 1
        %p212 = scmp.lt.s32.totalorder %s18, 0
        %s213 = scalar_select %p212, %s18, 0
        %s214 = sadd.s32 %s213, %s211
        %s215 = smul.addr %s214, 8
        %s216 = scalar_lea.vmem %s3, %s215
      $region32: #{decoder_forward.28} parent=15 // pred_fallthru
        _
    $region16: #{decoder_forward.28} parent=5 // pred_fallthru
      _
    %p217 = scmp.le.s32.totalorder 1, %s10
    %p218 = scmp.lt.s32.totalorder %s10, 3
    %p219 = pnand %p217, %p218
    %p220 = pneg %p219
    // Predicated region
    $region33: #{decoder_forward.28} parent=5 // pred_check
      _
    $region34: #{decoder_forward.28} parent=5 // pred_check_branch
      %222 = sbr.rel (%p219) target = $region36
    $region35: #{decoder_forward.28} parent=5 // pred_region
      %s223 = ssub.s32 %s10, 1
      %p224 = scmp.lt.s32.totalorder %s19, 1
      %s225 = scalar_select %p224, %s19, 1
      %s226 = smul.addr %s225, 4
      %s227 = smul.addr %s226, 8
      %s228 = scalar_lea.vmem %s0, %s227
      %p229 = pneg %p48
      %p230 = pneg %p45
      %p231 = scmp.lt.s32.totalorder %s19, 1
      %s232 = scalar_select %p231, %s19, 1
      %p233 = scmp.lt.s32.totalorder %s20, 0
      %s234 = scalar_select %p233, %s20, 0
      %s235 = smul.addr %s232, 4
      %s236 = sadd.s32 %s234, %s235
      %s237 = smul.addr %s236, 8
      %s238 = scalar_lea.vmem %s1, %s237
      %p239 = pneg %p76
      %p240 = pneg %p73
      %p241 = scmp.lt.s32.totalorder %s19, 1
      %s242 = scalar_select %p241, %s19, 1
      %p243 = scmp.lt.s32.totalorder %s20, 0
      %s244 = scalar_select %p243, %s20, 0
      %s245 = smul.addr %s242, 4
      %s246 = sadd.s32 %s244, %s245
      %s247 = smul.addr %s246, 8
      %s248 = scalar_lea.vmem %s2, %s247
      %p249 = pneg %p104
      %p250 = pneg %p101
      %p251 = scmp.lt.s32.totalorder %s19, 1
      %s252 = scalar_select %p251, %s19, 1
      %p253 = scmp.lt.s32.totalorder %s20, 0
      %s254 = scalar_select %p253, %s20, 0
      %s255 = sadd.s32 %s254, %s252
      %s256 = smul.addr %s255, 8
      %s257 = scalar_lea.vmem %s3, %s256
      %p258 = pneg %p132
      %p259 = pneg %p129
      %p260 = pneg %p158
      %p261 = pneg %p155
      %p262 = scmp.lt.s32.totalorder %s19, 1
      %s263 = scalar_select %p262, %s19, 1
      %s264 = smul.addr %s263, 4
      %s265 = smul.addr %s264, 8
      %s266 = scalar_lea.vmem %s4, %s265
      %p267 = scmp.lt.s32.totalorder %s19, 1
      %s268 = scalar_select %p267, %s19, 1
      %s269 = smul.addr %s268, 4
      %s270 = smul.addr %s269, 8
      %s271 = scalar_lea.vmem %s0, %s270
      %p272 = scmp.lt.s32.totalorder %s19, 1
      %s273 = scalar_select %p272, %s19, 1
      %p274 = scmp.lt.s32.totalorder %s20, 0
      %s275 = scalar_select %p274, %s20, 0
      %s276 = smul.addr %s273, 4
      %s277 = sadd.s32 %s275, %s276
      %s278 = smul.addr %s277, 8
      %s279 = scalar_lea.vmem %s1, %s278
      %p280 = scmp.lt.s32.totalorder %s19, 1
      %s281 = scalar_select %p280, %s19, 1
      %p282 = scmp.lt.s32.totalorder %s20, 0
      %s283 = scalar_select %p282, %s20, 0
      %s284 = smul.addr %s281, 4
      %s285 = sadd.s32 %s283, %s284
      %s286 = smul.addr %s285, 8
      %s287 = scalar_lea.vmem %s2, %s286
      %p288 = scmp.lt.s32.totalorder %s19, 1
      %s289 = scalar_select %p288, %s19, 1
      %p290 = scmp.lt.s32.totalorder %s20, 0
      %s291 = scalar_select %p290, %s20, 0
      %s292 = sadd.s32 %s291, %s289
      %s293 = smul.addr %s292, 8
      %s294 = scalar_lea.vmem %s3, %s293
      %p295 = scmp.lt.s32.totalorder %s19, 1
      %s296 = scalar_select %p295, %s19, 1
      %s297 = smul.addr %s296, 4
      %s298 = smul.addr %s297, 8
      %s299 = scalar_lea.vmem %s4, %s298
      %p300 = scmp.eq.s32.totalorder %s20, 0
      // Predicated region
      $region37: #{decoder_forward.28} parent=35 // pred_check
        %p301 = pneg %p300
      $region38: #{decoder_forward.28} parent=35 // pred_check_branch
        %303 = sbr.rel (%p301) target = $region40
      $region39: #{decoder_forward.28} parent=35 // pred_region
        %vm304 = vcmask 7168
        %305 = vst.msk [vmem:[#allocation2] sm:$0xff] %vm304, -inf
        %306 = vst.msk [vmem:[#allocation2 + $0x8] sm:$0xff] %vm304, -inf
        %307 = vst.msk [vmem:[#allocation2 + $0x10] sm:$0xff] %vm304, -inf
        %308 = vst.msk [vmem:[#allocation2 + $0x18] sm:$0xff] %vm304, -inf
        %309 = vst.msk [vmem:[#allocation3] sm:$0xff] %vm304, 0.0
        %310 = vst.msk [vmem:[#allocation3 + $0x8] sm:$0xff] %vm304, 0.0
        %311 = vst.msk [vmem:[#allocation3 + $0x10] sm:$0xff] %vm304, 0.0
        %312 = vst.msk [vmem:[#allocation3 + $0x18] sm:$0xff] %vm304, 0.0
        %vm313 = vcmask 64512
        %314 = vst.msk [vmem:[#allocation4] sm:$0xff] %vm313, 0.0
        %315 = vst.msk [vmem:[#allocation4 + $0x8] sm:$0xff] %vm313, 0.0
        %316 = vst.msk [vmem:[#allocation4 + $0x10] sm:$0xff] %vm313, 0.0
        %317 = vst.msk [vmem:[#allocation4 + $0x18] sm:$0xff] %vm313, 0.0
      $region40: #{decoder_forward.28} parent=35 // pred_fallthru
        _
      %v318 = vld [vmem:[%s271] sm:$0xff]
      %v319 = vld [vmem:[%s271 + $0x8] sm:$0xff]
      %v320 = vld [vmem:[%s271 + $0x10] sm:$0xff]
      %v321 = vld [vmem:[%s271 + $0x18] sm:$0xff]
      %v322 = vld [vmem:[%s279] sm:$0xff]
      %v323 = vld [vmem:[%s279 + $0x8] sm:$0xff]
      %v324 = vld [vmem:[%s279 + $0x10] sm:$0xff]
      %v325 = vld [vmem:[%s279 + $0x18] sm:$0xff]
      %v326 = vld [vmem:[%s287] sm:$0xff]
      %v327 = vld [vmem:[%s287 + $0x8] sm:$0xff]
      %v328 = vld [vmem:[%s287 + $0x10] sm:$0xff]
      %v329 = vld [vmem:[%s287 + $0x18] sm:$0xff]
      %v330 = vld [vmem:[%s294] sm:$0xff]
      %vm331 = vcmask 64512
      %v333 = vsel %vm331, %v318, 0
      %v336 = vsel %vm331, %v322, 0
      %338 = vmatprep.subr.mxu0 0.0
      %339 = vmatpush1.xpose.msra.mxu0 %v336
      %340 = vmatprep.subr.mxu0 0.0
      %341 = vmatpush1.xpose.msra.mxu0 0.0
      %342 = vmatprep.subr.mxu0 0.0
      %343 = vmatpush1.xpose.msra.mxu0 0.0
      %344 = vmatprep.subr.mxu0 0.0
      %345 = vmatpush1.xpose.msra.mxu0 0.0
      %346 = vmatprep.subr.mxu0 0.0
      %347 = vmatpush1.xpose.msra.mxu0 0.0
      %348 = vmatprep.subr.mxu0 0.0
      %349 = vmatpush1.xpose.msra.mxu0 0.0
      %350 = vmatprep.subr.mxu0 0.0
      %351 = vmatpush1.xpose.msra.mxu0 0.0
      %352 = vmatprep.subr.mxu0 0.0
      %353 = vmatpush1.xpose.msra.mxu0 0.0
      %354 = vmatprep.subr.mxu0 0.0
      %355 = vmatpush1.xpose.msra.mxu0 0.0
      %356 = vmatprep.subr.mxu0 0.0
      %357 = vmatpush1.xpose.msra.mxu0 0.0
      %358 = vmatprep.subr.mxu0 0.0
      %359 = vmatpush1.xpose.msra.mxu0 0.0
      %360 = vmatprep.subr.mxu0 0.0
      %361 = vmatpush1.xpose.msra.mxu0 0.0
      %362 = vmatprep.subr.mxu0 0.0
      %363 = vmatpush1.xpose.msra.mxu0 0.0
      %364 = vmatprep.subr.mxu0 0.0
      %365 = vmatpush1.xpose.msra.mxu0 0.0
      %366 = vmatprep.subr.mxu0 0.0
      %367 = vmatpush1.xpose.msra.mxu0 0.0
      %368 = vmatprep.subr.mxu0 0.0
      %369 = vmatpush1.xpose.msra.mxu0 0.0
      %370 = vmatprep.subr.mxu0 0.0
      %371 = vmatpush1.xpose.msra.mxu0 0.0
      %372 = vmatprep.subr.mxu0 0.0
      %373 = vmatpush1.xpose.msra.mxu0 0.0
      %374 = vmatprep.subr.mxu0 0.0
      %375 = vmatpush1.xpose.msra.mxu0 0.0
      %376 = vmatprep.subr.mxu0 0.0
      %377 = vmatpush1.xpose.msra.mxu0 0.0
      %378 = vmatprep.subr.mxu0 0.0
      %379 = vmatpush1.xpose.msra.mxu0 0.0
      %380 = vmatprep.subr.mxu0 0.0
      %381 = vmatpush1.xpose.msra.mxu0 0.0
      %382 = vmatprep.subr.mxu0 0.0
      %383 = vmatpush1.xpose.msra.mxu0 0.0
      %384 = vmatprep.subr.mxu0 0.0
      %385 = vmatpush1.xpose.msra.mxu0 0.0
      %386 = vmatprep.subr.mxu0 0.0
      %387 = vmatpush1.xpose.msra.mxu0 0.0
      %388 = vmatprep.subr.mxu0 0.0
      %389 = vmatpush1.xpose.msra.mxu0 0.0
      %390 = vmatprep.subr.mxu0 0.0
      %391 = vmatpush1.xpose.msra.mxu0 0.0
      %392 = vmatprep.subr.mxu0 0.0
      %393 = vmatpush1.xpose.msra.mxu0 0.0
      %394 = vmatprep.subr.mxu0 0.0
      %395 = vmatpush1.xpose.msra.mxu0 0.0
      %396 = vmatprep.subr.mxu0 0.0
      %397 = vmatpush1.xpose.msra.mxu0 0.0
      %398 = vmatprep.subr.mxu0 0.0
      %399 = vmatpush1.xpose.msra.mxu0 0.0
      %400 = vmatprep.subr.mxu0 0.0
      %401 = vmatpush1.xpose.msra.mxu0 0.0
      %402 = vmatprep.mubr.f32.mxu0 0.0
      %403 = vmatmul.mubr.f32.gmra.mrb[0].mxu0 %v333
      %v404 = vpop.f32.mrb[0].mxu0
      %v405 = vadd.f32 0.0, %v404
      %v406 = vpop.f32.mrb[0].mxu0
      %407 = vdwg.mxu0
      %v409 = vsel %vm331, %v319, 0
      %v412 = vsel %vm331, %v323, 0
      %414 = vmatprep.subr.mxu0 0.0
      %415 = vmatpush1.xpose.msra.mxu0 %v412
      %416 = vmatprep.subr.mxu0 0.0
      %417 = vmatpush1.xpose.msra.mxu0 0.0
      %418 = vmatprep.subr.mxu0 0.0
      %419 = vmatpush1.xpose.msra.mxu0 0.0
      %420 = vmatprep.subr.mxu0 0.0
      %421 = vmatpush1.xpose.msra.mxu0 0.0
      %422 = vmatprep.subr.mxu0 0.0
      %423 = vmatpush1.xpose.msra.mxu0 0.0
      %424 = vmatprep.subr.mxu0 0.0
      %425 = vmatpush1.xpose.msra.mxu0 0.0
      %426 = vmatprep.subr.mxu0 0.0
      %427 = vmatpush1.xpose.msra.mxu0 0.0
      %428 = vmatprep.subr.mxu0 0.0
      %429 = vmatpush1.xpose.msra.mxu0 0.0
      %430 = vmatprep.subr.mxu0 0.0
      %431 = vmatpush1.xpose.msra.mxu0 0.0
      %432 = vmatprep.subr.mxu0 0.0
      %433 = vmatpush1.xpose.msra.mxu0 0.0
      %434 = vmatprep.subr.mxu0 0.0
      %435 = vmatpush1.xpose.msra.mxu0 0.0
      %436 = vmatprep.subr.mxu0 0.0
      %437 = vmatpush1.xpose.msra.mxu0 0.0
      %438 = vmatprep.subr.mxu0 0.0
      %439 = vmatpush1.xpose.msra.mxu0 0.0
      %440 = vmatprep.subr.mxu0 0.0
      %441 = vmatpush1.xpose.msra.mxu0 0.0
      %442 = vmatprep.subr.mxu0 0.0
      %443 = vmatpush1.xpose.msra.mxu0 0.0
      %444 = vmatprep.subr.mxu0 0.0
      %445 = vmatpush1.xpose.msra.mxu0 0.0
      %446 = vmatprep.subr.mxu0 0.0
      %447 = vmatpush1.xpose.msra.mxu0 0.0
      %448 = vmatprep.subr.mxu0 0.0
      %449 = vmatpush1.xpose.msra.mxu0 0.0
      %450 = vmatprep.subr.mxu0 0.0
      %451 = vmatpush1.xpose.msra.mxu0 0.0
      %452 = vmatprep.subr.mxu0 0.0
      %453 = vmatpush1.xpose.msra.mxu0 0.0
      %454 = vmatprep.subr.mxu0 0.0
      %455 = vmatpush1.xpose.msra.mxu0 0.0
      %456 = vmatprep.subr.mxu0 0.0
      %457 = vmatpush1.xpose.msra.mxu0 0.0
      %458 = vmatprep.subr.mxu0 0.0
      %459 = vmatpush1.xpose.msra.mxu0 0.0
      %460 = vmatprep.subr.mxu0 0.0
      %461 = vmatpush1.xpose.msra.mxu0 0.0
      %462 = vmatprep.subr.mxu0 0.0
      %463 = vmatpush1.xpose.msra.mxu0 0.0
      %464 = vmatprep.subr.mxu0 0.0
      %465 = vmatpush1.xpose.msra.mxu0 0.0
      %466 = vmatprep.subr.mxu0 0.0
      %467 = vmatpush1.xpose.msra.mxu0 0.0
      %468 = vmatprep.subr.mxu0 0.0
      %469 = vmatpush1.xpose.msra.mxu0 0.0
      %470 = vmatprep.subr.mxu0 0.0
      %471 = vmatpush1.xpose.msra.mxu0 0.0
      %472 = vmatprep.subr.mxu0 0.0
      %473 = vmatpush1.xpose.msra.mxu0 0.0
      %474 = vmatprep.subr.mxu0 0.0
      %475 = vmatpush1.xpose.msra.mxu0 0.0
      %476 = vmatprep.subr.mxu0 0.0
      %477 = vmatpush1.xpose.msra.mxu0 0.0
      %478 = vmatprep.mubr.f32.mxu0 0.0
      %479 = vmatmul.mubr.f32.gmra.mrb[0].mxu0 %v409
      %v480 = vpop.f32.mrb[0].mxu0
      %v481 = vadd.f32 0.0, %v480
      %v482 = vpop.f32.mrb[0].mxu0
      %483 = vdwg.mxu0
      %v485 = vsel %vm331, %v320, 0
      %v488 = vsel %vm331, %v324, 0
      %490 = vmatprep.subr.mxu0 0.0
      %491 = vmatpush1.xpose.msra.mxu0 %v488
      %492 = vmatprep.subr.mxu0 0.0
      %493 = vmatpush1.xpose.msra.mxu0 0.0
      %494 = vmatprep.subr.mxu0 0.0
      %495 = vmatpush1.xpose.msra.mxu0 0.0
      %496 = vmatprep.subr.mxu0 0.0
      %497 = vmatpush1.xpose.msra.mxu0 0.0
      %498 = vmatprep.subr.mxu0 0.0
      %499 = vmatpush1.xpose.msra.mxu0 0.0
      %500 = vmatprep.subr.mxu0 0.0
      %501 = vmatpush1.xpose.msra.mxu0 0.0
      %502 = vmatprep.subr.mxu0 0.0
      %503 = vmatpush1.xpose.msra.mxu0 0.0
      %504 = vmatprep.subr.mxu0 0.0
      %505 = vmatpush1.xpose.msra.mxu0 0.0
      %506 = vmatprep.subr.mxu0 0.0
      %507 = vmatpush1.xpose.msra.mxu0 0.0
      %508 = vmatprep.subr.mxu0 0.0
      %509 = vmatpush1.xpose.msra.mxu0 0.0
      %510 = vmatprep.subr.mxu0 0.0
      %511 = vmatpush1.xpose.msra.mxu0 0.0
      %512 = vmatprep.subr.mxu0 0.0
      %513 = vmatpush1.xpose.msra.mxu0 0.0
      %514 = vmatprep.subr.mxu0 0.0
      %515 = vmatpush1.xpose.msra.mxu0 0.0
      %516 = vmatprep.subr.mxu0 0.0
      %517 = vmatpush1.xpose.msra.mxu0 0.0
      %518 = vmatprep.subr.mxu0 0.0
      %519 = vmatpush1.xpose.msra.mxu0 0.0
      %520 = vmatprep.subr.mxu0 0.0
      %521 = vmatpush1.xpose.msra.mxu0 0.0
      %522 = vmatprep.subr.mxu0 0.0
      %523 = vmatpush1.xpose.msra.mxu0 0.0
      %524 = vmatprep.subr.mxu0 0.0
      %525 = vmatpush1.xpose.msra.mxu0 0.0
      %526 = vmatprep.subr.mxu0 0.0
      %527 = vmatpush1.xpose.msra.mxu0 0.0
      %528 = vmatprep.subr.mxu0 0.0
      %529 = vmatpush1.xpose.msra.mxu0 0.0
      %530 = vmatprep.subr.mxu0 0.0
      %531 = vmatpush1.xpose.msra.mxu0 0.0
      %532 = vmatprep.subr.mxu0 0.0
      %533 = vmatpush1.xpose.msra.mxu0 0.0
      %534 = vmatprep.subr.mxu0 0.0
      %535 = vmatpush1.xpose.msra.mxu0 0.0
      %536 = vmatprep.subr.mxu0 0.0
      %537 = vmatpush1.xpose.msra.mxu0 0.0
      %538 = vmatprep.subr.mxu0 0.0
      %539 = vmatpush1.xpose.msra.mxu0 0.0
      %540 = vmatprep.subr.mxu0 0.0
      %541 = vmatpush1.xpose.msra.mxu0 0.0
      %542 = vmatprep.subr.mxu0 0.0
      %543 = vmatpush1.xpose.msra.mxu0 0.0
      %544 = vmatprep.subr.mxu0 0.0
      %545 = vmatpush1.xpose.msra.mxu0 0.0
      %546 = vmatprep.subr.mxu0 0.0
      %547 = vmatpush1.xpose.msra.mxu0 0.0
      %548 = vmatprep.subr.mxu0 0.0
      %549 = vmatpush1.xpose.msra.mxu0 0.0
      %550 = vmatprep.subr.mxu0 0.0
      %551 = vmatpush1.xpose.msra.mxu0 0.0
      %552 = vmatprep.subr.mxu0 0.0
      %553 = vmatpush1.xpose.msra.mxu0 0.0
      %554 = vmatprep.mubr.f32.mxu0 0.0
      %555 = vmatmul.mubr.f32.gmra.mrb[0].mxu0 %v485
      %v556 = vpop.f32.mrb[0].mxu0
      %v557 = vadd.f32 0.0, %v556
      %v558 = vpop.f32.mrb[0].mxu0
      %559 = vdwg.mxu0
      %v561 = vsel %vm331, %v321, 0
      %v564 = vsel %vm331, %v325, 0
      %566 = vmatprep.subr.mxu0 0.0
      %567 = vmatpush1.xpose.msra.mxu0 %v564
      %568 = vmatprep.subr.mxu0 0.0
      %569 = vmatpush1.xpose.msra.mxu0 0.0
      %570 = vmatprep.subr.mxu0 0.0
      %571 = vmatpush1.xpose.msra.mxu0 0.0
      %572 = vmatprep.subr.mxu0 0.0
      %573 = vmatpush1.xpose.msra.mxu0 0.0
      %574 = vmatprep.subr.mxu0 0.0
      %575 = vmatpush1.xpose.msra.mxu0 0.0
      %576 = vmatprep.subr.mxu0 0.0
      %577 = vmatpush1.xpose.msra.mxu0 0.0
      %578 = vmatprep.subr.mxu0 0.0
      %579 = vmatpush1.xpose.msra.mxu0 0.0
      %580 = vmatprep.subr.mxu0 0.0
      %581 = vmatpush1.xpose.msra.mxu0 0.0
      %582 = vmatprep.subr.mxu0 0.0
      %583 = vmatpush1.xpose.msra.mxu0 0.0
      %584 = vmatprep.subr.mxu0 0.0
      %585 = vmatpush1.xpose.msra.mxu0 0.0
      %586 = vmatprep.subr.mxu0 0.0
      %587 = vmatpush1.xpose.msra.mxu0 0.0
      %588 = vmatprep.subr.mxu0 0.0
      %589 = vmatpush1.xpose.msra.mxu0 0.0
      %590 = vmatprep.subr.mxu0 0.0
      %591 = vmatpush1.xpose.msra.mxu0 0.0
      %592 = vmatprep.subr.mxu0 0.0
      %593 = vmatpush1.xpose.msra.mxu0 0.0
      %594 = vmatprep.subr.mxu0 0.0
      %595 = vmatpush1.xpose.msra.mxu0 0.0
      %596 = vmatprep.subr.mxu0 0.0
      %597 = vmatpush1.xpose.msra.mxu0 0.0
      %598 = vmatprep.subr.mxu0 0.0
      %599 = vmatpush1.xpose.msra.mxu0 0.0
      %600 = vmatprep.subr.mxu0 0.0
      %601 = vmatpush1.xpose.msra.mxu0 0.0
      %602 = vmatprep.subr.mxu0 0.0
      %603 = vmatpush1.xpose.msra.mxu0 0.0
      %604 = vmatprep.subr.mxu0 0.0
      %605 = vmatpush1.xpose.msra.mxu0 0.0
      %606 = vmatprep.subr.mxu0 0.0
      %607 = vmatpush1.xpose.msra.mxu0 0.0
      %608 = vmatprep.subr.mxu0 0.0
      %609 = vmatpush1.xpose.msra.mxu0 0.0
      %610 = vmatprep.subr.mxu0 0.0
      %611 = vmatpush1.xpose.msra.mxu0 0.0
      %612 = vmatprep.subr.mxu0 0.0
      %613 = vmatpush1.xpose.msra.mxu0 0.0
      %614 = vmatprep.subr.mxu0 0.0
      %615 = vmatpush1.xpose.msra.mxu0 0.0
      %616 = vmatprep.subr.mxu0 0.0
      %617 = vmatpush1.xpose.msra.mxu0 0.0
      %618 = vmatprep.subr.mxu0 0.0
      %619 = vmatpush1.xpose.msra.mxu0 0.0
      %620 = vmatprep.subr.mxu0 0.0
      %621 = vmatpush1.xpose.msra.mxu0 0.0
      %622 = vmatprep.subr.mxu0 0.0
      %623 = vmatpush1.xpose.msra.mxu0 0.0
      %624 = vmatprep.subr.mxu0 0.0
      %625 = vmatpush1.xpose.msra.mxu0 0.0
      %626 = vmatprep.subr.mxu0 0.0
      %627 = vmatpush1.xpose.msra.mxu0 0.0
      %628 = vmatprep.subr.mxu0 0.0
      %629 = vmatpush1.xpose.msra.mxu0 0.0
      %630 = vmatprep.mubr.f32.mxu0 0.0
      %631 = vmatmul.mubr.f32.gmra.mrb[0].mxu0 %v561
      %v632 = vpop.f32.mrb[0].mxu0
      %v633 = vadd.f32 0.0, %v632
      %v634 = vpop.f32.mrb[0].mxu0
      %635 = vdwg.mxu0
      %v636 = vmul.f32 %v405, 0.35355338
      %v637 = vmul.f32 %v481, 0.35355338
      %v638 = vmul.f32 %v557, 0.35355338
      %v639 = vmul.f32 %v633, 0.35355338
      %v640 = vadd.f32 %v636, %v330
      %v641 = vadd.f32 %v637, %v330
      %v642 = vadd.f32 %v638, %v330
      %v643 = vadd.f32 %v639, %v330
      %v644 = vld [vmem:[#allocation2] sm:$0xff]
      %v645 = vld [vmem:[#allocation2 + $0x8] sm:$0xff]
      %v646 = vld [vmem:[#allocation2 + $0x10] sm:$0xff]
      %v647 = vld [vmem:[#allocation2 + $0x18] sm:$0xff]
      %v648 = vsel %vm331, %v640, -inf
      %649 = vmax.xlane.f32.xlu0 %v648
      %v650 = vpop.xlane.xlu0 %649
      %v651 = vsel %vm331, %v641, -inf
      %652 = vmax.xlane.f32.xlu0 %v651
      %v653 = vpop.xlane.xlu0 %652
      %v654 = vsel %vm331, %v642, -inf
      %655 = vmax.xlane.f32.xlu0 %v654
      %v656 = vpop.xlane.xlu0 %655
      %v657 = vsel %vm331, %v643, -inf
      %658 = vmax.xlane.f32.xlu0 %v657
      %v659 = vpop.xlane.xlu0 %658
      %v660 = vmax.f32 %v644, %v650
      %v661 = vmax.f32 %v645, %v653
      %v662 = vmax.f32 %v646, %v656
      %v663 = vmax.f32 %v647, %v659
      %v664 = vsub.f32 %v644, %v660
      %v665 = vsub.f32 %v645, %v661
      %v666 = vsub.f32 %v646, %v662
      %v667 = vsub.f32 %v647, %v663
      %v668 = vmul.f32 %v664, 1.442695
      %v669 = vpow.pop %v668
      %v670 = vmul.f32 %v665, 1.442695
      %v671 = vpow.pop %v670
      %v672 = vmul.f32 %v666, 1.442695
      %v673 = vpow.pop %v672
      %v674 = vmul.f32 %v667, 1.442695
      %v675 = vpow.pop %v674
      %677 = vset.pattern.permute.xlu0 0
      %678 = vperm.xlu0 %677, %v660
      %v679 = vpop.permute.xlu0 %678
      %682 = vset.pattern.permute.xlu0 0
      %683 = vperm.xlu0 %682, %v661
      %v684 = vpop.permute.xlu0 %683
      %687 = vset.pattern.permute.xlu0 0
      %688 = vperm.xlu0 %687, %v662
      %v689 = vpop.permute.xlu0 %688
      %692 = vset.pattern.permute.xlu0 0
      %693 = vperm.xlu0 %692, %v663
      %v694 = vpop.permute.xlu0 %693
      %v696 = vsub.f32 %v640, %v679
      %v697 = vsub.f32 %v641, %v684
      %v698 = vsub.f32 %v642, %v689
      %v699 = vsub.f32 %v643, %v694
      %v700 = vmul.f32 %v696, 1.442695
      %v701 = vpow.pop %v700
      %v702 = vmul.f32 %v697, 1.442695
      %v703 = vpow.pop %v702
      %v704 = vmul.f32 %v698, 1.442695
      %v705 = vpow.pop %v704
      %v706 = vmul.f32 %v699, 1.442695
      %v707 = vpow.pop %v706
      %v708 = vld [vmem:[#allocation3] sm:$0xff]
      %v709 = vld [vmem:[#allocation3 + $0x8] sm:$0xff]
      %v710 = vld [vmem:[#allocation3 + $0x10] sm:$0xff]
      %v711 = vld [vmem:[#allocation3 + $0x18] sm:$0xff]
      %v712 = vmul.f32 %v669, %v708
      %v713 = vmul.f32 %v671, %v709
      %v714 = vmul.f32 %v673, %v710
      %v715 = vmul.f32 %v675, %v711
      %v716 = vsel %vm331, %v701, 0.0
      %717 = vadd.xlane.f32.xlu0 %v716
      %v718 = vpop.xlane.xlu0 %717
      %v719 = vsel %vm331, %v703, 0.0
      %720 = vadd.xlane.f32.xlu0 %v719
      %v721 = vpop.xlane.xlu0 %720
      %v722 = vsel %vm331, %v705, 0.0
      %723 = vadd.xlane.f32.xlu0 %v722
      %v724 = vpop.xlane.xlu0 %723
      %v725 = vsel %vm331, %v707, 0.0
      %726 = vadd.xlane.f32.xlu0 %v725
      %v727 = vpop.xlane.xlu0 %726
      %v728 = vadd.f32 %v712, %v718
      %v729 = vadd.f32 %v713, %v721
      %v730 = vadd.f32 %v714, %v724
      %v731 = vadd.f32 %v715, %v727
      %vm732 = vcmask 7168
      %733 = vst.msk [vmem:[#allocation3] sm:$0xff] %vm732, %v728
      %734 = vst.msk [vmem:[#allocation3 + $0x8] sm:$0xff] %vm732, %v729
      %735 = vst.msk [vmem:[#allocation3 + $0x10] sm:$0xff] %vm732, %v730
      %736 = vst.msk [vmem:[#allocation3 + $0x18] sm:$0xff] %vm732, %v731
      %v737 = vld [vmem:[#allocation4] sm:$0xff]
      %v738 = vld [vmem:[#allocation4 + $0x8] sm:$0xff]
      %v739 = vld [vmem:[#allocation4 + $0x10] sm:$0xff]
      %v740 = vld [vmem:[#allocation4 + $0x18] sm:$0xff]
      %742 = vset.pattern.permute.xlu0 0
      %743 = vperm.xlu0 %742, %v669
      %v744 = vpop.permute.xlu0 %743
      %747 = vset.pattern.permute.xlu0 0
      %748 = vperm.xlu0 %747, %v671
      %v749 = vpop.permute.xlu0 %748
      %752 = vset.pattern.permute.xlu0 0
      %753 = vperm.xlu0 %752, %v673
      %v754 = vpop.permute.xlu0 %753
      %757 = vset.pattern.permute.xlu0 0
      %758 = vperm.xlu0 %757, %v675
      %v759 = vpop.permute.xlu0 %758
      %v761 = vmul.f32 %v744, %v737
      %v762 = vmul.f32 %v749, %v738
      %v763 = vmul.f32 %v754, %v739
      %v764 = vmul.f32 %v759, %v740
      %v766 = vsel %vm331, %v701, 0
      %768 = vmatprep.subr.mxu0 0.0
      %769 = vmatpush1.msra.mxu0 %v326
      %770 = vmatprep.subr.mxu0 0.0
      %771 = vmatpush1.msra.mxu0 0.0
      %772 = vmatprep.subr.mxu0 0.0
      %773 = vmatpush1.msra.mxu0 0.0
      %774 = vmatprep.subr.mxu0 0.0
      %775 = vmatpush1.msra.mxu0 0.0
      %776 = vmatprep.subr.mxu0 0.0
      %777 = vmatpush1.msra.mxu0 0.0
      %778 = vmatprep.subr.mxu0 0.0
      %779 = vmatpush1.msra.mxu0 0.0
      %780 = vmatprep.subr.mxu0 0.0
      %781 = vmatpush1.msra.mxu0 0.0
      %782 = vmatprep.subr.mxu0 0.0
      %783 = vmatpush1.msra.mxu0 0.0
      %784 = vmatprep.subr.mxu0 0.0
      %785 = vmatpush1.msra.mxu0 0.0
      %786 = vmatprep.subr.mxu0 0.0
      %787 = vmatpush1.msra.mxu0 0.0
      %788 = vmatprep.subr.mxu0 0.0
      %789 = vmatpush1.msra.mxu0 0.0
      %790 = vmatprep.subr.mxu0 0.0
      %791 = vmatpush1.msra.mxu0 0.0
      %792 = vmatprep.subr.mxu0 0.0
      %793 = vmatpush1.msra.mxu0 0.0
      %794 = vmatprep.subr.mxu0 0.0
      %795 = vmatpush1.msra.mxu0 0.0
      %796 = vmatprep.subr.mxu0 0.0
      %797 = vmatpush1.msra.mxu0 0.0
      %798 = vmatprep.subr.mxu0 0.0
      %799 = vmatpush1.msra.mxu0 0.0
      %800 = vmatprep.subr.mxu0 0.0
      %801 = vmatpush1.msra.mxu0 0.0
      %802 = vmatprep.subr.mxu0 0.0
      %803 = vmatpush1.msra.mxu0 0.0
      %804 = vmatprep.subr.mxu0 0.0
      %805 = vmatpush1.msra.mxu0 0.0
      %806 = vmatprep.subr.mxu0 0.0
      %807 = vmatpush1.msra.mxu0 0.0
      %808 = vmatprep.subr.mxu0 0.0
      %809 = vmatpush1.msra.mxu0 0.0
      %810 = vmatprep.subr.mxu0 0.0
      %811 = vmatpush1.msra.mxu0 0.0
      %812 = vmatprep.subr.mxu0 0.0
      %813 = vmatpush1.msra.mxu0 0.0
      %814 = vmatprep.subr.mxu0 0.0
      %815 = vmatpush1.msra.mxu0 0.0
      %816 = vmatprep.subr.mxu0 0.0
      %817 = vmatpush1.msra.mxu0 0.0
      %818 = vmatprep.subr.mxu0 0.0
      %819 = vmatpush1.msra.mxu0 0.0
      %820 = vmatprep.subr.mxu0 0.0
      %821 = vmatpush1.msra.mxu0 0.0
      %822 = vmatprep.subr.mxu0 0.0
      %823 = vmatpush1.msra.mxu0 0.0
      %824 = vmatprep.subr.mxu0 0.0
      %825 = vmatpush1.msra.mxu0 0.0
      %826 = vmatprep.subr.mxu0 0.0
      %827 = vmatpush1.msra.mxu0 0.0
      %828 = vmatprep.subr.mxu0 0.0
      %829 = vmatpush1.msra.mxu0 0.0
      %830 = vmatprep.subr.mxu0 0.0
      %831 = vmatpush1.msra.mxu0 0.0
      %832 = vmatprep.mubr.f32.mxu0 0.0
      %833 = vmatmul.mubr.f32.gmra.mrb[0].mxu0 %v766
      %v834 = vpop.f32.mrb[0].mxu0
      %v835 = vadd.f32 0.0, %v834
      %v836 = vpop.f32.mrb[0].mxu0
      %837 = vdwg.mxu0
      %v839 = vsel %vm331, %v703, 0
      %841 = vmatprep.subr.mxu0 0.0
      %842 = vmatpush1.msra.mxu0 %v327
      %843 = vmatprep.subr.mxu0 0.0
      %844 = vmatpush1.msra.mxu0 0.0
      %845 = vmatprep.subr.mxu0 0.0
      %846 = vmatpush1.msra.mxu0 0.0
      %847 = vmatprep.subr.mxu0 0.0
      %848 = vmatpush1.msra.mxu0 0.0
      %849 = vmatprep.subr.mxu0 0.0
      %850 = vmatpush1.msra.mxu0 0.0
      %851 = vmatprep.subr.mxu0 0.0
      %852 = vmatpush1.msra.mxu0 0.0
      %853 = vmatprep.subr.mxu0 0.0
      %854 = vmatpush1.msra.mxu0 0.0
      %855 = vmatprep.subr.mxu0 0.0
      %856 = vmatpush1.msra.mxu0 0.0
      %857 = vmatprep.subr.mxu0 0.0
      %858 = vmatpush1.msra.mxu0 0.0
      %859 = vmatprep.subr.mxu0 0.0
      %860 = vmatpush1.msra.mxu0 0.0
      %861 = vmatprep.subr.mxu0 0.0
      %862 = vmatpush1.msra.mxu0 0.0
      %863 = vmatprep.subr.mxu0 0.0
      %864 = vmatpush1.msra.mxu0 0.0
      %865 = vmatprep.subr.mxu0 0.0
      %866 = vmatpush1.msra.mxu0 0.0
      %867 = vmatprep.subr.mxu0 0.0
      %868 = vmatpush1.msra.mxu0 0.0
      %869 = vmatprep.subr.mxu0 0.0
      %870 = vmatpush1.msra.mxu0 0.0
      %871 = vmatprep.subr.mxu0 0.0
      %872 = vmatpush1.msra.mxu0 0.0
      %873 = vmatprep.subr.mxu0 0.0
      %874 = vmatpush1.msra.mxu0 0.0
      %875 = vmatprep.subr.mxu0 0.0
      %876 = vmatpush1.msra.mxu0 0.0
      %877 = vmatprep.subr.mxu0 0.0
      %878 = vmatpush1.msra.mxu0 0.0
      %879 = vmatprep.subr.mxu0 0.0
      %880 = vmatpush1.msra.mxu0 0.0
      %881 = vmatprep.subr.mxu0 0.0
      %882 = vmatpush1.msra.mxu0 0.0
      %883 = vmatprep.subr.mxu0 0.0
      %884 = vmatpush1.msra.mxu0 0.0
      %885 = vmatprep.subr.mxu0 0.0
      %886 = vmatpush1.msra.mxu0 0.0
      %887 = vmatprep.subr.mxu0 0.0
      %888 = vmatpush1.msra.mxu0 0.0
      %889 = vmatprep.subr.mxu0 0.0
      %890 = vmatpush1.msra.mxu0 0.0
      %891 = vmatprep.subr.mxu0 0.0
      %892 = vmatpush1.msra.mxu0 0.0
      %893 = vmatprep.subr.mxu0 0.0
      %894 = vmatpush1.msra.mxu0 0.0
      %895 = vmatprep.subr.mxu0 0.0
      %896 = vmatpush1.msra.mxu0 0.0
      %897 = vmatprep.subr.mxu0 0.0
      %898 = vmatpush1.msra.mxu0 0.0
      %899 = vmatprep.subr.mxu0 0.0
      %900 = vmatpush1.msra.mxu0 0.0
      %901 = vmatprep.subr.mxu0 0.0
      %902 = vmatpush1.msra.mxu0 0.0
      %903 = vmatprep.subr.mxu0 0.0
      %904 = vmatpush1.msra.mxu0 0.0
      %905 = vmatprep.mubr.f32.mxu0 0.0
      %906 = vmatmul.mubr.f32.gmra.mrb[0].mxu0 %v839
      %v907 = vpop.f32.mrb[0].mxu0
      %v908 = vadd.f32 0.0, %v907
      %v909 = vpop.f32.mrb[0].mxu0
      %910 = vdwg.mxu0
      %v912 = vsel %vm331, %v705, 0
      %914 = vmatprep.subr.mxu0 0.0
      %915 = vmatpush1.msra.mxu0 %v328
      %916 = vmatprep.subr.mxu0 0.0
      %917 = vmatpush1.msra.mxu0 0.0
      %918 = vmatprep.subr.mxu0 0.0
      %919 = vmatpush1.msra.mxu0 0.0
      %920 = vmatprep.subr.mxu0 0.0
      %921 = vmatpush1.msra.mxu0 0.0
      %922 = vmatprep.subr.mxu0 0.0
      %923 = vmatpush1.msra.mxu0 0.0
      %924 = vmatprep.subr.mxu0 0.0
      %925 = vmatpush1.msra.mxu0 0.0
      %926 = vmatprep.subr.mxu0 0.0
      %927 = vmatpush1.msra.mxu0 0.0
      %928 = vmatprep.subr.mxu0 0.0
      %929 = vmatpush1.msra.mxu0 0.0
      %930 = vmatprep.subr.mxu0 0.0
      %931 = vmatpush1.msra.mxu0 0.0
      %932 = vmatprep.subr.mxu0 0.0
      %933 = vmatpush1.msra.mxu0 0.0
      %934 = vmatprep.subr.mxu0 0.0
      %935 = vmatpush1.msra.mxu0 0.0
      %936 = vmatprep.subr.mxu0 0.0
      %937 = vmatpush1.msra.mxu0 0.0
      %938 = vmatprep.subr.mxu0 0.0
      %939 = vmatpush1.msra.mxu0 0.0
      %940 = vmatprep.subr.mxu0 0.0
      %941 = vmatpush1.msra.mxu0 0.0
      %942 = vmatprep.subr.mxu0 0.0
      %943 = vmatpush1.msra.mxu0 0.0
      %944 = vmatprep.subr.mxu0 0.0
      %945 = vmatpush1.msra.mxu0 0.0
      %946 = vmatprep.subr.mxu0 0.0
      %947 = vmatpush1.msra.mxu0 0.0
      %948 = vmatprep.subr.mxu0 0.0
      %949 = vmatpush1.msra.mxu0 0.0
      %950 = vmatprep.subr.mxu0 0.0
      %951 = vmatpush1.msra.mxu0 0.0
      %952 = vmatprep.subr.mxu0 0.0
      %953 = vmatpush1.msra.mxu0 0.0
      %954 = vmatprep.subr.mxu0 0.0
      %955 = vmatpush1.msra.mxu0 0.0
      %956 = vmatprep.subr.mxu0 0.0
      %957 = vmatpush1.msra.mxu0 0.0
      %958 = vmatprep.subr.mxu0 0.0
      %959 = vmatpush1.msra.mxu0 0.0
      %960 = vmatprep.subr.mxu0 0.0
      %961 = vmatpush1.msra.mxu0 0.0
      %962 = vmatprep.subr.mxu0 0.0
      %963 = vmatpush1.msra.mxu0 0.0
      %964 = vmatprep.subr.mxu0 0.0
      %965 = vmatpush1.msra.mxu0 0.0
      %966 = vmatprep.subr.mxu0 0.0
      %967 = vmatpush1.msra.mxu0 0.0
      %968 = vmatprep.subr.mxu0 0.0
      %969 = vmatpush1.msra.mxu0 0.0
      %970 = vmatprep.subr.mxu0 0.0
      %971 = vmatpush1.msra.mxu0 0.0
      %972 = vmatprep.subr.mxu0 0.0
      %973 = vmatpush1.msra.mxu0 0.0
      %974 = vmatprep.subr.mxu0 0.0
      %975 = vmatpush1.msra.mxu0 0.0
      %976 = vmatprep.subr.mxu0 0.0
      %977 = vmatpush1.msra.mxu0 0.0
      %978 = vmatprep.mubr.f32.mxu0 0.0
      %979 = vmatmul.mubr.f32.gmra.mrb[0].mxu0 %v912
      %v980 = vpop.f32.mrb[0].mxu0
      %v981 = vadd.f32 0.0, %v980
      %v982 = vpop.f32.mrb[0].mxu0
      %983 = vdwg.mxu0
      %v985 = vsel %vm331, %v707, 0
      %987 = vmatprep.subr.mxu0 0.0
      %988 = vmatpush1.msra.mxu0 %v329
      %989 = vmatprep.subr.mxu0 0.0
      %990 = vmatpush1.msra.mxu0 0.0
      %991 = vmatprep.subr.mxu0 0.0
      %992 = vmatpush1.msra.mxu0 0.0
      %993 = vmatprep.subr.mxu0 0.0
      %994 = vmatpush1.msra.mxu0 0.0
      %995 = vmatprep.subr.mxu0 0.0
      %996 = vmatpush1.msra.mxu0 0.0
      %997 = vmatprep.subr.mxu0 0.0
      %998 = vmatpush1.msra.mxu0 0.0
      %999 = vmatprep.subr.mxu0 0.0
      %1000 = vmatpush1.msra.mxu0 0.0
      %1001 = vmatprep.subr.mxu0 0.0
      %1002 = vmatpush1.msra.mxu0 0.0
      %1003 = vmatprep.subr.mxu0 0.0
      %1004 = vmatpush1.msra.mxu0 0.0
      %1005 = vmatprep.subr.mxu0 0.0
      %1006 = vmatpush1.msra.mxu0 0.0
      %1007 = vmatprep.subr.mxu0 0.0
      %1008 = vmatpush1.msra.mxu0 0.0
      %1009 = vmatprep.subr.mxu0 0.0
      %1010 = vmatpush1.msra.mxu0 0.0
      %1011 = vmatprep.subr.mxu0 0.0
      %1012 = vmatpush1.msra.mxu0 0.0
      %1013 = vmatprep.subr.mxu0 0.0
      %1014 = vmatpush1.msra.mxu0 0.0
      %1015 = vmatprep.subr.mxu0 0.0
      %1016 = vmatpush1.msra.mxu0 0.0
      %1017 = vmatprep.subr.mxu0 0.0
      %1018 = vmatpush1.msra.mxu0 0.0
      %1019 = vmatprep.subr.mxu0 0.0
      %1020 = vmatpush1.msra.mxu0 0.0
      %1021 = vmatprep.subr.mxu0 0.0
      %1022 = vmatpush1.msra.mxu0 0.0
      %1023 = vmatprep.subr.mxu0 0.0
      %1024 = vmatpush1.msra.mxu0 0.0
      %1025 = vmatprep.subr.mxu0 0.0
      %1026 = vmatpush1.msra.mxu0 0.0
      %1027 = vmatprep.subr.mxu0 0.0
      %1028 = vmatpush1.msra.mxu0 0.0
      %1029 = vmatprep.subr.mxu0 0.0
      %1030 = vmatpush1.msra.mxu0 0.0
      %1031 = vmatprep.subr.mxu0 0.0
      %1032 = vmatpush1.msra.mxu0 0.0
      %1033 = vmatprep.subr.mxu0 0.0
      %1034 = vmatpush1.msra.mxu0 0.0
      %1035 = vmatprep.subr.mxu0 0.0
      %1036 = vmatpush1.msra.mxu0 0.0
      %1037 = vmatprep.subr.mxu0 0.0
      %1038 = vmatpush1.msra.mxu0 0.0
      %1039 = vmatprep.subr.mxu0 0.0
      %1040 = vmatpush1.msra.mxu0 0.0
      %1041 = vmatprep.subr.mxu0 0.0
      %1042 = vmatpush1.msra.mxu0 0.0
      %1043 = vmatprep.subr.mxu0 0.0
      %1044 = vmatpush1.msra.mxu0 0.0
      %1045 = vmatprep.subr.mxu0 0.0
      %1046 = vmatpush1.msra.mxu0 0.0
      %1047 = vmatprep.subr.mxu0 0.0
      %1048 = vmatpush1.msra.mxu0 0.0
      %1049 = vmatprep.subr.mxu0 0.0
      %1050 = vmatpush1.msra.mxu0 0.0
      %1051 = vmatprep.mubr.f32.mxu0 0.0
      %1052 = vmatmul.mubr.f32.gmra.mrb[0].mxu0 %v985
      %v1053 = vpop.f32.mrb[0].mxu0
      %v1054 = vadd.f32 0.0, %v1053
      %v1055 = vpop.f32.mrb[0].mxu0
      %1056 = vdwg.mxu0
      %v1057 = vadd.f32 %v761, %v835
      %v1058 = vadd.f32 %v762, %v908
      %v1059 = vadd.f32 %v763, %v981
      %v1060 = vadd.f32 %v764, %v1054
      %1061 = vst.msk [vmem:[#allocation4] sm:$0xff] %vm331, %v1057
      %1062 = vst.msk [vmem:[#allocation4 + $0x8] sm:$0xff] %vm331, %v1058
      %1063 = vst.msk [vmem:[#allocation4 + $0x10] sm:$0xff] %vm331, %v1059
      %1064 = vst.msk [vmem:[#allocation4 + $0x18] sm:$0xff] %vm331, %v1060
      %1065 = vst.msk [vmem:[#allocation2] sm:$0xff] %vm732, %v660
      %1066 = vst.msk [vmem:[#allocation2 + $0x8] sm:$0xff] %vm732, %v661
      %1067 = vst.msk [vmem:[#allocation2 + $0x10] sm:$0xff] %vm732, %v662
      %1068 = vst.msk [vmem:[#allocation2 + $0x18] sm:$0xff] %vm732, %v663
      // Predicated region
      $region41: #{decoder_forward.28} parent=35 // pred_check
        %p1069 = pneg %p300
      $region42: #{decoder_forward.28} parent=35 // pred_check_branch
        %1071 = sbr.rel (%p1069) target = $region44
      $region43: #{decoder_forward.28} parent=35 // pred_region
        %v1072 = vld [vmem:[#allocation3] sm:$0xff]
        %v1073 = vld [vmem:[#allocation3 + $0x8] sm:$0xff]
        %v1074 = vld [vmem:[#allocation3 + $0x10] sm:$0xff]
        %v1075 = vld [vmem:[#allocation3 + $0x18] sm:$0xff]
        %v1076 = vrcp.pop %v1072
        %v1077 = vrcp.pop %v1073
        %v1078 = vrcp.pop %v1074
        %v1079 = vrcp.pop %v1075
        %v1080 = vld [vmem:[#allocation4] sm:$0xff]
        %v1081 = vld [vmem:[#allocation4 + $0x8] sm:$0xff]
        %v1082 = vld [vmem:[#allocation4 + $0x10] sm:$0xff]
        %v1083 = vld [vmem:[#allocation4 + $0x18] sm:$0xff]
        %1085 = vset.pattern.permute.xlu0 0
        %1086 = vperm.xlu0 %1085, %v1076
        %v1087 = vpop.permute.xlu0 %1086
        %1090 = vset.pattern.permute.xlu0 0
        %1091 = vperm.xlu0 %1090, %v1077
        %v1092 = vpop.permute.xlu0 %1091
        %1095 = vset.pattern.permute.xlu0 0
        %1096 = vperm.xlu0 %1095, %v1078
        %v1097 = vpop.permute.xlu0 %1096
        %1100 = vset.pattern.permute.xlu0 0
        %1101 = vperm.xlu0 %1100, %v1079
        %v1102 = vpop.permute.xlu0 %1101
        %v1104 = vmul.f32 %v1080, %v1087
        %v1105 = vmul.f32 %v1081, %v1092
        %v1106 = vmul.f32 %v1082, %v1097
        %v1107 = vmul.f32 %v1083, %v1102
        %1108 = vst.msk [vmem:[%s299] sm:$0xff] %vm331, %v1104
        %1109 = vst.msk [vmem:[%s299 + $0x8] sm:$0xff] %vm331, %v1105
        %1110 = vst.msk [vmem:[%s299 + $0x10] sm:$0xff] %vm331, %v1106
        %1111 = vst.msk [vmem:[%s299 + $0x18] sm:$0xff] %vm331, %v1107
      $region44: #{decoder_forward.28} parent=35 // pred_fallthru
        _
      %p1112 = scmp.lt.s32.totalorder %s19, 1
      %s1113 = scalar_select %p1112, %s19, 1
      %s1114 = smul.addr %s1113, 4
      %s1115 = smul.addr %s1114, 8
      %s1116 = scalar_lea.vmem %s4, %s1115
      // Predicated region
      $region45: #{decoder_forward.28} parent=35 // pred_check
        %p1117 = pneg %p155
      $region46: #{decoder_forward.28} parent=35 // pred_check_branch
        %1119 = sbr.rel (%p1117) target = $region48
      $region47: #{decoder_forward.28} parent=35 // pred_region
        _
      $region48: #{decoder_forward.28} parent=35 // pred_fallthru
        _
    $region36: #{decoder_forward.28} parent=5 // pred_fallthru
      _
    %p1120 = scmp.le.s32.totalorder 2, %s10
    // Predicated region
    $region49: #{decoder_forward.28} parent=5 // pred_check
      %p1121 = pneg %p1120
    $region50: #{decoder_forward.28} parent=5 // pred_check_branch
      %1123 = sbr.rel (%p1121) target = $region52
    $region51: #{decoder_forward.28} parent=5 // pred_region
      %s1124 = ssub.s32 %s10, 2
      // Predicated region
      $region53: #{decoder_forward.28} parent=51 // pred_check
        %p1125 = pneg %p161
      $region54: #{decoder_forward.28} parent=51 // pred_check_branch
        %1127 = sbr.rel (%p1125) target = $region56
      $region55: #{decoder_forward.28} parent=51 // pred_region
        %p1128 = scmp.lt.s32.totalorder %s21, 1
        %s1129 = scalar_select %p1128, %s21, 1
        %s1130 = smul.addr %s1129, 4
        %s1131 = smul.addr %s1130, 8
        %s1132 = scalar_lea.vmem %s4, %s1131
      $region56: #{decoder_forward.28} parent=51 // pred_fallthru
        _
    $region52: #{decoder_forward.28} parent=5 // pred_fallthru
      _
  $region6: #{decoder_forward.28} parent=0 // loop_footer
    %s14 = sadd.s32 1, %s10
  $region7: #{decoder_forward.28} parent=0 // loop_footer_branch
    %9 = sbr.rel target = $region3
  $region8: #{decoder_forward.28} parent=0 // loop_exit
    _

// kernel: decoder_forward.30
$region0: #{decoder_forward.30}
  #allocation0 [shape = 'u32[]', space=smem, size = 0x4, offset = 0x4, fixed_abs, tag = 'smem constant byte address 0x4 - core index']
  #allocation1 [shape = 'u32[144,128]{1,0:T(1,128)}', space=vmem, size = 0x12000, scoped, tag = 'internal scratch']
  %s0 = inlined_call_operand.vmem [shape: f32[16,32], index: 0, kind: input, shape index: {}]
  %s1 = inlined_call_operand.vmem [shape: f32[16,32], index: 1, kind: input, shape index: {}]
  %s2 = inlined_call_operand.vmem [shape: f32[1,32], index: 2, kind: input, shape index: {}]
  %s3 = inlined_call_operand.vmem [shape: f32[1,32], index: 3, kind: input, shape index: {}]
  %s4 = inlined_call_operand.vmem [shape: f32[16,32], index: 4, kind: output, shape index: {}]
  %s5 = sld [smem:[#allocation0]]
  $region26: #{decoder_forward.30} parent=0
    _
  %s7 = ssub.s32 1, %s5
  %s8 = scalar_select 0, %s7, %s5
  // Predicated region
  $region2: #{decoder_forward.30} parent=0 // pred_check
    _
  $region3: #{decoder_forward.30} parent=0 // pred_check_branch
    %10 = sbr.rel (0) target = $region5
  $region4: #{decoder_forward.30} parent=0 // pred_region
    _
  $region5: #{decoder_forward.30} parent=0 // pred_fallthru
    _
  // Predicated region
  $region6: #{decoder_forward.30} parent=0 // pred_check
    _
  $region7: #{decoder_forward.30} parent=0 // pred_check_branch
    %12 = sbr.rel (0) target = $region9
  $region8: #{decoder_forward.30} parent=0 // pred_region
    _
  $region9: #{decoder_forward.30} parent=0 // pred_fallthru
    _
  // Predicated region
  $region10: #{decoder_forward.30} parent=0 // pred_check
    _
  $region11: #{decoder_forward.30} parent=0 // pred_check_branch
    %14 = sbr.rel (0) target = $region13
  $region12: #{decoder_forward.30} parent=0 // pred_region
    _
  $region13: #{decoder_forward.30} parent=0 // pred_fallthru
    _
  // Predicated region
  $region14: #{decoder_forward.30} parent=0 // pred_check
    _
  $region15: #{decoder_forward.30} parent=0 // pred_check_branch
    %16 = sbr.rel (0) target = $region17
  $region16: #{decoder_forward.30} parent=0 // pred_region
    _
  $region17: #{decoder_forward.30} parent=0 // pred_fallthru
    _
  %v17 = vld [vmem:[%s0] sm:$0xff]
  %v18 = vld [vmem:[%s0 + $0x8] sm:$0xff]
  %v19 = vld [vmem:[%s1] sm:$0xff]
  %v20 = vld [vmem:[%s1 + $0x8] sm:$0xff]
  %v21 = vadd.f32 %v17, %v19
  %v22 = vadd.f32 %v18, %v20
  %vm23 = vcmask 261120
  %v24 = vsel %vm23, %v21, 0.0
  %25 = vadd.xlane.f32.xlu0 %v24
  %v26 = vpop.xlane.xlu0 %25
  %v27 = vsel %vm23, %v22, 0.0
  %28 = vadd.xlane.f32.xlu0 %v27
  %v29 = vpop.xlane.xlu0 %28
  %v30 = vrcp.pop 32.0
  %v31 = vmul.f32 %v26, %v30
  %v32 = vmul.f32 %v29, %v30
  %v33 = vsub.f32 %v21, %v31
  %v34 = vsub.f32 %v22, %v32
  %v35 = vmul.f32 %v33, %v33
  %v36 = vmul.f32 %v34, %v34
  %v37 = vsel %vm23, %v35, 0.0
  %38 = vadd.xlane.f32.xlu0 %v37
  %v39 = vpop.xlane.xlu0 %38
  %v40 = vsel %vm23, %v36, 0.0
  %41 = vadd.xlane.f32.xlu0 %v40
  %v42 = vpop.xlane.xlu0 %41
  %v43 = vmul.f32 %v39, %v30
  %v44 = vmul.f32 %v42, %v30
  %v45 = vadd.f32 %v43, 1e-05
  %v46 = vadd.f32 %v44, 1e-05
  %v47 = vrsqrt.pop %v45
  %v48 = vrsqrt.pop %v46
  %v49 = vmul.f32 %v33, %v47
  %v50 = vmul.f32 %v34, %v48
  %v51 = vld [vmem:[%s2] sm:$0x1]
  %v53 = vlaneseq
  %v54 = vshrl.u32 %v53, 7
  %v55 = vsub.s32 0, %v54
  %v56 = vrot.slane %v51, %v55
  %v58 = vmul.f32 %v49, %v56
  %v59 = vmul.f32 %v50, %v56
  %v60 = vld [vmem:[%s3] sm:$0x1]
  %v62 = vlaneseq
  %v63 = vshrl.u32 %v62, 7
  %v64 = vsub.s32 0, %v63
  %v65 = vrot.slane %v60, %v64
  %v67 = vadd.f32 %v58, %v65
  %v68 = vadd.f32 %v59, %v65
  %69 = vst.msk [vmem:[%s4] sm:$0xff] %vm23, %v67
  %70 = vst.msk [vmem:[%s4 + $0x8] sm:$0xff] %vm23, %v68
  // Predicated region
  $region18: #{decoder_forward.30} parent=0 // pred_check
    _
  $region19: #{decoder_forward.30} parent=0 // pred_check_branch
    %72 = sbr.rel (0) target = $region21
  $region20: #{decoder_forward.30} parent=0 // pred_region
    _
  $region21: #{decoder_forward.30} parent=0 // pred_fallthru
    _
  // Predicated region
  $region22: #{decoder_forward.30} parent=0 // pred_check
    _
  $region23: #{decoder_forward.30} parent=0 // pred_check_branch
    %74 = sbr.rel (0) target = $region25
  $region24: #{decoder_forward.30} parent=0 // pred_region
    _
  $region25: #{decoder_forward.30} parent=0 // pred_fallthru
    _

// kernel: decoder_forward.32
$region0: #{decoder_forward.32}
  #allocation0 [shape = 'u32[]', space=smem, size = 0x4, offset = 0x4, fixed_abs, tag = 'smem constant byte address 0x4 - core index']
  #allocation1 [shape = 'u32[144,128]{1,0:T(1,128)}', space=vmem, size = 0x12000, scoped, tag = 'internal scratch']
  #allocation2 [shape = 'f32[16,64]{1,0:T(8,128)}', space=vmem, size = 0x2000, scoped, tag = 'scratch operand']
  %s0 = inlined_call_operand.vmem [shape: f32[16,32], index: 0, kind: input, shape index: {}]
  %s1 = inlined_call_operand.vmem [shape: f32[32,64], index: 1, kind: input, shape index: {}]
  %s2 = inlined_call_operand.vmem [shape: f32[1,64], index: 2, kind: input, shape index: {}]
  %s3 = inlined_call_operand.vmem [shape: f32[16,64], index: 3, kind: output, shape index: {}]
  %s4 = sld [smem:[#allocation0]]
  $region30: #{decoder_forward.32} parent=0
    _
  %s6 = ssub.s32 1, %s4
  %s7 = scalar_select 0, %s6, %s4
  // Predicated region
  $region2: #{decoder_forward.32} parent=0 // pred_check
    _
  $region3: #{decoder_forward.32} parent=0 // pred_check_branch
    %9 = sbr.rel (0) target = $region5
  $region4: #{decoder_forward.32} parent=0 // pred_region
    _
  $region5: #{decoder_forward.32} parent=0 // pred_fallthru
    _
  // Predicated region
  $region6: #{decoder_forward.32} parent=0 // pred_check
    _
  $region7: #{decoder_forward.32} parent=0 // pred_check_branch
    %11 = sbr.rel (0) target = $region9
  $region8: #{decoder_forward.32} parent=0 // pred_region
    _
  $region9: #{decoder_forward.32} parent=0 // pred_fallthru
    _
  // Predicated region
  $region10: #{decoder_forward.32} parent=0 // pred_check
    _
  $region11: #{decoder_forward.32} parent=0 // pred_check_branch
    %13 = sbr.rel (0) target = $region13
  $region12: #{decoder_forward.32} parent=0 // pred_region
    _
  $region13: #{decoder_forward.32} parent=0 // pred_fallthru
    _
  %p14 = scmp.eq.s32.totalorder 0, 0
  // Predicated region
  $region14: #{decoder_forward.32} parent=0 // pred_check
    %p15 = pneg %p14
  $region15: #{decoder_forward.32} parent=0 // pred_check_branch
    %17 = sbr.rel (%p15) target = $region17
  $region16: #{decoder_forward.32} parent=0 // pred_region
    %vm18 = vcmask 523264
    %19 = vst.msk [vmem:[#allocation2] sm:$0xff] %vm18, 0.0
    %20 = vst.msk [vmem:[#allocation2 + $0x8] sm:$0xff] %vm18, 0.0
  $region17: #{decoder_forward.32} parent=0 // pred_fallthru
    _
  %v21 = vld [vmem:[#allocation2] sm:$0xff]
  %v22 = vld [vmem:[#allocation2 + $0x8] sm:$0xff]
  %v23 = vld [vmem:[%s0] sm:$0xff]
  %v24 = vld [vmem:[%s0 + $0x8] sm:$0xff]
  %v25 = vld [vmem:[%s1] sm:$0xff]
  %v26 = vld [vmem:[%s1 + $0x8] sm:$0xff]
  %v27 = vld [vmem:[%s1 + $0x10] sm:$0xff]
  %v28 = vld [vmem:[%s1 + $0x18] sm:$0xff]
  %vm29 = vcmask 261120
  %v31 = vsel %vm29, %v23, 0
  %v34 = vsel %vm29, %v24, 0
  %36 = vmatprep.subr.mxu0 0.0
  %37 = vmatpush1.msra.mxu0 %v25
  %38 = vmatprep.subr.mxu0 0.0
  %39 = vmatpush1.msra.mxu0 %v26
  %40 = vmatprep.subr.mxu0 0.0
  %41 = vmatpush1.msra.mxu0 %v27
  %42 = vmatprep.subr.mxu0 0.0
  %43 = vmatpush1.msra.mxu0 %v28
  %44 = vmatprep.subr.mxu0 0.0
  %45 = vmatpush1.msra.mxu0 0.0
  %46 = vmatprep.subr.mxu0 0.0
  %47 = vmatpush1.msra.mxu0 0.0
  %48 = vmatprep.subr.mxu0 0.0
  %49 = vmatpush1.msra.mxu0 0.0
  %50 = vmatprep.subr.mxu0 0.0
  %51 = vmatpush1.msra.mxu0 0.0
  %52 = vmatprep.subr.mxu0 0.0
  %53 = vmatpush1.msra.mxu0 0.0
  %54 = vmatprep.subr.mxu0 0.0
  %55 = vmatpush1.msra.mxu0 0.0
  %56 = vmatprep.subr.mxu0 0.0
  %57 = vmatpush1.msra.mxu0 0.0
  %58 = vmatprep.subr.mxu0 0.0
  %59 = vmatpush1.msra.mxu0 0.0
  %60 = vmatprep.subr.mxu0 0.0
  %61 = vmatpush1.msra.mxu0 0.0
  %62 = vmatprep.subr.mxu0 0.0
  %63 = vmatpush1.msra.mxu0 0.0
  %64 = vmatprep.subr.mxu0 0.0
  %65 = vmatpush1.msra.mxu0 0.0
  %66 = vmatprep.subr.mxu0 0.0
  %67 = vmatpush1.msra.mxu0 0.0
  %68 = vmatprep.subr.mxu0 0.0
  %69 = vmatpush1.msra.mxu0 0.0
  %70 = vmatprep.subr.mxu0 0.0
  %71 = vmatpush1.msra.mxu0 0.0
  %72 = vmatprep.subr.mxu0 0.0
  %73 = vmatpush1.msra.mxu0 0.0
  %74 = vmatprep.subr.mxu0 0.0
  %75 = vmatpush1.msra.mxu0 0.0
  %76 = vmatprep.subr.mxu0 0.0
  %77 = vmatpush1.msra.mxu0 0.0
  %78 = vmatprep.subr.mxu0 0.0
  %79 = vmatpush1.msra.mxu0 0.0
  %80 = vmatprep.subr.mxu0 0.0
  %81 = vmatpush1.msra.mxu0 0.0
  %82 = vmatprep.subr.mxu0 0.0
  %83 = vmatpush1.msra.mxu0 0.0
  %84 = vmatprep.subr.mxu0 0.0
  %85 = vmatpush1.msra.mxu0 0.0
  %86 = vmatprep.subr.mxu0 0.0
  %87 = vmatpush1.msra.mxu0 0.0
  %88 = vmatprep.subr.mxu0 0.0
  %89 = vmatpush1.msra.mxu0 0.0
  %90 = vmatprep.subr.mxu0 0.0
  %91 = vmatpush1.msra.mxu0 0.0
  %92 = vmatprep.subr.mxu0 0.0
  %93 = vmatpush1.msra.mxu0 0.0
  %94 = vmatprep.subr.mxu0 0.0
  %95 = vmatpush1.msra.mxu0 0.0
  %96 = vmatprep.subr.mxu0 0.0
  %97 = vmatpush1.msra.mxu0 0.0
  %98 = vmatprep.subr.mxu0 0.0
  %99 = vmatpush1.msra.mxu0 0.0
  %100 = vmatprep.mubr.f32.mxu0 0.0
  %101 = vmatmul.mubr.f32.gmra.mrb[0].mxu0 %v31
  %v102 = vpop.f32.mrb[0].mxu0
  %v103 = vadd.f32 0.0, %v102
  %v104 = vpop.f32.mrb[0].mxu0
  %105 = vmatprep.mubr.f32.mxu0 0.0
  %106 = vmatmul.mubr.f32.gmra.mrb[0].mxu0 %v34
  %v107 = vpop.f32.mrb[0].mxu0
  %v108 = vadd.f32 0.0, %v107
  %v109 = vpop.f32.mrb[0].mxu0
  %110 = vdwg.mxu0
  %v111 = vadd.f32 %v21, %v103
  %v112 = vadd.f32 %v22, %v108
  %vm113 = vcmask 523264
  %114 = vst.msk [vmem:[#allocation2] sm:$0xff] %vm113, %v111
  %115 = vst.msk [vmem:[#allocation2 + $0x8] sm:$0xff] %vm113, %v112
  // Predicated region
  $region18: #{decoder_forward.32} parent=0 // pred_check
    %p116 = pneg %p14
  $region19: #{decoder_forward.32} parent=0 // pred_check_branch
    %118 = sbr.rel (%p116) target = $region21
  $region20: #{decoder_forward.32} parent=0 // pred_region
    %v119 = vld [vmem:[#allocation2] sm:$0xff]
    %v120 = vld [vmem:[#allocation2 + $0x8] sm:$0xff]
    %v121 = vld [vmem:[%s2] sm:$0x1]
    %v123 = vlaneseq
    %v124 = vshrl.u32 %v123, 7
    %v125 = vsub.s32 0, %v124
    %v126 = vrot.slane %v121, %v125
    %v128 = vadd.f32 %v119, %v126
    %v129 = vadd.f32 %v120, %v126
    %130 = vst.msk [vmem:[%s3] sm:$0xff] %vm113, %v128
    %131 = vst.msk [vmem:[%s3 + $0x8] sm:$0xff] %vm113, %v129
  $region21: #{decoder_forward.32} parent=0 // pred_fallthru
    _
  // Predicated region
  $region22: #{decoder_forward.32} parent=0 // pred_check
    _
  $region23: #{decoder_forward.32} parent=0 // pred_check_branch
    %133 = sbr.rel (0) target = $region25
  $region24: #{decoder_forward.32} parent=0 // pred_region
    _
  $region25: #{decoder_forward.32} parent=0 // pred_fallthru
    _
  // Predicated region
  $region26: #{decoder_forward.32} parent=0 // pred_check
    _
  $region27: #{decoder_forward.32} parent=0 // pred_check_branch
    %135 = sbr.rel (0) target = $region29
  $region28: #{decoder_forward.32} parent=0 // pred_region
    _
  $region29: #{decoder_forward.32} parent=0 // pred_fallthru
    _

// kernel: decoder_forward.36
$region0: #{decoder_forward.36}
  #allocation0 [shape = 'u32[]', space=smem, size = 0x4, offset = 0x4, fixed_abs, tag = 'smem constant byte address 0x4 - core index']
  #allocation1 [shape = 'u32[144,128]{1,0:T(1,128)}', space=vmem, size = 0x12000, scoped, tag = 'internal scratch']
  #allocation2 [shape = 'f32[16,64]{1,0:T(8,128)}', space=vmem, size = 0x2000, scoped, tag = 'scratch operand']
  %s0 = inlined_call_operand.vmem [shape: f32[16,32], index: 0, kind: input, shape index: {}]
  %s1 = inlined_call_operand.vmem [shape: f32[32,64], index: 1, kind: input, shape index: {}]
  %s2 = inlined_call_operand.vmem [shape: f32[1,64], index: 2, kind: input, shape index: {}]
  %s3 = inlined_call_operand.vmem [shape: f32[16,64], index: 3, kind: output, shape index: {}]
  %s4 = sld [smem:[#allocation0]]
  $region30: #{decoder_forward.36} parent=0
    _
  %s6 = ssub.s32 1, %s4
  %s7 = scalar_select 0, %s6, %s4
  // Predicated region
  $region2: #{decoder_forward.36} parent=0 // pred_check
    _
  $region3: #{decoder_forward.36} parent=0 // pred_check_branch
    %9 = sbr.rel (0) target = $region5
  $region4: #{decoder_forward.36} parent=0 // pred_region
    _
  $region5: #{decoder_forward.36} parent=0 // pred_fallthru
    _
  // Predicated region
  $region6: #{decoder_forward.36} parent=0 // pred_check
    _
  $region7: #{decoder_forward.36} parent=0 // pred_check_branch
    %11 = sbr.rel (0) target = $region9
  $region8: #{decoder_forward.36} parent=0 // pred_region
    _
  $region9: #{decoder_forward.36} parent=0 // pred_fallthru
    _
  // Predicated region
  $region10: #{decoder_forward.36} parent=0 // pred_check
    _
  $region11: #{decoder_forward.36} parent=0 // pred_check_branch
    %13 = sbr.rel (0) target = $region13
  $region12: #{decoder_forward.36} parent=0 // pred_region
    _
  $region13: #{decoder_forward.36} parent=0 // pred_fallthru
    _
  %p14 = scmp.eq.s32.totalorder 0, 0
  // Predicated region
  $region14: #{decoder_forward.36} parent=0 // pred_check
    %p15 = pneg %p14
  $region15: #{decoder_forward.36} parent=0 // pred_check_branch
    %17 = sbr.rel (%p15) target = $region17
  $region16: #{decoder_forward.36} parent=0 // pred_region
    %vm18 = vcmask 523264
    %19 = vst.msk [vmem:[#allocation2] sm:$0xff] %vm18, 0.0
    %20 = vst.msk [vmem:[#allocation2 + $0x8] sm:$0xff] %vm18, 0.0
  $region17: #{decoder_forward.36} parent=0 // pred_fallthru
    _
  %v21 = vld [vmem:[#allocation2] sm:$0xff]
  %v22 = vld [vmem:[#allocation2 + $0x8] sm:$0xff]
  %v23 = vld [vmem:[%s0] sm:$0xff]
  %v24 = vld [vmem:[%s0 + $0x8] sm:$0xff]
  %v25 = vld [vmem:[%s1] sm:$0xff]
  %v26 = vld [vmem:[%s1 + $0x8] sm:$0xff]
  %v27 = vld [vmem:[%s1 + $0x10] sm:$0xff]
  %v28 = vld [vmem:[%s1 + $0x18] sm:$0xff]
  %vm29 = vcmask 261120
  %v31 = vsel %vm29, %v23, 0
  %v34 = vsel %vm29, %v24, 0
  %36 = vmatprep.subr.mxu0 0.0
  %37 = vmatpush1.msra.mxu0 %v25
  %38 = vmatprep.subr.mxu0 0.0
  %39 = vmatpush1.msra.mxu0 %v26
  %40 = vmatprep.subr.mxu0 0.0
  %41 = vmatpush1.msra.mxu0 %v27
  %42 = vmatprep.subr.mxu0 0.0
  %43 = vmatpush1.msra.mxu0 %v28
  %44 = vmatprep.subr.mxu0 0.0
  %45 = vmatpush1.msra.mxu0 0.0
  %46 = vmatprep.subr.mxu0 0.0
  %47 = vmatpush1.msra.mxu0 0.0
  %48 = vmatprep.subr.mxu0 0.0
  %49 = vmatpush1.msra.mxu0 0.0
  %50 = vmatprep.subr.mxu0 0.0
  %51 = vmatpush1.msra.mxu0 0.0
  %52 = vmatprep.subr.mxu0 0.0
  %53 = vmatpush1.msra.mxu0 0.0
  %54 = vmatprep.subr.mxu0 0.0
  %55 = vmatpush1.msra.mxu0 0.0
  %56 = vmatprep.subr.mxu0 0.0
  %57 = vmatpush1.msra.mxu0 0.0
  %58 = vmatprep.subr.mxu0 0.0
  %59 = vmatpush1.msra.mxu0 0.0
  %60 = vmatprep.subr.mxu0 0.0
  %61 = vmatpush1.msra.mxu0 0.0
  %62 = vmatprep.subr.mxu0 0.0
  %63 = vmatpush1.msra.mxu0 0.0
  %64 = vmatprep.subr.mxu0 0.0
  %65 = vmatpush1.msra.mxu0 0.0
  %66 = vmatprep.subr.mxu0 0.0
  %67 = vmatpush1.msra.mxu0 0.0
  %68 = vmatprep.subr.mxu0 0.0
  %69 = vmatpush1.msra.mxu0 0.0
  %70 = vmatprep.subr.mxu0 0.0
  %71 = vmatpush1.msra.mxu0 0.0
  %72 = vmatprep.subr.mxu0 0.0
  %73 = vmatpush1.msra.mxu0 0.0
  %74 = vmatprep.subr.mxu0 0.0
  %75 = vmatpush1.msra.mxu0 0.0
  %76 = vmatprep.subr.mxu0 0.0
  %77 = vmatpush1.msra.mxu0 0.0
  %78 = vmatprep.subr.mxu0 0.0
  %79 = vmatpush1.msra.mxu0 0.0
  %80 = vmatprep.subr.mxu0 0.0
  %81 = vmatpush1.msra.mxu0 0.0
  %82 = vmatprep.subr.mxu0 0.0
  %83 = vmatpush1.msra.mxu0 0.0
  %84 = vmatprep.subr.mxu0 0.0
  %85 = vmatpush1.msra.mxu0 0.0
  %86 = vmatprep.subr.mxu0 0.0
  %87 = vmatpush1.msra.mxu0 0.0
  %88 = vmatprep.subr.mxu0 0.0
  %89 = vmatpush1.msra.mxu0 0.0
  %90 = vmatprep.subr.mxu0 0.0
  %91 = vmatpush1.msra.mxu0 0.0
  %92 = vmatprep.subr.mxu0 0.0
  %93 = vmatpush1.msra.mxu0 0.0
  %94 = vmatprep.subr.mxu0 0.0
  %95 = vmatpush1.msra.mxu0 0.0
  %96 = vmatprep.subr.mxu0 0.0
  %97 = vmatpush1.msra.mxu0 0.0
  %98 = vmatprep.subr.mxu0 0.0
  %99 = vmatpush1.msra.mxu0 0.0
  %100 = vmatprep.mubr.f32.mxu0 0.0
  %101 = vmatmul.mubr.f32.gmra.mrb[0].mxu0 %v31
  %v102 = vpop.f32.mrb[0].mxu0
  %v103 = vadd.f32 0.0, %v102
  %v104 = vpop.f32.mrb[0].mxu0
  %105 = vmatprep.mubr.f32.mxu0 0.0
  %106 = vmatmul.mubr.f32.gmra.mrb[0].mxu0 %v34
  %v107 = vpop.f32.mrb[0].mxu0
  %v108 = vadd.f32 0.0, %v107
  %v109 = vpop.f32.mrb[0].mxu0
  %110 = vdwg.mxu0
  %v111 = vadd.f32 %v21, %v103
  %v112 = vadd.f32 %v22, %v108
  %vm113 = vcmask 523264
  %114 = vst.msk [vmem:[#allocation2] sm:$0xff] %vm113, %v111
  %115 = vst.msk [vmem:[#allocation2 + $0x8] sm:$0xff] %vm113, %v112
  // Predicated region
  $region18: #{decoder_forward.36} parent=0 // pred_check
    %p116 = pneg %p14
  $region19: #{decoder_forward.36} parent=0 // pred_check_branch
    %118 = sbr.rel (%p116) target = $region21
  $region20: #{decoder_forward.36} parent=0 // pred_region
    %v119 = vld [vmem:[#allocation2] sm:$0xff]
    %v120 = vld [vmem:[#allocation2 + $0x8] sm:$0xff]
    %v121 = vld [vmem:[%s2] sm:$0x1]
    %v123 = vlaneseq
    %v124 = vshrl.u32 %v123, 7
    %v125 = vsub.s32 0, %v124
    %v126 = vrot.slane %v121, %v125
    %v128 = vadd.f32 %v119, %v126
    %v129 = vadd.f32 %v120, %v126
    %v130 = vmax.f32 %v128, 0.0
    %v131 = vmax.f32 %v129, 0.0
    %132 = vst.msk [vmem:[%s3] sm:$0xff] %vm113, %v130
    %133 = vst.msk [vmem:[%s3 + $0x8] sm:$0xff] %vm113, %v131
  $region21: #{decoder_forward.36} parent=0 // pred_fallthru
    _
  // Predicated region
  $region22: #{decoder_forward.36} parent=0 // pred_check
    _
  $region23: #{decoder_forward.36} parent=0 // pred_check_branch
    %135 = sbr.rel (0) target = $region25
  $region24: #{decoder_forward.36} parent=0 // pred_region
    _
  $region25: #{decoder_forward.36} parent=0 // pred_fallthru
    _
  // Predicated region
  $region26: #{decoder_forward.36} parent=0 // pred_check
    _
  $region27: #{decoder_forward.36} parent=0 // pred_check_branch
    %137 = sbr.rel (0) target = $region29
  $region28: #{decoder_forward.36} parent=0 // pred_region
    _
  $region29: #{decoder_forward.36} parent=0 // pred_fallthru
    _

// kernel: decoder_forward.37
$region0: #{decoder_forward.37}
  #allocation0 [shape = 'u32[]', space=smem, size = 0x4, offset = 0x4, fixed_abs, tag = 'smem constant byte address 0x4 - core index']
  #allocation1 [shape = 'u32[144,128]{1,0:T(1,128)}', space=vmem, size = 0x12000, scoped, tag = 'internal scratch']
  #allocation2 [shape = 'f32[16,32]{1,0:T(8,128)}', space=vmem, size = 0x2000, scoped, tag = 'scratch operand']
  %s0 = inlined_call_operand.vmem [shape: f32[16,64], index: 0, kind: input, shape index: {}]
  %s1 = inlined_call_operand.vmem [shape: f32[64,32], index: 1, kind: input, shape index: {}]
  %s2 = inlined_call_operand.vmem [shape: f32[1,32], index: 2, kind: input, shape index: {}]
  %s3 = inlined_call_operand.vmem [shape: f32[16,32], index: 3, kind: output, shape index: {}]
  %s4 = sld [smem:[#allocation0]]
  $region30: #{decoder_forward.37} parent=0
    _
  %s6 = ssub.s32 1, %s4
  %s7 = scalar_select 0, %s6, %s4
  // Predicated region
  $region2: #{decoder_forward.37} parent=0 // pred_check
    _
  $region3: #{decoder_forward.37} parent=0 // pred_check_branch
    %9 = sbr.rel (0) target = $region5
  $region4: #{decoder_forward.37} parent=0 // pred_region
    _
  $region5: #{decoder_forward.37} parent=0 // pred_fallthru
    _
  // Predicated region
  $region6: #{decoder_forward.37} parent=0 // pred_check
    _
  $region7: #{decoder_forward.37} parent=0 // pred_check_branch
    %11 = sbr.rel (0) target = $region9
  $region8: #{decoder_forward.37} parent=0 // pred_region
    _
  $region9: #{decoder_forward.37} parent=0 // pred_fallthru
    _
  // Predicated region
  $region10: #{decoder_forward.37} parent=0 // pred_check
    _
  $region11: #{decoder_forward.37} parent=0 // pred_check_branch
    %13 = sbr.rel (0) target = $region13
  $region12: #{decoder_forward.37} parent=0 // pred_region
    _
  $region13: #{decoder_forward.37} parent=0 // pred_fallthru
    _
  %p14 = scmp.eq.s32.totalorder 0, 0
  // Predicated region
  $region14: #{decoder_forward.37} parent=0 // pred_check
    %p15 = pneg %p14
  $region15: #{decoder_forward.37} parent=0 // pred_check_branch
    %17 = sbr.rel (%p15) target = $region17
  $region16: #{decoder_forward.37} parent=0 // pred_region
    %vm18 = vcmask 261120
    %19 = vst.msk [vmem:[#allocation2] sm:$0xff] %vm18, 0.0
    %20 = vst.msk [vmem:[#allocation2 + $0x8] sm:$0xff] %vm18, 0.0
  $region17: #{decoder_forward.37} parent=0 // pred_fallthru
    _
  %v21 = vld [vmem:[#allocation2] sm:$0xff]
  %v22 = vld [vmem:[#allocation2 + $0x8] sm:$0xff]
  %v23 = vld [vmem:[%s0] sm:$0xff]
  %v24 = vld [vmem:[%s0 + $0x8] sm:$0xff]
  %v25 = vld [vmem:[%s1] sm:$0xff]
  %v26 = vld [vmem:[%s1 + $0x8] sm:$0xff]
  %v27 = vld [vmem:[%s1 + $0x10] sm:$0xff]
  %v28 = vld [vmem:[%s1 + $0x18] sm:$0xff]
  %v29 = vld [vmem:[%s1 + $0x20] sm:$0xff]
  %v30 = vld [vmem:[%s1 + $0x28] sm:$0xff]
  %v31 = vld [vmem:[%s1 + $0x30] sm:$0xff]
  %v32 = vld [vmem:[%s1 + $0x38] sm:$0xff]
  %vm33 = vcmask 523264
  %v35 = vsel %vm33, %v23, 0
  %v38 = vsel %vm33, %v24, 0
  %40 = vmatprep.subr.mxu0 0.0
  %41 = vmatpush1.msra.mxu0 %v25
  %42 = vmatprep.subr.mxu0 0.0
  %43 = vmatpush1.msra.mxu0 %v26
  %44 = vmatprep.subr.mxu0 0.0
  %45 = vmatpush1.msra.mxu0 %v27
  %46 = vmatprep.subr.mxu0 0.0
  %47 = vmatpush1.msra.mxu0 %v28
  %48 = vmatprep.subr.mxu0 0.0
  %49 = vmatpush1.msra.mxu0 %v29
  %50 = vmatprep.subr.mxu0 0.0
  %51 = vmatpush1.msra.mxu0 %v30
  %52 = vmatprep.subr.mxu0 0.0
  %53 = vmatpush1.msra.mxu0 %v31
  %54 = vmatprep.subr.mxu0 0.0
  %55 = vmatpush1.msra.mxu0 %v32
  %56 = vmatprep.subr.mxu0 0.0
  %57 = vmatpush1.msra.mxu0 0.0
  %58 = vmatprep.subr.mxu0 0.0
  %59 = vmatpush1.msra.mxu0 0.0
  %60 = vmatprep.subr.mxu0 0.0
  %61 = vmatpush1.msra.mxu0 0.0
  %62 = vmatprep.subr.mxu0 0.0
  %63 = vmatpush1.msra.mxu0 0.0
  %64 = vmatprep.subr.mxu0 0.0
  %65 = vmatpush1.msra.mxu0 0.0
  %66 = vmatprep.subr.mxu0 0.0
  %67 = vmatpush1.msra.mxu0 0.0
  %68 = vmatprep.subr.mxu0 0.0
  %69 = vmatpush1.msra.mxu0 0.0
  %70 = vmatprep.subr.mxu0 0.0
  %71 = vmatpush1.msra.mxu0 0.0
  %72 = vmatprep.subr.mxu0 0.0
  %73 = vmatpush1.msra.mxu0 0.0
  %74 = vmatprep.subr.mxu0 0.0
  %75 = vmatpush1.msra.mxu0 0.0
  %76 = vmatprep.subr.mxu0 0.0
  %77 = vmatpush1.msra.mxu0 0.0
  %78 = vmatprep.subr.mxu0 0.0
  %79 = vmatpush1.msra.mxu0 0.0
  %80 = vmatprep.subr.mxu0 0.0
  %81 = vmatpush1.msra.mxu0 0.0
  %82 = vmatprep.subr.mxu0 0.0
  %83 = vmatpush1.msra.mxu0 0.0
  %84 = vmatprep.subr.mxu0 0.0
  %85 = vmatpush1.msra.mxu0 0.0
  %86 = vmatprep.subr.mxu0 0.0
  %87 = vmatpush1.msra.mxu0 0.0
  %88 = vmatprep.subr.mxu0 0.0
  %89 = vmatpush1.msra.mxu0 0.0
  %90 = vmatprep.subr.mxu0 0.0
  %91 = vmatpush1.msra.mxu0 0.0
  %92 = vmatprep.subr.mxu0 0.0
  %93 = vmatpush1.msra.mxu0 0.0
  %94 = vmatprep.subr.mxu0 0.0
  %95 = vmatpush1.msra.mxu0 0.0
  %96 = vmatprep.subr.mxu0 0.0
  %97 = vmatpush1.msra.mxu0 0.0
  %98 = vmatprep.subr.mxu0 0.0
  %99 = vmatpush1.msra.mxu0 0.0
  %100 = vmatprep.subr.mxu0 0.0
  %101 = vmatpush1.msra.mxu0 0.0
  %102 = vmatprep.subr.mxu0 0.0
  %103 = vmatpush1.msra.mxu0 0.0
  %104 = vmatprep.mubr.f32.mxu0 0.0
  %105 = vmatmul.mubr.f32.gmra.mrb[0].mxu0 %v35
  %v106 = vpop.f32.mrb[0].mxu0
  %v107 = vadd.f32 0.0, %v106
  %v108 = vpop.f32.mrb[0].mxu0
  %109 = vmatprep.mubr.f32.mxu0 0.0
  %110 = vmatmul.mubr.f32.gmra.mrb[0].mxu0 %v38
  %v111 = vpop.f32.mrb[0].mxu0
  %v112 = vadd.f32 0.0, %v111
  %v113 = vpop.f32.mrb[0].mxu0
  %114 = vdwg.mxu0
  %v115 = vadd.f32 %v21, %v107
  %v116 = vadd.f32 %v22, %v112
  %vm117 = vcmask 261120
  %118 = vst.msk [vmem:[#allocation2] sm:$0xff] %vm117, %v115
  %119 = vst.msk [vmem:[#allocation2 + $0x8] sm:$0xff] %vm117, %v116
  // Predicated region
  $region18: #{decoder_forward.37} parent=0 // pred_check
    %p120 = pneg %p14
  $region19: #{decoder_forward.37} parent=0 // pred_check_branch
    %122 = sbr.rel (%p120) target = $region21
  $region20: #{decoder_forward.37} parent=0 // pred_region
    %v123 = vld [vmem:[#allocation2] sm:$0xff]
    %v124 = vld [vmem:[#allocation2 + $0x8] sm:$0xff]
    %v125 = vld [vmem:[%s2] sm:$0x1]
    %v127 = vlaneseq
    %v128 = vshrl.u32 %v127, 7
    %v129 = vsub.s32 0, %v128
    %v130 = vrot.slane %v125, %v129
    %v132 = vadd.f32 %v123, %v130
    %v133 = vadd.f32 %v124, %v130
    %134 = vst.msk [vmem:[%s3] sm:$0xff] %vm117, %v132
    %135 = vst.msk [vmem:[%s3 + $0x8] sm:$0xff] %vm117, %v133
  $region21: #{decoder_forward.37} parent=0 // pred_fallthru
    _
  // Predicated region
  $region22: #{decoder_forward.37} parent=0 // pred_check
    _
  $region23: #{decoder_forward.37} parent=0 // pred_check_branch
    %137 = sbr.rel (0) target = $region25
  $region24: #{decoder_forward.37} parent=0 // pred_region
    _
  $region25: #{decoder_forward.37} parent=0 // pred_fallthru
    _
  // Predicated region
  $region26: #{decoder_forward.37} parent=0 // pred_check
    _
  $region27: #{decoder_forward.37} parent=0 // pred_check_branch
    %139 = sbr.rel (0) target = $region29
  $region28: #{decoder_forward.37} parent=0 // pred_region
    _
  $region29: #{decoder_forward.37} parent=0 // pred_fallthru
    _

// kernel: decoder_forward.33
$region0: #{decoder_forward.33}
  #allocation0 [shape = 'u32[]', space=smem, size = 0x4, offset = 0x4, fixed_abs, tag = 'smem constant byte address 0x4 - core index']
  #allocation1 [shape = 'u32[144,128]{1,0:T(1,128)}', space=vmem, size = 0x12000, scoped, tag = 'internal scratch']
  #allocation2 [shape = 'f32[4,8,1]{2,1,0:T(8,128)}', space=vmem, size = 0x4000, scoped, tag = 'scratch operand']
  #allocation3 [shape = 'f32[4,8,1]{2,1,0:T(8,128)}', space=vmem, size = 0x4000, scoped, tag = 'scratch operand']
  #allocation4 [shape = 'f32[4,8,8]{2,1,0:T(8,128)}', space=vmem, size = 0x4000, scoped, tag = 'scratch operand']
  %s0 = inlined_call_operand.vmem [shape: f32[2,4,8,8], index: 0, kind: input, shape index: {}]
  %s1 = inlined_call_operand.vmem [shape: f32[2,4,8,8], index: 1, kind: input, shape index: {}]
  %s2 = inlined_call_operand.vmem [shape: f32[2,4,8,8], index: 2, kind: input, shape index: {}]
  %s3 = inlined_call_operand.vmem [shape: f32[2,1,1,8], index: 3, kind: input, shape index: {}]
  %s4 = inlined_call_operand.vmem [shape: f32[2,4,8,8], index: 4, kind: output, shape index: {}]
  %s5 = sld [smem:[#allocation0]]
  $region57: #{decoder_forward.33} parent=0
    _
  %s7 = ssub.s32 1, %s5
  %s8 = scalar_select 0, %s7, %s5
  loop: start=0, step=1, limit=4
  $region2: #{decoder_forward.33} parent=0 // loop_pre_header
    _
  $region3: #{decoder_forward.33} parent=0 // loop_header
    %s10 = sphi 0, %s14
    %p11 = scmp.ge.s32.totalorder %s10, 4
    %s17 = sphi 0, %s29
    %s18 = sphi 0, %s25
    %s19 = sphi 0, %s17
    %s20 = sphi 0, %s18
    %s21 = sphi 0, %s19
    %s22 = sphi 0, %s20
    %s32 = sphi 0, %s34
    %s35 = sphi 0, %s32
    %s36 = sphi 0, %s35
    %s52 = sphi 0, %s36
    %s60 = sphi 0, %s62
    %s63 = sphi 0, %s60
    %s64 = sphi 0, %s63
    %s80 = sphi 0, %s64
    %s88 = sphi 0, %s90
    %s91 = sphi 0, %s88
    %s92 = sphi 0, %s91
    %s108 = sphi 0, %s92
    %s116 = sphi 0, %s118
    %s119 = sphi 0, %s116
    %s120 = sphi 0, %s119
    %s136 = sphi 0, %s120
    %s142 = sphi 0, %s144
    %s145 = sphi 0, %s142
    %s146 = sphi 0, %s145
    %s162 = sphi 0, %s146
  $region4: #{decoder_forward.33} parent=0 // loop_header_branch
    %13 = sbr.rel (%p11) target = $region8
  $region5: #{decoder_forward.33} parent=0 // loop_body
    %s15 = ssub.s32 %s10, 1
    %s16 = ssub.s32 %s10, 2
    %s23 = sadd.s32 1, %s18
    %p24 = scmp.ge.s32.totalorder %s23, 1
    %s25 = scalar_select %p24, 0, %s23
    %s26 = sadd.s32 1, %s17
    %s27 = scalar_select %p24, %s26, %s17
    %p28 = scmp.ge.s32.totalorder %s27, 2
    %s29 = scalar_select %p28, 0, %s27
    %s30 = ssub.s32 %s17, %s29
    %p31 = scmp.eq.s32.totalorder %s30, 0
    %s33 = sadd.s32 %s32, 1
    %s34 = scalar_select %p31, %s32, %s33
    %p37 = pneg %p31
    %p38 = scmp.eq.s32.totalorder %s10, 1
    %p39 = por %p37, %p38
    %p40 = scmp.ne.s32.totalorder %s32, %s35
    %p41 = scmp.eq.s32.totalorder %s10, 0
    %p42 = por %p40, %p41
    %p43 = scmp.ne.s32.totalorder %s32, %s35
    %p44 = scmp.eq.s32.totalorder %s15, 1
    %p45 = por %p43, %p44
    %p46 = scmp.ne.s32.totalorder %s35, %s36
    %p47 = scmp.eq.s32.totalorder %s15, 0
    %p48 = por %p46, %p47
    %p49 = scmp.ne.s32.totalorder %s35, %s36
    %p50 = scmp.eq.s32.totalorder %s16, 1
    %p51 = por %p49, %p50
    %p53 = scmp.ne.s32.totalorder %s36, %s52
    %p54 = scmp.eq.s32.totalorder %s16, 0
    %p55 = por %p53, %p54
    %s56 = ssub.s32 %s17, %s29
    %s57 = ssub.s32 %s18, %s25
    %s58 = sor.u32 %s56, %s57
    %p59 = scmp.eq.s32.totalorder %s58, 0
    %s61 = sadd.s32 %s60, 1
    %s62 = scalar_select %p59, %s60, %s61
    %p65 = pneg %p59
    %p66 = scmp.eq.s32.totalorder %s10, 1
    %p67 = por %p65, %p66
    %p68 = scmp.ne.s32.totalorder %s60, %s63
    %p69 = scmp.eq.s32.totalorder %s10, 0
    %p70 = por %p68, %p69
    %p71 = scmp.ne.s32.totalorder %s60, %s63
    %p72 = scmp.eq.s32.totalorder %s15, 1
    %p73 = por %p71, %p72
    %p74 = scmp.ne.s32.totalorder %s63, %s64
    %p75 = scmp.eq.s32.totalorder %s15, 0
    %p76 = por %p74, %p75
    %p77 = scmp.ne.s32.totalorder %s63, %s64
    %p78 = scmp.eq.s32.totalorder %s16, 1
    %p79 = por %p77, %p78
    %p81 = scmp.ne.s32.totalorder %s64, %s80
    %p82 = scmp.eq.s32.totalorder %s16, 0
    %p83 = por %p81, %p82
    %s84 = ssub.s32 %s17, %s29
    %s85 = ssub.s32 %s18, %s25
    %s86 = sor.u32 %s84, %s85
    %p87 = scmp.eq.s32.totalorder %s86, 0
    %s89 = sadd.s32 %s88, 1
    %s90 = scalar_select %p87, %s88, %s89
    %p93 = pneg %p87
    %p94 = scmp.eq.s32.totalorder %s10, 1
    %p95 = por %p93, %p94
    %p96 = scmp.ne.s32.totalorder %s88, %s91
    %p97 = scmp.eq.s32.totalorder %s10, 0
    %p98 = por %p96, %p97
    %p99 = scmp.ne.s32.totalorder %s88, %s91
    %p100 = scmp.eq.s32.totalorder %s15, 1
    %p101 = por %p99, %p100
    %p102 = scmp.ne.s32.totalorder %s91, %s92
    %p103 = scmp.eq.s32.totalorder %s15, 0
    %p104 = por %p102, %p103
    %p105 = scmp.ne.s32.totalorder %s91, %s92
    %p106 = scmp.eq.s32.totalorder %s16, 1
    %p107 = por %p105, %p106
    %p109 = scmp.ne.s32.totalorder %s92, %s108
    %p110 = scmp.eq.s32.totalorder %s16, 0
    %p111 = por %p109, %p110
    %s112 = ssub.s32 %s17, %s29
    %s113 = ssub.s32 %s18, %s25
    %s114 = sor.u32 %s112, %s113
    %p115 = scmp.eq.s32.totalorder %s114, 0
    %s117 = sadd.s32 %s116, 1
    %s118 = scalar_select %p115, %s116, %s117
    %p121 = pneg %p115
    %p122 = scmp.eq.s32.totalorder %s10, 1
    %p123 = por %p121, %p122
    %p124 = scmp.ne.s32.totalorder %s116, %s119
    %p125 = scmp.eq.s32.totalorder %s10, 0
    %p126 = por %p124, %p125
    %p127 = scmp.ne.s32.totalorder %s116, %s119
    %p128 = scmp.eq.s32.totalorder %s15, 1
    %p129 = por %p127, %p128
    %p130 = scmp.ne.s32.totalorder %s119, %s120
    %p131 = scmp.eq.s32.totalorder %s15, 0
    %p132 = por %p130, %p131
    %p133 = scmp.ne.s32.totalorder %s119, %s120
    %p134 = scmp.eq.s32.totalorder %s16, 1
    %p135 = por %p133, %p134
    %p137 = scmp.ne.s32.totalorder %s120, %s136
    %p138 = scmp.eq.s32.totalorder %s16, 0
    %p139 = por %p137, %p138
    %s140 = ssub.s32 %s17, %s29
    %p141 = scmp.eq.s32.totalorder %s140, 0
    %s143 = sadd.s32 %s142, 1
    %s144 = scalar_select %p141, %s142, %s143
    %p147 = pneg %p141
    %p148 = scmp.eq.s32.totalorder %s10, 1
    %p149 = por %p147, %p148
    %p150 = scmp.ne.s32.totalorder %s142, %s145
    %p151 = scmp.eq.s32.totalorder %s10, 0
    %p152 = por %p150, %p151
    %p153 = scmp.ne.s32.totalorder %s142, %s145
    %p154 = scmp.eq.s32.totalorder %s15, 1
    %p155 = por %p153, %p154
    %p156 = scmp.ne.s32.totalorder %s145, %s146
    %p157 = scmp.eq.s32.totalorder %s15, 0
    %p158 = por %p156, %p157
    %p159 = scmp.ne.s32.totalorder %s145, %s146
    %p160 = scmp.eq.s32.totalorder %s16, 1
    %p161 = por %p159, %p160
    %p163 = scmp.ne.s32.totalorder %s146, %s162
    %p164 = scmp.eq.s32.totalorder %s16, 0
    %p165 = por %p163, %p164
    %p166 = scmp.le.s32.totalorder 1, %s10
    %p167 = scmp.lt.s32.totalorder %s10, 3
    %p168 = pnand %p166, %p167
    %p169 = pneg %p168
    // Predicated region
    $region9: #{decoder_forward.33} parent=5 // pred_check
      _
    $region10: #{decoder_forward.33} parent=5 // pred_check_branch
      %171 = sbr.rel (%p168) target = $region12
    $region11: #{decoder_forward.33} parent=5 // pred_region
      %s172 = ssub.s32 %s10, 1
    $region12: #{decoder_forward.33} parent=5 // pred_fallthru
      _
    %p173 = scmp.lt.s32.totalorder %s10, 2
    // Predicated region
    $region13: #{decoder_forward.33} parent=5 // pred_check
      %p174 = pneg %p173
    $region14: #{decoder_forward.33} parent=5 // pred_check_branch
      %176 = sbr.rel (%p174) target = $region16
    $region15: #{decoder_forward.33} parent=5 // pred_region
      // Predicated region
      $region17: #{decoder_forward.33} parent=15 // pred_check
        %p177 = pneg %p42
      $region18: #{decoder_forward.33} parent=15 // pred_check_branch
        %179 = sbr.rel (%p177) target = $region20
      $region19: #{decoder_forward.33} parent=15 // pred_region
        %p180 = scmp.lt.s32.totalorder %s17, 1
        %s181 = scalar_select %p180, %s17, 1
        %s182 = smul.addr %s181, 4
        %s183 = smul.addr %s182, 8
        %s184 = scalar_lea.vmem %s0, %s183
      $region20: #{decoder_forward.33} parent=15 // pred_fallthru
        _
      // Predicated region
      $region21: #{decoder_forward.33} parent=15 // pred_check
        %p185 = pneg %p70
      $region22: #{decoder_forward.33} parent=15 // pred_check_branch
        %187 = sbr.rel (%p185) target = $region24
      $region23: #{decoder_forward.33} parent=15 // pred_region
        %p188 = scmp.lt.s32.totalorder %s17, 1
        %s189 = scalar_select %p188, %s17, 1
        %p190 = scmp.lt.s32.totalorder %s18, 0
        %s191 = scalar_select %p190, %s18, 0
        %s192 = smul.addr %s189, 4
        %s193 = sadd.s32 %s191, %s192
        %s194 = smul.addr %s193, 8
        %s195 = scalar_lea.vmem %s1, %s194
      $region24: #{decoder_forward.33} parent=15 // pred_fallthru
        _
      // Predicated region
      $region25: #{decoder_forward.33} parent=15 // pred_check
        %p196 = pneg %p98
      $region26: #{decoder_forward.33} parent=15 // pred_check_branch
        %198 = sbr.rel (%p196) target = $region28
      $region27: #{decoder_forward.33} parent=15 // pred_region
        %p199 = scmp.lt.s32.totalorder %s17, 1
        %s200 = scalar_select %p199, %s17, 1
        %p201 = scmp.lt.s32.totalorder %s18, 0
        %s202 = scalar_select %p201, %s18, 0
        %s203 = smul.addr %s200, 4
        %s204 = sadd.s32 %s202, %s203
        %s205 = smul.addr %s204, 8
        %s206 = scalar_lea.vmem %s2, %s205
      $region28: #{decoder_forward.33} parent=15 // pred_fallthru
        _
      // Predicated region
      $region29: #{decoder_forward.33} parent=15 // pred_check
        %p207 = pneg %p126
      $region30: #{decoder_forward.33} parent=15 // pred_check_branch
        %209 = sbr.rel (%p207) target = $region32
      $region31: #{decoder_forward.33} parent=15 // pred_region
        %p210 = scmp.lt.s32.totalorder %s17, 1
        %s211 = scalar_select %p210, %s17, 1
        %p212 = scmp.lt.s32.totalorder %s18, 0
        %s213 = scalar_select %p212, %s18, 0
        %s214 = sadd.s32 %s213, %s211
        %s215 = scalar_lea.vmem %s3, %s214
      $region32: #{decoder_forward.33} parent=15 // pred_fallthru
        _
    $region16: #{decoder_forward.33} parent=5 // pred_fallthru
      _
    %p216 = scmp.le.s32.totalorder 1, %s10
    %p217 = scmp.lt.s32.totalorder %s10, 3
    %p218 = pnand %p216, %p217
    %p219 = pneg %p218
    // Predicated region
    $region33: #{decoder_forward.33} parent=5 // pred_check
      _
    $region34: #{decoder_forward.33} parent=5 // pred_check_branch
      %221 = sbr.rel (%p218) target = $region36
    $region35: #{decoder_forward.33} parent=5 // pred_region
      %s222 = ssub.s32 %s10, 1
      %p223 = scmp.lt.s32.totalorder %s19, 1
      %s224 = scalar_select %p223, %s19, 1
      %s225 = smul.addr %s224, 4
      %s226 = smul.addr %s225, 8
      %s227 = scalar_lea.vmem %s0, %s226
      %p228 = pneg %p48
      %p229 = pneg %p45
      %p230 = scmp.lt.s32.totalorder %s19, 1
      %s231 = scalar_select %p230, %s19, 1
      %p232 = scmp.lt.s32.totalorder %s20, 0
      %s233 = scalar_select %p232, %s20, 0
      %s234 = smul.addr %s231, 4
      %s235 = sadd.s32 %s233, %s234
      %s236 = smul.addr %s235, 8
      %s237 = scalar_lea.vmem %s1, %s236
      %p238 = pneg %p76
      %p239 = pneg %p73
      %p240 = scmp.lt.s32.totalorder %s19, 1
      %s241 = scalar_select %p240, %s19, 1
      %p242 = scmp.lt.s32.totalorder %s20, 0
      %s243 = scalar_select %p242, %s20, 0
      %s244 = smul.addr %s241, 4
      %s245 = sadd.s32 %s243, %s244
      %s246 = smul.addr %s245, 8
      %s247 = scalar_lea.vmem %s2, %s246
      %p248 = pneg %p104
      %p249 = pneg %p101
      %p250 = scmp.lt.s32.totalorder %s19, 1
      %s251 = scalar_select %p250, %s19, 1
      %p252 = scmp.lt.s32.totalorder %s20, 0
      %s253 = scalar_select %p252, %s20, 0
      %s254 = sadd.s32 %s253, %s251
      %s255 = scalar_lea.vmem %s3, %s254
      %p256 = pneg %p132
      %p257 = pneg %p129
      %p258 = pneg %p158
      %p259 = pneg %p155
      %p260 = scmp.lt.s32.totalorder %s19, 1
      %s261 = scalar_select %p260, %s19, 1
      %s262 = smul.addr %s261, 4
      %s263 = smul.addr %s262, 8
      %s264 = scalar_lea.vmem %s4, %s263
      %p265 = scmp.lt.s32.totalorder %s19, 1
      %s266 = scalar_select %p265, %s19, 1
      %s267 = smul.addr %s266, 4
      %s268 = smul.addr %s267, 8
      %s269 = scalar_lea.vmem %s0, %s268
      %p270 = scmp.lt.s32.totalorder %s19, 1
      %s271 = scalar_select %p270, %s19, 1
      %p272 = scmp.lt.s32.totalorder %s20, 0
      %s273 = scalar_select %p272, %s20, 0
      %s274 = smul.addr %s271, 4
      %s275 = sadd.s32 %s273, %s274
      %s276 = smul.addr %s275, 8
      %s277 = scalar_lea.vmem %s1, %s276
      %p278 = scmp.lt.s32.totalorder %s19, 1
      %s279 = scalar_select %p278, %s19, 1
      %p280 = scmp.lt.s32.totalorder %s20, 0
      %s281 = scalar_select %p280, %s20, 0
      %s282 = smul.addr %s279, 4
      %s283 = sadd.s32 %s281, %s282
      %s284 = smul.addr %s283, 8
      %s285 = scalar_lea.vmem %s2, %s284
      %p286 = scmp.lt.s32.totalorder %s19, 1
      %s287 = scalar_select %p286, %s19, 1
      %p288 = scmp.lt.s32.totalorder %s20, 0
      %s289 = scalar_select %p288, %s20, 0
      %s290 = sadd.s32 %s289, %s287
      %s291 = scalar_lea.vmem %s3, %s290
      %p292 = scmp.lt.s32.totalorder %s19, 1
      %s293 = scalar_select %p292, %s19, 1
      %s294 = smul.addr %s293, 4
      %s295 = smul.addr %s294, 8
      %s296 = scalar_lea.vmem %s4, %s295
      %p297 = scmp.eq.s32.totalorder %s20, 0
      // Predicated region
      $region37: #{decoder_forward.33} parent=35 // pred_check
        %p298 = pneg %p297
      $region38: #{decoder_forward.33} parent=35 // pred_check_branch
        %300 = sbr.rel (%p298) target = $region40
      $region39: #{decoder_forward.33} parent=35 // pred_region
        %vm301 = vcmask 7168
        %302 = vst.msk [vmem:[#allocation2] sm:$0xff] %vm301, -inf
        %303 = vst.msk [vmem:[#allocation2 + $0x8] sm:$0xff] %vm301, -inf
        %304 = vst.msk [vmem:[#allocation2 + $0x10] sm:$0xff] %vm301, -inf
        %305 = vst.msk [vmem:[#allocation2 + $0x18] sm:$0xff] %vm301, -inf
        %306 = vst.msk [vmem:[#allocation3] sm:$0xff] %vm301, 0.0
        %307 = vst.msk [vmem:[#allocation3 + $0x8] sm:$0xff] %vm301, 0.0
        %308 = vst.msk [vmem:[#allocation3 + $0x10] sm:$0xff] %vm301, 0.0
        %309 = vst.msk [vmem:[#allocation3 + $0x18] sm:$0xff] %vm301, 0.0
        %vm310 = vcmask 64512
        %311 = vst.msk [vmem:[#allocation4] sm:$0xff] %vm310, 0.0
        %312 = vst.msk [vmem:[#allocation4 + $0x8] sm:$0xff] %vm310, 0.0
        %313 = vst.msk [vmem:[#allocation4 + $0x10] sm:$0xff] %vm310, 0.0
        %314 = vst.msk [vmem:[#allocation4 + $0x18] sm:$0xff] %vm310, 0.0
      $region40: #{decoder_forward.33} parent=35 // pred_fallthru
        _
      %v315 = vld [vmem:[%s269] sm:$0xff]
      %v316 = vld [vmem:[%s269 + $0x8] sm:$0xff]
      %v317 = vld [vmem:[%s269 + $0x10] sm:$0xff]
      %v318 = vld [vmem:[%s269 + $0x18] sm:$0xff]
      %v319 = vld [vmem:[%s277] sm:$0xff]
      %v320 = vld [vmem:[%s277 + $0x8] sm:$0xff]
      %v321 = vld [vmem:[%s277 + $0x10] sm:$0xff]
      %v322 = vld [vmem:[%s277 + $0x18] sm:$0xff]
      %v323 = vld [vmem:[%s285] sm:$0xff]
      %v324 = vld [vmem:[%s285 + $0x8] sm:$0xff]
      %v325 = vld [vmem:[%s285 + $0x10] sm:$0xff]
      %v326 = vld [vmem:[%s285 + $0x18] sm:$0xff]
      %v327 = vld [vmem:[%s291] sm:$0x1]
      %vm328 = vcmask 64512
      %v330 = vsel %vm328, %v315, 0
      %v333 = vsel %vm328, %v319, 0
      %335 = vmatprep.subr.mxu0 0.0
      %336 = vmatpush1.xpose.msra.mxu0 %v333
      %337 = vmatprep.subr.mxu0 0.0
      %338 = vmatpush1.xpose.msra.mxu0 0.0
      %339 = vmatprep.subr.mxu0 0.0
      %340 = vmatpush1.xpose.msra.mxu0 0.0
      %341 = vmatprep.subr.mxu0 0.0
      %342 = vmatpush1.xpose.msra.mxu0 0.0
      %343 = vmatprep.subr.mxu0 0.0
      %344 = vmatpush1.xpose.msra.mxu0 0.0
      %345 = vmatprep.subr.mxu0 0.0
      %346 = vmatpush1.xpose.msra.mxu0 0.0
      %347 = vmatprep.subr.mxu0 0.0
      %348 = vmatpush1.xpose.msra.mxu0 0.0
      %349 = vmatprep.subr.mxu0 0.0
      %350 = vmatpush1.xpose.msra.mxu0 0.0
      %351 = vmatprep.subr.mxu0 0.0
      %352 = vmatpush1.xpose.msra.mxu0 0.0
      %353 = vmatprep.subr.mxu0 0.0
      %354 = vmatpush1.xpose.msra.mxu0 0.0
      %355 = vmatprep.subr.mxu0 0.0
      %356 = vmatpush1.xpose.msra.mxu0 0.0
      %357 = vmatprep.subr.mxu0 0.0
      %358 = vmatpush1.xpose.msra.mxu0 0.0
      %359 = vmatprep.subr.mxu0 0.0
      %360 = vmatpush1.xpose.msra.mxu0 0.0
      %361 = vmatprep.subr.mxu0 0.0
      %362 = vmatpush1.xpose.msra.mxu0 0.0
      %363 = vmatprep.subr.mxu0 0.0
      %364 = vmatpush1.xpose.msra.mxu0 0.0
      %365 = vmatprep.subr.mxu0 0.0
      %366 = vmatpush1.xpose.msra.mxu0 0.0
      %367 = vmatprep.subr.mxu0 0.0
      %368 = vmatpush1.xpose.msra.mxu0 0.0
      %369 = vmatprep.subr.mxu0 0.0
      %370 = vmatpush1.xpose.msra.mxu0 0.0
      %371 = vmatprep.subr.mxu0 0.0
      %372 = vmatpush1.xpose.msra.mxu0 0.0
      %373 = vmatprep.subr.mxu0 0.0
      %374 = vmatpush1.xpose.msra.mxu0 0.0
      %375 = vmatprep.subr.mxu0 0.0
      %376 = vmatpush1.xpose.msra.mxu0 0.0
      %377 = vmatprep.subr.mxu0 0.0
      %378 = vmatpush1.xpose.msra.mxu0 0.0
      %379 = vmatprep.subr.mxu0 0.0
      %380 = vmatpush1.xpose.msra.mxu0 0.0
      %381 = vmatprep.subr.mxu0 0.0
      %382 = vmatpush1.xpose.msra.mxu0 0.0
      %383 = vmatprep.subr.mxu0 0.0
      %384 = vmatpush1.xpose.msra.mxu0 0.0
      %385 = vmatprep.subr.mxu0 0.0
      %386 = vmatpush1.xpose.msra.mxu0 0.0
      %387 = vmatprep.subr.mxu0 0.0
      %388 = vmatpush1.xpose.msra.mxu0 0.0
      %389 = vmatprep.subr.mxu0 0.0
      %390 = vmatpush1.xpose.msra.mxu0 0.0
      %391 = vmatprep.subr.mxu0 0.0
      %392 = vmatpush1.xpose.msra.mxu0 0.0
      %393 = vmatprep.subr.mxu0 0.0
      %394 = vmatpush1.xpose.msra.mxu0 0.0
      %395 = vmatprep.subr.mxu0 0.0
      %396 = vmatpush1.xpose.msra.mxu0 0.0
      %397 = vmatprep.subr.mxu0 0.0
      %398 = vmatpush1.xpose.msra.mxu0 0.0
      %399 = vmatprep.mubr.f32.mxu0 0.0
      %400 = vmatmul.mubr.f32.gmra.mrb[0].mxu0 %v330
      %v401 = vpop.f32.mrb[0].mxu0
      %v402 = vadd.f32 0.0, %v401
      %v403 = vpop.f32.mrb[0].mxu0
      %404 = vdwg.mxu0
      %v406 = vsel %vm328, %v316, 0
      %v409 = vsel %vm328, %v320, 0
      %411 = vmatprep.subr.mxu0 0.0
      %412 = vmatpush1.xpose.msra.mxu0 %v409
      %413 = vmatprep.subr.mxu0 0.0
      %414 = vmatpush1.xpose.msra.mxu0 0.0
      %415 = vmatprep.subr.mxu0 0.0
      %416 = vmatpush1.xpose.msra.mxu0 0.0
      %417 = vmatprep.subr.mxu0 0.0
      %418 = vmatpush1.xpose.msra.mxu0 0.0
      %419 = vmatprep.subr.mxu0 0.0
      %420 = vmatpush1.xpose.msra.mxu0 0.0
      %421 = vmatprep.subr.mxu0 0.0
      %422 = vmatpush1.xpose.msra.mxu0 0.0
      %423 = vmatprep.subr.mxu0 0.0
      %424 = vmatpush1.xpose.msra.mxu0 0.0
      %425 = vmatprep.subr.mxu0 0.0
      %426 = vmatpush1.xpose.msra.mxu0 0.0
      %427 = vmatprep.subr.mxu0 0.0
      %428 = vmatpush1.xpose.msra.mxu0 0.0
      %429 = vmatprep.subr.mxu0 0.0
      %430 = vmatpush1.xpose.msra.mxu0 0.0
      %431 = vmatprep.subr.mxu0 0.0
      %432 = vmatpush1.xpose.msra.mxu0 0.0
      %433 = vmatprep.subr.mxu0 0.0
      %434 = vmatpush1.xpose.msra.mxu0 0.0
      %435 = vmatprep.subr.mxu0 0.0
      %436 = vmatpush1.xpose.msra.mxu0 0.0
      %437 = vmatprep.subr.mxu0 0.0
      %438 = vmatpush1.xpose.msra.mxu0 0.0
      %439 = vmatprep.subr.mxu0 0.0
      %440 = vmatpush1.xpose.msra.mxu0 0.0
      %441 = vmatprep.subr.mxu0 0.0
      %442 = vmatpush1.xpose.msra.mxu0 0.0
      %443 = vmatprep.subr.mxu0 0.0
      %444 = vmatpush1.xpose.msra.mxu0 0.0
      %445 = vmatprep.subr.mxu0 0.0
      %446 = vmatpush1.xpose.msra.mxu0 0.0
      %447 = vmatprep.subr.mxu0 0.0
      %448 = vmatpush1.xpose.msra.mxu0 0.0
      %449 = vmatprep.subr.mxu0 0.0
      %450 = vmatpush1.xpose.msra.mxu0 0.0
      %451 = vmatprep.subr.mxu0 0.0
      %452 = vmatpush1.xpose.msra.mxu0 0.0
      %453 = vmatprep.subr.mxu0 0.0
      %454 = vmatpush1.xpose.msra.mxu0 0.0
      %455 = vmatprep.subr.mxu0 0.0
      %456 = vmatpush1.xpose.msra.mxu0 0.0
      %457 = vmatprep.subr.mxu0 0.0
      %458 = vmatpush1.xpose.msra.mxu0 0.0
      %459 = vmatprep.subr.mxu0 0.0
      %460 = vmatpush1.xpose.msra.mxu0 0.0
      %461 = vmatprep.subr.mxu0 0.0
      %462 = vmatpush1.xpose.msra.mxu0 0.0
      %463 = vmatprep.subr.mxu0 0.0
      %464 = vmatpush1.xpose.msra.mxu0 0.0
      %465 = vmatprep.subr.mxu0 0.0
      %466 = vmatpush1.xpose.msra.mxu0 0.0
      %467 = vmatprep.subr.mxu0 0.0
      %468 = vmatpush1.xpose.msra.mxu0 0.0
      %469 = vmatprep.subr.mxu0 0.0
      %470 = vmatpush1.xpose.msra.mxu0 0.0
      %471 = vmatprep.subr.mxu0 0.0
      %472 = vmatpush1.xpose.msra.mxu0 0.0
      %473 = vmatprep.subr.mxu0 0.0
      %474 = vmatpush1.xpose.msra.mxu0 0.0
      %475 = vmatprep.mubr.f32.mxu0 0.0
      %476 = vmatmul.mubr.f32.gmra.mrb[0].mxu0 %v406
      %v477 = vpop.f32.mrb[0].mxu0
      %v478 = vadd.f32 0.0, %v477
      %v479 = vpop.f32.mrb[0].mxu0
      %480 = vdwg.mxu0
      %v482 = vsel %vm328, %v317, 0
      %v485 = vsel %vm328, %v321, 0
      %487 = vmatprep.subr.mxu0 0.0
      %488 = vmatpush1.xpose.msra.mxu0 %v485
      %489 = vmatprep.subr.mxu0 0.0
      %490 = vmatpush1.xpose.msra.mxu0 0.0
      %491 = vmatprep.subr.mxu0 0.0
      %492 = vmatpush1.xpose.msra.mxu0 0.0
      %493 = vmatprep.subr.mxu0 0.0
      %494 = vmatpush1.xpose.msra.mxu0 0.0
      %495 = vmatprep.subr.mxu0 0.0
      %496 = vmatpush1.xpose.msra.mxu0 0.0
      %497 = vmatprep.subr.mxu0 0.0
      %498 = vmatpush1.xpose.msra.mxu0 0.0
      %499 = vmatprep.subr.mxu0 0.0
      %500 = vmatpush1.xpose.msra.mxu0 0.0
      %501 = vmatprep.subr.mxu0 0.0
      %502 = vmatpush1.xpose.msra.mxu0 0.0
      %503 = vmatprep.subr.mxu0 0.0
      %504 = vmatpush1.xpose.msra.mxu0 0.0
      %505 = vmatprep.subr.mxu0 0.0
      %506 = vmatpush1.xpose.msra.mxu0 0.0
      %507 = vmatprep.subr.mxu0 0.0
      %508 = vmatpush1.xpose.msra.mxu0 0.0
      %509 = vmatprep.subr.mxu0 0.0
      %510 = vmatpush1.xpose.msra.mxu0 0.0
      %511 = vmatprep.subr.mxu0 0.0
      %512 = vmatpush1.xpose.msra.mxu0 0.0
      %513 = vmatprep.subr.mxu0 0.0
      %514 = vmatpush1.xpose.msra.mxu0 0.0
      %515 = vmatprep.subr.mxu0 0.0
      %516 = vmatpush1.xpose.msra.mxu0 0.0
      %517 = vmatprep.subr.mxu0 0.0
      %518 = vmatpush1.xpose.msra.mxu0 0.0
      %519 = vmatprep.subr.mxu0 0.0
      %520 = vmatpush1.xpose.msra.mxu0 0.0
      %521 = vmatprep.subr.mxu0 0.0
      %522 = vmatpush1.xpose.msra.mxu0 0.0
      %523 = vmatprep.subr.mxu0 0.0
      %524 = vmatpush1.xpose.msra.mxu0 0.0
      %525 = vmatprep.subr.mxu0 0.0
      %526 = vmatpush1.xpose.msra.mxu0 0.0
      %527 = vmatprep.subr.mxu0 0.0
      %528 = vmatpush1.xpose.msra.mxu0 0.0
      %529 = vmatprep.subr.mxu0 0.0
      %530 = vmatpush1.xpose.msra.mxu0 0.0
      %531 = vmatprep.subr.mxu0 0.0
      %532 = vmatpush1.xpose.msra.mxu0 0.0
      %533 = vmatprep.subr.mxu0 0.0
      %534 = vmatpush1.xpose.msra.mxu0 0.0
      %535 = vmatprep.subr.mxu0 0.0
      %536 = vmatpush1.xpose.msra.mxu0 0.0
      %537 = vmatprep.subr.mxu0 0.0
      %538 = vmatpush1.xpose.msra.mxu0 0.0
      %539 = vmatprep.subr.mxu0 0.0
      %540 = vmatpush1.xpose.msra.mxu0 0.0
      %541 = vmatprep.subr.mxu0 0.0
      %542 = vmatpush1.xpose.msra.mxu0 0.0
      %543 = vmatprep.subr.mxu0 0.0
      %544 = vmatpush1.xpose.msra.mxu0 0.0
      %545 = vmatprep.subr.mxu0 0.0
      %546 = vmatpush1.xpose.msra.mxu0 0.0
      %547 = vmatprep.subr.mxu0 0.0
      %548 = vmatpush1.xpose.msra.mxu0 0.0
      %549 = vmatprep.subr.mxu0 0.0
      %550 = vmatpush1.xpose.msra.mxu0 0.0
      %551 = vmatprep.mubr.f32.mxu0 0.0
      %552 = vmatmul.mubr.f32.gmra.mrb[0].mxu0 %v482
      %v553 = vpop.f32.mrb[0].mxu0
      %v554 = vadd.f32 0.0, %v553
      %v555 = vpop.f32.mrb[0].mxu0
      %556 = vdwg.mxu0
      %v558 = vsel %vm328, %v318, 0
      %v561 = vsel %vm328, %v322, 0
      %563 = vmatprep.subr.mxu0 0.0
      %564 = vmatpush1.xpose.msra.mxu0 %v561
      %565 = vmatprep.subr.mxu0 0.0
      %566 = vmatpush1.xpose.msra.mxu0 0.0
      %567 = vmatprep.subr.mxu0 0.0
      %568 = vmatpush1.xpose.msra.mxu0 0.0
      %569 = vmatprep.subr.mxu0 0.0
      %570 = vmatpush1.xpose.msra.mxu0 0.0
      %571 = vmatprep.subr.mxu0 0.0
      %572 = vmatpush1.xpose.msra.mxu0 0.0
      %573 = vmatprep.subr.mxu0 0.0
      %574 = vmatpush1.xpose.msra.mxu0 0.0
      %575 = vmatprep.subr.mxu0 0.0
      %576 = vmatpush1.xpose.msra.mxu0 0.0
      %577 = vmatprep.subr.mxu0 0.0
      %578 = vmatpush1.xpose.msra.mxu0 0.0
      %579 = vmatprep.subr.mxu0 0.0
      %580 = vmatpush1.xpose.msra.mxu0 0.0
      %581 = vmatprep.subr.mxu0 0.0
      %582 = vmatpush1.xpose.msra.mxu0 0.0
      %583 = vmatprep.subr.mxu0 0.0
      %584 = vmatpush1.xpose.msra.mxu0 0.0
      %585 = vmatprep.subr.mxu0 0.0
      %586 = vmatpush1.xpose.msra.mxu0 0.0
      %587 = vmatprep.subr.mxu0 0.0
      %588 = vmatpush1.xpose.msra.mxu0 0.0
      %589 = vmatprep.subr.mxu0 0.0
      %590 = vmatpush1.xpose.msra.mxu0 0.0
      %591 = vmatprep.subr.mxu0 0.0
      %592 = vmatpush1.xpose.msra.mxu0 0.0
      %593 = vmatprep.subr.mxu0 0.0
      %594 = vmatpush1.xpose.msra.mxu0 0.0
      %595 = vmatprep.subr.mxu0 0.0
      %596 = vmatpush1.xpose.msra.mxu0 0.0
      %597 = vmatprep.subr.mxu0 0.0
      %598 = vmatpush1.xpose.msra.mxu0 0.0
      %599 = vmatprep.subr.mxu0 0.0
      %600 = vmatpush1.xpose.msra.mxu0 0.0
      %601 = vmatprep.subr.mxu0 0.0
      %602 = vmatpush1.xpose.msra.mxu0 0.0
      %603 = vmatprep.subr.mxu0 0.0
      %604 = vmatpush1.xpose.msra.mxu0 0.0
      %605 = vmatprep.subr.mxu0 0.0
      %606 = vmatpush1.xpose.msra.mxu0 0.0
      %607 = vmatprep.subr.mxu0 0.0
      %608 = vmatpush1.xpose.msra.mxu0 0.0
      %609 = vmatprep.subr.mxu0 0.0
      %610 = vmatpush1.xpose.msra.mxu0 0.0
      %611 = vmatprep.subr.mxu0 0.0
      %612 = vmatpush1.xpose.msra.mxu0 0.0
      %613 = vmatprep.subr.mxu0 0.0
      %614 = vmatpush1.xpose.msra.mxu0 0.0
      %615 = vmatprep.subr.mxu0 0.0
      %616 = vmatpush1.xpose.msra.mxu0 0.0
      %617 = vmatprep.subr.mxu0 0.0
      %618 = vmatpush1.xpose.msra.mxu0 0.0
      %619 = vmatprep.subr.mxu0 0.0
      %620 = vmatpush1.xpose.msra.mxu0 0.0
      %621 = vmatprep.subr.mxu0 0.0
      %622 = vmatpush1.xpose.msra.mxu0 0.0
      %623 = vmatprep.subr.mxu0 0.0
      %624 = vmatpush1.xpose.msra.mxu0 0.0
      %625 = vmatprep.subr.mxu0 0.0
      %626 = vmatpush1.xpose.msra.mxu0 0.0
      %627 = vmatprep.mubr.f32.mxu0 0.0
      %628 = vmatmul.mubr.f32.gmra.mrb[0].mxu0 %v558
      %v629 = vpop.f32.mrb[0].mxu0
      %v630 = vadd.f32 0.0, %v629
      %v631 = vpop.f32.mrb[0].mxu0
      %632 = vdwg.mxu0
      %v633 = vmul.f32 %v402, 0.35355338
      %v634 = vmul.f32 %v478, 0.35355338
      %v635 = vmul.f32 %v554, 0.35355338
      %v636 = vmul.f32 %v630, 0.35355338
      %v638 = vlaneseq
      %v639 = vshrl.u32 %v638, 7
      %v640 = vsub.s32 0, %v639
      %v641 = vrot.slane %v327, %v640
      %v643 = vadd.f32 %v633, %v641
      %v644 = vadd.f32 %v634, %v641
      %v645 = vadd.f32 %v635, %v641
      %v646 = vadd.f32 %v636, %v641
      %v647 = vld [vmem:[#allocation2] sm:$0xff]
      %v648 = vld [vmem:[#allocation2 + $0x8] sm:$0xff]
      %v649 = vld [vmem:[#allocation2 + $0x10] sm:$0xff]
      %v650 = vld [vmem:[#allocation2 + $0x18] sm:$0xff]
      %v651 = vsel %vm328, %v643, -inf
      %652 = vmax.xlane.f32.xlu0 %v651
      %v653 = vpop.xlane.xlu0 %652
      %v654 = vsel %vm328, %v644, -inf
      %655 = vmax.xlane.f32.xlu0 %v654
      %v656 = vpop.xlane.xlu0 %655
      %v657 = vsel %vm328, %v645, -inf
      %658 = vmax.xlane.f32.xlu0 %v657
      %v659 = vpop.xlane.xlu0 %658
      %v660 = vsel %vm328, %v646, -inf
      %661 = vmax.xlane.f32.xlu0 %v660
      %v662 = vpop.xlane.xlu0 %661
      %v663 = vmax.f32 %v647, %v653
      %v664 = vmax.f32 %v648, %v656
      %v665 = vmax.f32 %v649, %v659
      %v666 = vmax.f32 %v650, %v662
      %v667 = vsub.f32 %v647, %v663
      %v668 = vsub.f32 %v648, %v664
      %v669 = vsub.f32 %v649, %v665
      %v670 = vsub.f32 %v650, %v666
      %v671 = vmul.f32 %v667, 1.442695
      %v672 = vpow.pop %v671
      %v673 = vmul.f32 %v668, 1.442695
      %v674 = vpow.pop %v673
      %v675 = vmul.f32 %v669, 1.442695
      %v676 = vpow.pop %v675
      %v677 = vmul.f32 %v670, 1.442695
      %v678 = vpow.pop %v677
      %680 = vset.pattern.permute.xlu0 0
      %681 = vperm.xlu0 %680, %v663
      %v682 = vpop.permute.xlu0 %681
      %685 = vset.pattern.permute.xlu0 0
      %686 = vperm.xlu0 %685, %v664
      %v687 = vpop.permute.xlu0 %686
      %690 = vset.pattern.permute.xlu0 0
      %691 = vperm.xlu0 %690, %v665
      %v692 = vpop.permute.xlu0 %691
      %695 = vset.pattern.permute.xlu0 0
      %696 = vperm.xlu0 %695, %v666
      %v697 = vpop.permute.xlu0 %696
      %v699 = vsub.f32 %v643, %v682
      %v700 = vsub.f32 %v644, %v687
      %v701 = vsub.f32 %v645, %v692
      %v702 = vsub.f32 %v646, %v697
      %v703 = vmul.f32 %v699, 1.442695
      %v704 = vpow.pop %v703
      %v705 = vmul.f32 %v700, 1.442695
      %v706 = vpow.pop %v705
      %v707 = vmul.f32 %v701, 1.442695
      %v708 = vpow.pop %v707
      %v709 = vmul.f32 %v702, 1.442695
      %v710 = vpow.pop %v709
      %v711 = vld [vmem:[#allocation3] sm:$0xff]
      %v712 = vld [vmem:[#allocation3 + $0x8] sm:$0xff]
      %v713 = vld [vmem:[#allocation3 + $0x10] sm:$0xff]
      %v714 = vld [vmem:[#allocation3 + $0x18] sm:$0xff]
      %v715 = vmul.f32 %v672, %v711
      %v716 = vmul.f32 %v674, %v712
      %v717 = vmul.f32 %v676, %v713
      %v718 = vmul.f32 %v678, %v714
      %v719 = vsel %vm328, %v704, 0.0
      %720 = vadd.xlane.f32.xlu0 %v719
      %v721 = vpop.xlane.xlu0 %720
      %v722 = vsel %vm328, %v706, 0.0
      %723 = vadd.xlane.f32.xlu0 %v722
      %v724 = vpop.xlane.xlu0 %723
      %v725 = vsel %vm328, %v708, 0.0
      %726 = vadd.xlane.f32.xlu0 %v725
      %v727 = vpop.xlane.xlu0 %726
      %v728 = vsel %vm328, %v710, 0.0
      %729 = vadd.xlane.f32.xlu0 %v728
      %v730 = vpop.xlane.xlu0 %729
      %v731 = vadd.f32 %v715, %v721
      %v732 = vadd.f32 %v716, %v724
      %v733 = vadd.f32 %v717, %v727
      %v734 = vadd.f32 %v718, %v730
      %vm735 = vcmask 7168
      %736 = vst.msk [vmem:[#allocation3] sm:$0xff] %vm735, %v731
      %737 = vst.msk [vmem:[#allocation3 + $0x8] sm:$0xff] %vm735, %v732
      %738 = vst.msk [vmem:[#allocation3 + $0x10] sm:$0xff] %vm735, %v733
      %739 = vst.msk [vmem:[#allocation3 + $0x18] sm:$0xff] %vm735, %v734
      %v740 = vld [vmem:[#allocation4] sm:$0xff]
      %v741 = vld [vmem:[#allocation4 + $0x8] sm:$0xff]
      %v742 = vld [vmem:[#allocation4 + $0x10] sm:$0xff]
      %v743 = vld [vmem:[#allocation4 + $0x18] sm:$0xff]
      %745 = vset.pattern.permute.xlu0 0
      %746 = vperm.xlu0 %745, %v672
      %v747 = vpop.permute.xlu0 %746
      %750 = vset.pattern.permute.xlu0 0
      %751 = vperm.xlu0 %750, %v674
      %v752 = vpop.permute.xlu0 %751
      %755 = vset.pattern.permute.xlu0 0
      %756 = vperm.xlu0 %755, %v676
      %v757 = vpop.permute.xlu0 %756
      %760 = vset.pattern.permute.xlu0 0
      %761 = vperm.xlu0 %760, %v678
      %v762 = vpop.permute.xlu0 %761
      %v764 = vmul.f32 %v747, %v740
      %v765 = vmul.f32 %v752, %v741
      %v766 = vmul.f32 %v757, %v742
      %v767 = vmul.f32 %v762, %v743
      %v769 = vsel %vm328, %v704, 0
      %771 = vmatprep.subr.mxu0 0.0
      %772 = vmatpush1.msra.mxu0 %v323
      %773 = vmatprep.subr.mxu0 0.0
      %774 = vmatpush1.msra.mxu0 0.0
      %775 = vmatprep.subr.mxu0 0.0
      %776 = vmatpush1.msra.mxu0 0.0
      %777 = vmatprep.subr.mxu0 0.0
      %778 = vmatpush1.msra.mxu0 0.0
      %779 = vmatprep.subr.mxu0 0.0
      %780 = vmatpush1.msra.mxu0 0.0
      %781 = vmatprep.subr.mxu0 0.0
      %782 = vmatpush1.msra.mxu0 0.0
      %783 = vmatprep.subr.mxu0 0.0
      %784 = vmatpush1.msra.mxu0 0.0
      %785 = vmatprep.subr.mxu0 0.0
      %786 = vmatpush1.msra.mxu0 0.0
      %787 = vmatprep.subr.mxu0 0.0
      %788 = vmatpush1.msra.mxu0 0.0
      %789 = vmatprep.subr.mxu0 0.0
      %790 = vmatpush1.msra.mxu0 0.0
      %791 = vmatprep.subr.mxu0 0.0
      %792 = vmatpush1.msra.mxu0 0.0
      %793 = vmatprep.subr.mxu0 0.0
      %794 = vmatpush1.msra.mxu0 0.0
      %795 = vmatprep.subr.mxu0 0.0
      %796 = vmatpush1.msra.mxu0 0.0
      %797 = vmatprep.subr.mxu0 0.0
      %798 = vmatpush1.msra.mxu0 0.0
      %799 = vmatprep.subr.mxu0 0.0
      %800 = vmatpush1.msra.mxu0 0.0
      %801 = vmatprep.subr.mxu0 0.0
      %802 = vmatpush1.msra.mxu0 0.0
      %803 = vmatprep.subr.mxu0 0.0
      %804 = vmatpush1.msra.mxu0 0.0
      %805 = vmatprep.subr.mxu0 0.0
      %806 = vmatpush1.msra.mxu0 0.0
      %807 = vmatprep.subr.mxu0 0.0
      %808 = vmatpush1.msra.mxu0 0.0
      %809 = vmatprep.subr.mxu0 0.0
      %810 = vmatpush1.msra.mxu0 0.0
      %811 = vmatprep.subr.mxu0 0.0
      %812 = vmatpush1.msra.mxu0 0.0
      %813 = vmatprep.subr.mxu0 0.0
      %814 = vmatpush1.msra.mxu0 0.0
      %815 = vmatprep.subr.mxu0 0.0
      %816 = vmatpush1.msra.mxu0 0.0
      %817 = vmatprep.subr.mxu0 0.0
      %818 = vmatpush1.msra.mxu0 0.0
      %819 = vmatprep.subr.mxu0 0.0
      %820 = vmatpush1.msra.mxu0 0.0
      %821 = vmatprep.subr.mxu0 0.0
      %822 = vmatpush1.msra.mxu0 0.0
      %823 = vmatprep.subr.mxu0 0.0
      %824 = vmatpush1.msra.mxu0 0.0
      %825 = vmatprep.subr.mxu0 0.0
      %826 = vmatpush1.msra.mxu0 0.0
      %827 = vmatprep.subr.mxu0 0.0
      %828 = vmatpush1.msra.mxu0 0.0
      %829 = vmatprep.subr.mxu0 0.0
      %830 = vmatpush1.msra.mxu0 0.0
      %831 = vmatprep.subr.mxu0 0.0
      %832 = vmatpush1.msra.mxu0 0.0
      %833 = vmatprep.subr.mxu0 0.0
      %834 = vmatpush1.msra.mxu0 0.0
      %835 = vmatprep.mubr.f32.mxu0 0.0
      %836 = vmatmul.mubr.f32.gmra.mrb[0].mxu0 %v769
      %v837 = vpop.f32.mrb[0].mxu0
      %v838 = vadd.f32 0.0, %v837
      %v839 = vpop.f32.mrb[0].mxu0
      %840 = vdwg.mxu0
      %v842 = vsel %vm328, %v706, 0
      %844 = vmatprep.subr.mxu0 0.0
      %845 = vmatpush1.msra.mxu0 %v324
      %846 = vmatprep.subr.mxu0 0.0
      %847 = vmatpush1.msra.mxu0 0.0
      %848 = vmatprep.subr.mxu0 0.0
      %849 = vmatpush1.msra.mxu0 0.0
      %850 = vmatprep.subr.mxu0 0.0
      %851 = vmatpush1.msra.mxu0 0.0
      %852 = vmatprep.subr.mxu0 0.0
      %853 = vmatpush1.msra.mxu0 0.0
      %854 = vmatprep.subr.mxu0 0.0
      %855 = vmatpush1.msra.mxu0 0.0
      %856 = vmatprep.subr.mxu0 0.0
      %857 = vmatpush1.msra.mxu0 0.0
      %858 = vmatprep.subr.mxu0 0.0
      %859 = vmatpush1.msra.mxu0 0.0
      %860 = vmatprep.subr.mxu0 0.0
      %861 = vmatpush1.msra.mxu0 0.0
      %862 = vmatprep.subr.mxu0 0.0
      %863 = vmatpush1.msra.mxu0 0.0
      %864 = vmatprep.subr.mxu0 0.0
      %865 = vmatpush1.msra.mxu0 0.0
      %866 = vmatprep.subr.mxu0 0.0
      %867 = vmatpush1.msra.mxu0 0.0
      %868 = vmatprep.subr.mxu0 0.0
      %869 = vmatpush1.msra.mxu0 0.0
      %870 = vmatprep.subr.mxu0 0.0
      %871 = vmatpush1.msra.mxu0 0.0
      %872 = vmatprep.subr.mxu0 0.0
      %873 = vmatpush1.msra.mxu0 0.0
      %874 = vmatprep.subr.mxu0 0.0
      %875 = vmatpush1.msra.mxu0 0.0
      %876 = vmatprep.subr.mxu0 0.0
      %877 = vmatpush1.msra.mxu0 0.0
      %878 = vmatprep.subr.mxu0 0.0
      %879 = vmatpush1.msra.mxu0 0.0
      %880 = vmatprep.subr.mxu0 0.0
      %881 = vmatpush1.msra.mxu0 0.0
      %882 = vmatprep.subr.mxu0 0.0
      %883 = vmatpush1.msra.mxu0 0.0
      %884 = vmatprep.subr.mxu0 0.0
      %885 = vmatpush1.msra.mxu0 0.0
      %886 = vmatprep.subr.mxu0 0.0
      %887 = vmatpush1.msra.mxu0 0.0
      %888 = vmatprep.subr.mxu0 0.0
      %889 = vmatpush1.msra.mxu0 0.0
      %890 = vmatprep.subr.mxu0 0.0
      %891 = vmatpush1.msra.mxu0 0.0
      %892 = vmatprep.subr.mxu0 0.0
      %893 = vmatpush1.msra.mxu0 0.0
      %894 = vmatprep.subr.mxu0 0.0
      %895 = vmatpush1.msra.mxu0 0.0
      %896 = vmatprep.subr.mxu0 0.0
      %897 = vmatpush1.msra.mxu0 0.0
      %898 = vmatprep.subr.mxu0 0.0
      %899 = vmatpush1.msra.mxu0 0.0
      %900 = vmatprep.subr.mxu0 0.0
      %901 = vmatpush1.msra.mxu0 0.0
      %902 = vmatprep.subr.mxu0 0.0
      %903 = vmatpush1.msra.mxu0 0.0
      %904 = vmatprep.subr.mxu0 0.0
      %905 = vmatpush1.msra.mxu0 0.0
      %906 = vmatprep.subr.mxu0 0.0
      %907 = vmatpush1.msra.mxu0 0.0
      %908 = vmatprep.mubr.f32.mxu0 0.0
      %909 = vmatmul.mubr.f32.gmra.mrb[0].mxu0 %v842
      %v910 = vpop.f32.mrb[0].mxu0
      %v911 = vadd.f32 0.0, %v910
      %v912 = vpop.f32.mrb[0].mxu0
      %913 = vdwg.mxu0
      %v915 = vsel %vm328, %v708, 0
      %917 = vmatprep.subr.mxu0 0.0
      %918 = vmatpush1.msra.mxu0 %v325
      %919 = vmatprep.subr.mxu0 0.0
      %920 = vmatpush1.msra.mxu0 0.0
      %921 = vmatprep.subr.mxu0 0.0
      %922 = vmatpush1.msra.mxu0 0.0
      %923 = vmatprep.subr.mxu0 0.0
      %924 = vmatpush1.msra.mxu0 0.0
      %925 = vmatprep.subr.mxu0 0.0
      %926 = vmatpush1.msra.mxu0 0.0
      %927 = vmatprep.subr.mxu0 0.0
      %928 = vmatpush1.msra.mxu0 0.0
      %929 = vmatprep.subr.mxu0 0.0
      %930 = vmatpush1.msra.mxu0 0.0
      %931 = vmatprep.subr.mxu0 0.0
      %932 = vmatpush1.msra.mxu0 0.0
      %933 = vmatprep.subr.mxu0 0.0
      %934 = vmatpush1.msra.mxu0 0.0
      %935 = vmatprep.subr.mxu0 0.0
      %936 = vmatpush1.msra.mxu0 0.0
      %937 = vmatprep.subr.mxu0 0.0
      %938 = vmatpush1.msra.mxu0 0.0
      %939 = vmatprep.subr.mxu0 0.0
      %940 = vmatpush1.msra.mxu0 0.0
      %941 = vmatprep.subr.mxu0 0.0
      %942 = vmatpush1.msra.mxu0 0.0
      %943 = vmatprep.subr.mxu0 0.0
      %944 = vmatpush1.msra.mxu0 0.0
      %945 = vmatprep.subr.mxu0 0.0
      %946 = vmatpush1.msra.mxu0 0.0
      %947 = vmatprep.subr.mxu0 0.0
      %948 = vmatpush1.msra.mxu0 0.0
      %949 = vmatprep.subr.mxu0 0.0
      %950 = vmatpush1.msra.mxu0 0.0
      %951 = vmatprep.subr.mxu0 0.0
      %952 = vmatpush1.msra.mxu0 0.0
      %953 = vmatprep.subr.mxu0 0.0
      %954 = vmatpush1.msra.mxu0 0.0
      %955 = vmatprep.subr.mxu0 0.0
      %956 = vmatpush1.msra.mxu0 0.0
      %957 = vmatprep.subr.mxu0 0.0
      %958 = vmatpush1.msra.mxu0 0.0
      %959 = vmatprep.subr.mxu0 0.0
      %960 = vmatpush1.msra.mxu0 0.0
      %961 = vmatprep.subr.mxu0 0.0
      %962 = vmatpush1.msra.mxu0 0.0
      %963 = vmatprep.subr.mxu0 0.0
      %964 = vmatpush1.msra.mxu0 0.0
      %965 = vmatprep.subr.mxu0 0.0
      %966 = vmatpush1.msra.mxu0 0.0
      %967 = vmatprep.subr.mxu0 0.0
      %968 = vmatpush1.msra.mxu0 0.0
      %969 = vmatprep.subr.mxu0 0.0
      %970 = vmatpush1.msra.mxu0 0.0
      %971 = vmatprep.subr.mxu0 0.0
      %972 = vmatpush1.msra.mxu0 0.0
      %973 = vmatprep.subr.mxu0 0.0
      %974 = vmatpush1.msra.mxu0 0.0
      %975 = vmatprep.subr.mxu0 0.0
      %976 = vmatpush1.msra.mxu0 0.0
      %977 = vmatprep.subr.mxu0 0.0
      %978 = vmatpush1.msra.mxu0 0.0
      %979 = vmatprep.subr.mxu0 0.0
      %980 = vmatpush1.msra.mxu0 0.0
      %981 = vmatprep.mubr.f32.mxu0 0.0
      %982 = vmatmul.mubr.f32.gmra.mrb[0].mxu0 %v915
      %v983 = vpop.f32.mrb[0].mxu0
      %v984 = vadd.f32 0.0, %v983
      %v985 = vpop.f32.mrb[0].mxu0
      %986 = vdwg.mxu0
      %v988 = vsel %vm328, %v710, 0
      %990 = vmatprep.subr.mxu0 0.0
      %991 = vmatpush1.msra.mxu0 %v326
      %992 = vmatprep.subr.mxu0 0.0
      %993 = vmatpush1.msra.mxu0 0.0
      %994 = vmatprep.subr.mxu0 0.0
      %995 = vmatpush1.msra.mxu0 0.0
      %996 = vmatprep.subr.mxu0 0.0
      %997 = vmatpush1.msra.mxu0 0.0
      %998 = vmatprep.subr.mxu0 0.0
      %999 = vmatpush1.msra.mxu0 0.0
      %1000 = vmatprep.subr.mxu0 0.0
      %1001 = vmatpush1.msra.mxu0 0.0
      %1002 = vmatprep.subr.mxu0 0.0
      %1003 = vmatpush1.msra.mxu0 0.0
      %1004 = vmatprep.subr.mxu0 0.0
      %1005 = vmatpush1.msra.mxu0 0.0
      %1006 = vmatprep.subr.mxu0 0.0
      %1007 = vmatpush1.msra.mxu0 0.0
      %1008 = vmatprep.subr.mxu0 0.0
      %1009 = vmatpush1.msra.mxu0 0.0
      %1010 = vmatprep.subr.mxu0 0.0
      %1011 = vmatpush1.msra.mxu0 0.0
      %1012 = vmatprep.subr.mxu0 0.0
      %1013 = vmatpush1.msra.mxu0 0.0
      %1014 = vmatprep.subr.mxu0 0.0
      %1015 = vmatpush1.msra.mxu0 0.0
      %1016 = vmatprep.subr.mxu0 0.0
      %1017 = vmatpush1.msra.mxu0 0.0
      %1018 = vmatprep.subr.mxu0 0.0
      %1019 = vmatpush1.msra.mxu0 0.0
      %1020 = vmatprep.subr.mxu0 0.0
      %1021 = vmatpush1.msra.mxu0 0.0
      %1022 = vmatprep.subr.mxu0 0.0
      %1023 = vmatpush1.msra.mxu0 0.0
      %1024 = vmatprep.subr.mxu0 0.0
      %1025 = vmatpush1.msra.mxu0 0.0
      %1026 = vmatprep.subr.mxu0 0.0
      %1027 = vmatpush1.msra.mxu0 0.0
      %1028 = vmatprep.subr.mxu0 0.0
      %1029 = vmatpush1.msra.mxu0 0.0
      %1030 = vmatprep.subr.mxu0 0.0
      %1031 = vmatpush1.msra.mxu0 0.0
      %1032 = vmatprep.subr.mxu0 0.0
      %1033 = vmatpush1.msra.mxu0 0.0
      %1034 = vmatprep.subr.mxu0 0.0
      %1035 = vmatpush1.msra.mxu0 0.0
      %1036 = vmatprep.subr.mxu0 0.0
      %1037 = vmatpush1.msra.mxu0 0.0
      %1038 = vmatprep.subr.mxu0 0.0
      %1039 = vmatpush1.msra.mxu0 0.0
      %1040 = vmatprep.subr.mxu0 0.0
      %1041 = vmatpush1.msra.mxu0 0.0
      %1042 = vmatprep.subr.mxu0 0.0
      %1043 = vmatpush1.msra.mxu0 0.0
      %1044 = vmatprep.subr.mxu0 0.0
      %1045 = vmatpush1.msra.mxu0 0.0
      %1046 = vmatprep.subr.mxu0 0.0
      %1047 = vmatpush1.msra.mxu0 0.0
      %1048 = vmatprep.subr.mxu0 0.0
      %1049 = vmatpush1.msra.mxu0 0.0
      %1050 = vmatprep.subr.mxu0 0.0
      %1051 = vmatpush1.msra.mxu0 0.0
      %1052 = vmatprep.subr.mxu0 0.0
      %1053 = vmatpush1.msra.mxu0 0.0
      %1054 = vmatprep.mubr.f32.mxu0 0.0
      %1055 = vmatmul.mubr.f32.gmra.mrb[0].mxu0 %v988
      %v1056 = vpop.f32.mrb[0].mxu0
      %v1057 = vadd.f32 0.0, %v1056
      %v1058 = vpop.f32.mrb[0].mxu0
      %1059 = vdwg.mxu0
      %v1060 = vadd.f32 %v764, %v838
      %v1061 = vadd.f32 %v765, %v911
      %v1062 = vadd.f32 %v766, %v984
      %v1063 = vadd.f32 %v767, %v1057
      %1064 = vst.msk [vmem:[#allocation4] sm:$0xff] %vm328, %v1060
      %1065 = vst.msk [vmem:[#allocation4 + $0x8] sm:$0xff] %vm328, %v1061
      %1066 = vst.msk [vmem:[#allocation4 + $0x10] sm:$0xff] %vm328, %v1062
      %1067 = vst.msk [vmem:[#allocation4 + $0x18] sm:$0xff] %vm328, %v1063
      %1068 = vst.msk [vmem:[#allocation2] sm:$0xff] %vm735, %v663
      %1069 = vst.msk [vmem:[#allocation2 + $0x8] sm:$0xff] %vm735, %v664
      %1070 = vst.msk [vmem:[#allocation2 + $0x10] sm:$0xff] %vm735, %v665
      %1071 = vst.msk [vmem:[#allocation2 + $0x18] sm:$0xff] %vm735, %v666
      // Predicated region
      $region41: #{decoder_forward.33} parent=35 // pred_check
        %p1072 = pneg %p297
      $region42: #{decoder_forward.33} parent=35 // pred_check_branch
        %1074 = sbr.rel (%p1072) target = $region44
      $region43: #{decoder_forward.33} parent=35 // pred_region
        %v1075 = vld [vmem:[#allocation3] sm:$0xff]
        %v1076 = vld [vmem:[#allocation3 + $0x8] sm:$0xff]
        %v1077 = vld [vmem:[#allocation3 + $0x10] sm:$0xff]
        %v1078 = vld [vmem:[#allocation3 + $0x18] sm:$0xff]
        %v1079 = vrcp.pop %v1075
        %v1080 = vrcp.pop %v1076
        %v1081 = vrcp.pop %v1077
        %v1082 = vrcp.pop %v1078
        %v1083 = vld [vmem:[#allocation4] sm:$0xff]
        %v1084 = vld [vmem:[#allocation4 + $0x8] sm:$0xff]
        %v1085 = vld [vmem:[#allocation4 + $0x10] sm:$0xff]
        %v1086 = vld [vmem:[#allocation4 + $0x18] sm:$0xff]
        %1088 = vset.pattern.permute.xlu0 0
        %1089 = vperm.xlu0 %1088, %v1079
        %v1090 = vpop.permute.xlu0 %1089
        %1093 = vset.pattern.permute.xlu0 0
        %1094 = vperm.xlu0 %1093, %v1080
        %v1095 = vpop.permute.xlu0 %1094
        %1098 = vset.pattern.permute.xlu0 0
        %1099 = vperm.xlu0 %1098, %v1081
        %v1100 = vpop.permute.xlu0 %1099
        %1103 = vset.pattern.permute.xlu0 0
        %1104 = vperm.xlu0 %1103, %v1082
        %v1105 = vpop.permute.xlu0 %1104
        %v1107 = vmul.f32 %v1083, %v1090
        %v1108 = vmul.f32 %v1084, %v1095
        %v1109 = vmul.f32 %v1085, %v1100
        %v1110 = vmul.f32 %v1086, %v1105
        %1111 = vst.msk [vmem:[%s296] sm:$0xff] %vm328, %v1107
        %1112 = vst.msk [vmem:[%s296 + $0x8] sm:$0xff] %vm328, %v1108
        %1113 = vst.msk [vmem:[%s296 + $0x10] sm:$0xff] %vm328, %v1109
        %1114 = vst.msk [vmem:[%s296 + $0x18] sm:$0xff] %vm328, %v1110
      $region44: #{decoder_forward.33} parent=35 // pred_fallthru
        _
      %p1115 = scmp.lt.s32.totalorder %s19, 1
      %s1116 = scalar_select %p1115, %s19, 1
      %s1117 = smul.addr %s1116, 4
      %s1118 = smul.addr %s1117, 8
      %s1119 = scalar_lea.vmem %s4, %s1118
      // Predicated region
      $region45: #{decoder_forward.33} parent=35 // pred_check
        %p1120 = pneg %p155
      $region46: #{decoder_forward.33} parent=35 // pred_check_branch
        %1122 = sbr.rel (%p1120) target = $region48
      $region47: #{decoder_forward.33} parent=35 // pred_region
        _
      $region48: #{decoder_forward.33} parent=35 // pred_fallthru
        _
    $region36: #{decoder_forward.33} parent=5 // pred_fallthru
      _
    %p1123 = scmp.le.s32.totalorder 2, %s10
    // Predicated region
    $region49: #{decoder_forward.33} parent=5 // pred_check
      %p1124 = pneg %p1123
    $region50: #{decoder_forward.33} parent=5 // pred_check_branch
      %1126 = sbr.rel (%p1124) target = $region52
    $region51: #{decoder_forward.33} parent=5 // pred_region
      %s1127 = ssub.s32 %s10, 2
      // Predicated region
      $region53: #{decoder_forward.33} parent=51 // pred_check
        %p1128 = pneg %p161
      $region54: #{decoder_forward.33} parent=51 // pred_check_branch
        %1130 = sbr.rel (%p1128) target = $region56
      $region55: #{decoder_forward.33} parent=51 // pred_region
        %p1131 = scmp.lt.s32.totalorder %s21, 1
        %s1132 = scalar_select %p1131, %s21, 1
        %s1133 = smul.addr %s1132, 4
        %s1134 = smul.addr %s1133, 8
        %s1135 = scalar_lea.vmem %s4, %s1134
      $region56: #{decoder_forward.33} parent=51 // pred_fallthru
        _
    $region52: #{decoder_forward.33} parent=5 // pred_fallthru
      _
  $region6: #{decoder_forward.33} parent=0 // loop_footer
    %s14 = sadd.s32 1, %s10
  $region7: #{decoder_forward.33} parent=0 // loop_footer_branch
    %9 = sbr.rel target = $region3
  $region8: #{decoder_forward.33} parent=0 // loop_exit
    _

// kernel: decoder_forward.51
$region0: #{decoder_forward.51}
  #allocation0 [shape = 'u32[]', space=smem, size = 0x4, offset = 0x4, fixed_abs, tag = 'smem constant byte address 0x4 - core index']
  #allocation1 [shape = 'u32[144,128]{1,0:T(1,128)}', space=vmem, size = 0x12000, scoped, tag = 'internal scratch']
  #allocation2 [shape = 'f32[16,64]{1,0:T(8,128)}', space=vmem, size = 0x2000, scoped, tag = 'scratch operand']
  %s0 = inlined_call_operand.vmem [shape: f32[16,32], index: 0, kind: input, shape index: {}]
  %s1 = inlined_call_operand.vmem [shape: f32[32,64], index: 1, kind: input, shape index: {}]
  %s2 = inlined_call_operand.vmem [shape: f32[1,64], index: 2, kind: input, shape index: {}]
  %s3 = inlined_call_operand.hbm [shape: f32[16,64], index: 3, kind: output, shape index: {}]
  %s4 = sld [smem:[#allocation0]]
  $region30: #{decoder_forward.51} parent=0
    _
  %s6 = ssub.s32 1, %s4
  %s7 = scalar_select 0, %s6, %s4
  $region1: #{decoder_forward.51} parent=0
    #allocation3 [shape = 'u8[8192]{0}', space=vmem, size = 0x2000, scoped, tag = 'output window, operand 0, single buffered']
    #allocation4 [shape = 's32[1]{0}', space=sflag, size = 0x4, scoped, tag = 'scoped memory for decoder_forward.51']
    %8 = vsyncpa [#allocation4], 0
    // Predicated region
    $region2: #{decoder_forward.51} parent=1 // pred_check
      _
    $region3: #{decoder_forward.51} parent=1 // pred_check_branch
      %10 = sbr.rel (0) target = $region5
    $region4: #{decoder_forward.51} parent=1 // pred_region
      _
    $region5: #{decoder_forward.51} parent=1 // pred_fallthru
      _
    // Predicated region
    $region6: #{decoder_forward.51} parent=1 // pred_check
      _
    $region7: #{decoder_forward.51} parent=1 // pred_check_branch
      %12 = sbr.rel (0) target = $region9
    $region8: #{decoder_forward.51} parent=1 // pred_region
      _
    $region9: #{decoder_forward.51} parent=1 // pred_fallthru
      _
    // Predicated region
    $region10: #{decoder_forward.51} parent=1 // pred_check
      _
    $region11: #{decoder_forward.51} parent=1 // pred_check_branch
      %14 = sbr.rel (0) target = $region13
    $region12: #{decoder_forward.51} parent=1 // pred_region
      _
    $region13: #{decoder_forward.51} parent=1 // pred_fallthru
      _
    %p15 = scmp.eq.s32.totalorder 0, 0
    // Predicated region
    $region14: #{decoder_forward.51} parent=1 // pred_check
      %p16 = pneg %p15
    $region15: #{decoder_forward.51} parent=1 // pred_check_branch
      %18 = sbr.rel (%p16) target = $region17
    $region16: #{decoder_forward.51} parent=1 // pred_region
      %vm19 = vcmask 523264
      %20 = vst.msk [vmem:[#allocation2] sm:$0xff] %vm19, 0.0
      %21 = vst.msk [vmem:[#allocation2 + $0x8] sm:$0xff] %vm19, 0.0
    $region17: #{decoder_forward.51} parent=1 // pred_fallthru
      _
    %v22 = vld [vmem:[#allocation2] sm:$0xff]
    %v23 = vld [vmem:[#allocation2 + $0x8] sm:$0xff]
    %v24 = vld [vmem:[%s0] sm:$0xff]
    %v25 = vld [vmem:[%s0 + $0x8] sm:$0xff]
    %v26 = vld [vmem:[%s1] sm:$0xff]
    %v27 = vld [vmem:[%s1 + $0x8] sm:$0xff]
    %v28 = vld [vmem:[%s1 + $0x10] sm:$0xff]
    %v29 = vld [vmem:[%s1 + $0x18] sm:$0xff]
    %vm30 = vcmask 261120
    %v32 = vsel %vm30, %v24, 0
    %v35 = vsel %vm30, %v25, 0
    %37 = vmatprep.subr.mxu0 0.0
    %38 = vmatpush1.msra.mxu0 %v26
    %39 = vmatprep.subr.mxu0 0.0
    %40 = vmatpush1.msra.mxu0 %v27
    %41 = vmatprep.subr.mxu0 0.0
    %42 = vmatpush1.msra.mxu0 %v28
    %43 = vmatprep.subr.mxu0 0.0
    %44 = vmatpush1.msra.mxu0 %v29
    %45 = vmatprep.subr.mxu0 0.0
    %46 = vmatpush1.msra.mxu0 0.0
    %47 = vmatprep.subr.mxu0 0.0
    %48 = vmatpush1.msra.mxu0 0.0
    %49 = vmatprep.subr.mxu0 0.0
    %50 = vmatpush1.msra.mxu0 0.0
    %51 = vmatprep.subr.mxu0 0.0
    %52 = vmatpush1.msra.mxu0 0.0
    %53 = vmatprep.subr.mxu0 0.0
    %54 = vmatpush1.msra.mxu0 0.0
    %55 = vmatprep.subr.mxu0 0.0
    %56 = vmatpush1.msra.mxu0 0.0
    %57 = vmatprep.subr.mxu0 0.0
    %58 = vmatpush1.msra.mxu0 0.0
    %59 = vmatprep.subr.mxu0 0.0
    %60 = vmatpush1.msra.mxu0 0.0
    %61 = vmatprep.subr.mxu0 0.0
    %62 = vmatpush1.msra.mxu0 0.0
    %63 = vmatprep.subr.mxu0 0.0
    %64 = vmatpush1.msra.mxu0 0.0
    %65 = vmatprep.subr.mxu0 0.0
    %66 = vmatpush1.msra.mxu0 0.0
    %67 = vmatprep.subr.mxu0 0.0
    %68 = vmatpush1.msra.mxu0 0.0
    %69 = vmatprep.subr.mxu0 0.0
    %70 = vmatpush1.msra.mxu0 0.0
    %71 = vmatprep.subr.mxu0 0.0
    %72 = vmatpush1.msra.mxu0 0.0
    %73 = vmatprep.subr.mxu0 0.0
    %74 = vmatpush1.msra.mxu0 0.0
    %75 = vmatprep.subr.mxu0 0.0
    %76 = vmatpush1.msra.mxu0 0.0
    %77 = vmatprep.subr.mxu0 0.0
    %78 = vmatpush1.msra.mxu0 0.0
    %79 = vmatprep.subr.mxu0 0.0
    %80 = vmatpush1.msra.mxu0 0.0
    %81 = vmatprep.subr.mxu0 0.0
    %82 = vmatpush1.msra.mxu0 0.0
    %83 = vmatprep.subr.mxu0 0.0
    %84 = vmatpush1.msra.mxu0 0.0
    %85 = vmatprep.subr.mxu0 0.0
    %86 = vmatpush1.msra.mxu0 0.0
    %87 = vmatprep.subr.mxu0 0.0
    %88 = vmatpush1.msra.mxu0 0.0
    %89 = vmatprep.subr.mxu0 0.0
    %90 = vmatpush1.msra.mxu0 0.0
    %91 = vmatprep.subr.mxu0 0.0
    %92 = vmatpush1.msra.mxu0 0.0
    %93 = vmatprep.subr.mxu0 0.0
    %94 = vmatpush1.msra.mxu0 0.0
    %95 = vmatprep.subr.mxu0 0.0
    %96 = vmatpush1.msra.mxu0 0.0
    %97 = vmatprep.subr.mxu0 0.0
    %98 = vmatpush1.msra.mxu0 0.0
    %99 = vmatprep.subr.mxu0 0.0
    %100 = vmatpush1.msra.mxu0 0.0
    %101 = vmatprep.mubr.f32.mxu0 0.0
    %102 = vmatmul.mubr.f32.gmra.mrb[0].mxu0 %v32
    %v103 = vpop.f32.mrb[0].mxu0
    %v104 = vadd.f32 0.0, %v103
    %v105 = vpop.f32.mrb[0].mxu0
    %106 = vmatprep.mubr.f32.mxu0 0.0
    %107 = vmatmul.mubr.f32.gmra.mrb[0].mxu0 %v35
    %v108 = vpop.f32.mrb[0].mxu0
    %v109 = vadd.f32 0.0, %v108
    %v110 = vpop.f32.mrb[0].mxu0
    %111 = vdwg.mxu0
    %v112 = vadd.f32 %v22, %v104
    %v113 = vadd.f32 %v23, %v109
    %vm114 = vcmask 523264
    %115 = vst.msk [vmem:[#allocation2] sm:$0xff] %vm114, %v112
    %116 = vst.msk [vmem:[#allocation2 + $0x8] sm:$0xff] %vm114, %v113
    // Predicated region
    $region18: #{decoder_forward.51} parent=1 // pred_check
      %p117 = pneg %p15
    $region19: #{decoder_forward.51} parent=1 // pred_check_branch
      %119 = sbr.rel (%p117) target = $region21
    $region20: #{decoder_forward.51} parent=1 // pred_region
      %v120 = vld [vmem:[#allocation2] sm:$0xff]
      %v121 = vld [vmem:[#allocation2 + $0x8] sm:$0xff]
      %v122 = vld [vmem:[%s2] sm:$0x1]
      %v124 = vlaneseq
      %v125 = vshrl.u32 %v124, 7
      %v126 = vsub.s32 0, %v125
      %v127 = vrot.slane %v122, %v126
      %v129 = vadd.f32 %v120, %v127
      %v130 = vadd.f32 %v121, %v127
      %131 = vst.msk [vmem:[#allocation3] sm:$0xff] %vm114, %v129
      %132 = vst.msk [vmem:[#allocation3 + $0x8] sm:$0xff] %vm114, %v130
    $region21: #{decoder_forward.51} parent=1 // pred_fallthru
      _
    // Predicated region
    $region22: #{decoder_forward.51} parent=1 // pred_check
      _
    $region23: #{decoder_forward.51} parent=1 // pred_check_branch
      %134 = sbr.rel (0) target = $region25
    $region24: #{decoder_forward.51} parent=1 // pred_region
      %s136 = ssub.s32 256, 256
      %137 = vsyncadd [#allocation4], %s136
      %s138 = sshll.u32 [#allocation3], 4
      %s139 = int_to_ptr.vmem [resolvable:$true] %s138
      %144 = dma.vmem_to_hbm [thread:$0]  %s139, 256, %s3, [#allocation4], 128, 128, 8
    $region25: #{decoder_forward.51} parent=1 // pred_fallthru
      _
    // Predicated region
    $region26: #{decoder_forward.51} parent=1 // pred_check
      _
    $region27: #{decoder_forward.51} parent=1 // pred_check_branch
      %146 = sbr.rel (0) target = $region29
    $region28: #{decoder_forward.51} parent=1 // pred_region
      %147 = dma.done [#allocation4], 256
    $region29: #{decoder_forward.51} parent=1 // pred_fallthru
      _
    %148 = vsyncpa [#allocation4], 1

</llo_original>
